<compile_context>
chip_gen: v5e
topology: v5e:2x2
jax: 0.10.0
libtpu: 0.0.40
codegen_flags: <defaults>
</compile_context>

<pallas_src>
import jax
import jax.numpy as jnp
from jax import lax
from jax.experimental import pallas as pl
from jax.experimental.pallas import tpu as pltpu

INPUT_SIZE = 1
HIDDEN_SIZE = 64
OUTPUT_SIZE = 12

HIDDEN_PAD = 128   # pad H 64 -> 128 so gate slices are 128-lane aligned
OUTPUT_PAD = 128   # pad O 12 -> 128 for an unmasked lane-dense store


def emg_lstm_kernel(xw_ref, w_hh_ref, w_fc_ref, b_fc_ref, out_ref):
    # xw_ref:   (T, B, 4*Hp)  precomputed x_t * W_ih + b, gate blocks 128-aligned
    # w_hh_ref: (Hp, 4*Hp)
    # w_fc_ref: (Hp, Op)      b_fc_ref: (1, Op)      out_ref: (B, Op)
    T = xw_ref.shape[0]
    B = xw_ref.shape[1]
    Hp = w_hh_ref.shape[0]

    w_hh = w_hh_ref[...]                       # hoisted; resident across steps

    def step(t, carry):
        h, c = carry                            # (B, Hp) each
        gates = xw_ref[t] + jnp.dot(h, w_hh, preferred_element_type=jnp.float32)
        i = jax.nn.sigmoid(gates[:, 0 * Hp:1 * Hp])   # 128-aligned slices
        f = jax.nn.sigmoid(gates[:, 1 * Hp:2 * Hp])
        g = jnp.tanh(gates[:, 2 * Hp:3 * Hp])
        o = jax.nn.sigmoid(gates[:, 3 * Hp:4 * Hp])
        c_new = f * c + i * g
        h_new = o * jnp.tanh(c_new)
        return (h_new, c_new)

    h0 = jnp.zeros((B, Hp), jnp.float32)
    c0 = jnp.zeros((B, Hp), jnp.float32)
    # T is small and static -> fully unroll so the scheduler sees the body.
    h_last, _ = lax.fori_loop(0, T, step, (h0, c0), unroll=True)

    out_ref[...] = (jnp.dot(h_last, w_fc_ref[...],
                            preferred_element_type=jnp.float32)
                    + b_fc_ref[...])


def _pad_gate_cols(m, H, Hp):
    """(K, 4H) -> (K, 4Hp): each of the 4 gate blocks zero-padded to width Hp."""
    blocks = [jnp.pad(m[:, g * H:(g + 1) * H], ((0, 0), (0, Hp - H)))
              for g in range(4)]
    return jnp.concatenate(blocks, axis=1)


def init_params(key, input_size=INPUT_SIZE, hidden_size=HIDDEN_SIZE,
                output_size=OUTPUT_SIZE):
    """Deterministic init mimicking PyTorch default U(-1/sqrt(H), 1/sqrt(H))."""
    ks = jax.random.split(key, 6)
    k = 1.0 / jnp.sqrt(jnp.float32(hidden_size))
    u = lambda kk, shape: jax.random.uniform(kk, shape, jnp.float32, -k, k)
    return {
        "w_ih": u(ks[0], (4 * hidden_size, input_size)),   # PyTorch weight_ih_l0
        "w_hh": u(ks[1], (4 * hidden_size, hidden_size)),  # PyTorch weight_hh_l0
        "b_ih": u(ks[2], (4 * hidden_size,)),
        "b_hh": u(ks[3], (4 * hidden_size,)),
        "w_fc": u(ks[4], (output_size, hidden_size)),      # PyTorch fc.weight
        "b_fc": u(ks[5], (output_size,)),
    }


def emg_lstm_forward(x, params):
    # x: (B, T, I) float32  ->  (B, O) float32
    B, T, I = x.shape
    H = params["w_hh"].shape[1]
    O = params["w_fc"].shape[0]
    Hp, Op = HIDDEN_PAD, OUTPUT_PAD

    x_tm = jnp.transpose(x, (1, 0, 2)).astype(jnp.float32)       # (T, B, I)

    # --- padded / transposed weights, gate blocks at 128-aligned offsets ---
    w_ih_p = _pad_gate_cols(params["w_ih"].T.astype(jnp.float32), H, Hp)  # (I, 4Hp)
    w_hh_p = _pad_gate_cols(params["w_hh"].T.astype(jnp.float32), H, Hp)  # (H, 4Hp)
    w_hh_p = jnp.pad(w_hh_p, ((0, Hp - H), (0, 0)))                        # (Hp, 4Hp)
    b_p = _pad_gate_cols(
        (params["b_ih"] + params["b_hh"]).reshape(1, 4 * H).astype(jnp.float32),
        H, Hp)                                                             # (1, 4Hp)
    w_fc_p = jnp.pad(params["w_fc"].T.astype(jnp.float32),
                     ((0, Hp - H), (0, Op - O)))                           # (Hp, Op)
    b_fc_p = jnp.pad(params["b_fc"].reshape(1, O).astype(jnp.float32),
                     ((0, 0), (0, Op - O)))                                # (1, Op)

    # Hoisted input projection + bias for all timesteps (I == 1 -> cheap).
    xw = (jnp.einsum("tbi,ih->tbh", x_tm, w_ih_p)
          + b_p.reshape(1, 1, 4 * Hp)).astype(jnp.float32)                 # (T, B, 4Hp)

    vmem = pl.BlockSpec(memory_space=pltpu.MemorySpace.VMEM)
    out_p = pl.pallas_call(
        emg_lstm_kernel,
        out_shape=jax.ShapeDtypeStruct((B, Op), jnp.float32),
        in_specs=[vmem] * 4,
        out_specs=vmem,
    )(xw, w_hh_p, w_fc_p, b_fc_p)
    return out_p[:, :O]


def emg_lstm_reference(x, params):
    """Pure-JAX reference matching PyTorch nn.LSTM + nn.Linear semantics."""
    B, T, I = x.shape
    H = params["w_hh"].shape[1]
    w_ih_t = params["w_ih"].T
    w_hh_t = params["w_hh"].T
    b = (params["b_ih"] + params["b_hh"]).reshape(1, 4 * H)

    def step(carry, xt):
        h, c = carry
        gates = xt @ w_ih_t + h @ w_hh_t + b
        i = jax.nn.sigmoid(gates[:, 0 * H:1 * H])
        f = jax.nn.sigmoid(gates[:, 1 * H:2 * H])
        g = jnp.tanh(gates[:, 2 * H:3 * H])
        o = jax.nn.sigmoid(gates[:, 3 * H:4 * H])
        c = f * c + i * g
        h = o * jnp.tanh(c)
        return (h, c), None

    h0 = jnp.zeros((B, H), jnp.float32)
    c0 = jnp.zeros((B, H), jnp.float32)
    (h_last, _), _ = lax.scan(step, (h0, c0), jnp.transpose(x, (1, 0, 2)))
    return h_last @ params["w_fc"].T + params["b_fc"].reshape(1, -1)


if __name__ == "__main__":
    B, T = 8, 16
    key = jax.random.PRNGKey(0)
    k_x, k_p = jax.random.split(key)
    x = jax.random.normal(k_x, (B, T, INPUT_SIZE), jnp.float32)
    params = init_params(k_p)

    out = jax.block_until_ready(emg_lstm_forward(x, params))

    ref = jax.block_until_ready(emg_lstm_reference(x, params))
    assert out.shape == (B, OUTPUT_SIZE)
    assert jnp.allclose(out, ref, rtol=1e-2, atol=1e-2), "mismatch vs reference"
    print("KERNEL_OK")
</pallas_src>

<mosaic_0001>
module attributes {stable_mosaic.version = 11 : i64} {
  func.func @emg_lstm_kernel(%arg0: memref<16x8x512xf32, #tpu.memory_space<vmem>>, %arg1: memref<128x512xf32, #tpu.memory_space<vmem>>, %arg2: memref<128x128xf32, #tpu.memory_space<vmem>>, %arg3: memref<1x128xf32, #tpu.memory_space<vmem>>, %arg4: memref<8x128xf32, #tpu.memory_space<vmem>>) attributes {dimension_semantics = [], scalar_prefetch = 0 : i64, scratch_operands = 0 : i64, tpu.core_type = #tpu.core_type<tc>} {
    %c0 = arith.constant 0 : index
    %c0_0 = arith.constant 0 : index
    %0 = vector.load %arg1[%c0, %c0_0] : memref<128x512xf32, #tpu.memory_space<vmem>>, vector<128x512xf32>
    %cst = arith.constant 0.000000e+00 : f32
    %1 = vector.broadcast %cst : f32 to vector<8x128xf32>
    %cst_1 = arith.constant 0.000000e+00 : f32
    %2 = vector.broadcast %cst_1 : f32 to vector<8x128xf32>
    %c0_i32 = arith.constant 0 : i32
    %3 = arith.index_cast %c0_i32 : i32 to index
    %c0_2 = arith.constant 0 : index
    %c0_3 = arith.constant 0 : index
    %4 = vector.load %arg0[%3, %c0_2, %c0_3] : memref<16x8x512xf32, #tpu.memory_space<vmem>>, vector<1x8x512xf32>
    %5 = vector.shape_cast %4 : vector<1x8x512xf32> to vector<8x512xf32>
    %cst_4 = arith.constant dense<0.000000e+00> : vector<8x512xf32>
    %6 = tpu.matmul %1, %0, %cst_4 {dimension_numbers = #tpu.dot_dimension_numbers<[1], [0], [0], [1], [0, 0, 1, 1], [], []>} : vector<8x128xf32>, vector<128x512xf32>, vector<8x512xf32> -> vector<8x512xf32>
    %7 = arith.addf %5, %6 : vector<8x512xf32>
    %8 = vector.extract_strided_slice %7 {offsets = [0, 0], sizes = [8, 128], strides = [1, 1]} : vector<8x512xf32> to vector<8x128xf32>
    %9 = arith.negf %8 : vector<8x128xf32>
    %10 = math.exp %9 : vector<8x128xf32>
    %cst_5 = arith.constant 1.000000e+00 : f32
    %11 = vector.broadcast %cst_5 : f32 to vector<8x128xf32>
    %12 = arith.addf %11, %10 : vector<8x128xf32>
    %13 = arith.divf %11, %12 : vector<8x128xf32>
    %14 = vector.extract_strided_slice %7 {offsets = [0, 128], sizes = [8, 128], strides = [1, 1]} : vector<8x512xf32> to vector<8x128xf32>
    %15 = arith.negf %14 : vector<8x128xf32>
    %16 = math.exp %15 : vector<8x128xf32>
    %cst_6 = arith.constant 1.000000e+00 : f32
    %17 = vector.broadcast %cst_6 : f32 to vector<8x128xf32>
    %18 = arith.addf %17, %16 : vector<8x128xf32>
    %19 = arith.divf %17, %18 : vector<8x128xf32>
    %20 = vector.extract_strided_slice %7 {offsets = [0, 256], sizes = [8, 128], strides = [1, 1]} : vector<8x512xf32> to vector<8x128xf32>
    %21 = math.tanh %20 : vector<8x128xf32>
    %22 = vector.extract_strided_slice %7 {offsets = [0, 384], sizes = [8, 128], strides = [1, 1]} : vector<8x512xf32> to vector<8x128xf32>
    %23 = arith.negf %22 : vector<8x128xf32>
    %24 = math.exp %23 : vector<8x128xf32>
    %cst_7 = arith.constant 1.000000e+00 : f32
    %25 = vector.broadcast %cst_7 : f32 to vector<8x128xf32>
    %26 = arith.addf %25, %24 : vector<8x128xf32>
    %27 = arith.divf %25, %26 : vector<8x128xf32>
    %28 = arith.mulf %19, %2 : vector<8x128xf32>
    %29 = arith.mulf %13, %21 : vector<8x128xf32>
    %30 = arith.addf %28, %29 : vector<8x128xf32>
    %31 = math.tanh %30 : vector<8x128xf32>
    %32 = arith.mulf %27, %31 : vector<8x128xf32>
    %c1_i32 = arith.constant 1 : i32
    %33 = arith.index_cast %c1_i32 : i32 to index
    %c0_8 = arith.constant 0 : index
    %c0_9 = arith.constant 0 : index
    %34 = vector.load %arg0[%33, %c0_8, %c0_9] : memref<16x8x512xf32, #tpu.memory_space<vmem>>, vector<1x8x512xf32>
    %35 = vector.shape_cast %34 : vector<1x8x512xf32> to vector<8x512xf32>
    %cst_10 = arith.constant dense<0.000000e+00> : vector<8x512xf32>
    %36 = tpu.matmul %32, %0, %cst_10 {dimension_numbers = #tpu.dot_dimension_numbers<[1], [0], [0], [1], [0, 0, 1, 1], [], []>} : vector<8x128xf32>, vector<128x512xf32>, vector<8x512xf32> -> vector<8x512xf32>
    %37 = arith.addf %35, %36 : vector<8x512xf32>
    %38 = vector.extract_strided_slice %37 {offsets = [0, 0], sizes = [8, 128], strides = [1, 1]} : vector<8x512xf32> to vector<8x128xf32>
    %39 = arith.negf %38 : vector<8x128xf32>
    %40 = math.exp %39 : vector<8x128xf32>
    %cst_11 = arith.constant 1.000000e+00 : f32
    %41 = vector.broadcast %cst_11 : f32 to vector<8x128xf32>
    %42 = arith.addf %41, %40 : vector<8x128xf32>
    %43 = arith.divf %41, %42 : vector<8x128xf32>
    %44 = vector.extract_strided_slice %37 {offsets = [0, 128], sizes = [8, 128], strides = [1, 1]} : vector<8x512xf32> to vector<8x128xf32>
    %45 = arith.negf %44 : vector<8x128xf32>
    %46 = math.exp %45 : vector<8x128xf32>
    %cst_12 = arith.constant 1.000000e+00 : f32
    %47 = vector.broadcast %cst_12 : f32 to vector<8x128xf32>
    %48 = arith.addf %47, %46 : vector<8x128xf32>
    %49 = arith.divf %47, %48 : vector<8x128xf32>
    %50 = vector.extract_strided_slice %37 {offsets = [0, 256], sizes = [8, 128], strides = [1, 1]} : vector<8x512xf32> to vector<8x128xf32>
    %51 = math.tanh %50 : vector<8x128xf32>
    %52 = vector.extract_strided_slice %37 {offsets = [0, 384], sizes = [8, 128], strides = [1, 1]} : vector<8x512xf32> to vector<8x128xf32>
    %53 = arith.negf %52 : vector<8x128xf32>
    %54 = math.exp %53 : vector<8x128xf32>
    %cst_13 = arith.constant 1.000000e+00 : f32
    %55 = vector.broadcast %cst_13 : f32 to vector<8x128xf32>
    %56 = arith.addf %55, %54 : vector<8x128xf32>
    %57 = arith.divf %55, %56 : vector<8x128xf32>
    %58 = arith.mulf %49, %30 : vector<8x128xf32>
    %59 = arith.mulf %43, %51 : vector<8x128xf32>
    %60 = arith.addf %58, %59 : vector<8x128xf32>
    %61 = math.tanh %60 : vector<8x128xf32>
    %62 = arith.mulf %57, %61 : vector<8x128xf32>
    %c2_i32 = arith.constant 2 : i32
    %63 = arith.index_cast %c2_i32 : i32 to index
    %c0_14 = arith.constant 0 : index
    %c0_15 = arith.constant 0 : index
    %64 = vector.load %arg0[%63, %c0_14, %c0_15] : memref<16x8x512xf32, #tpu.memory_space<vmem>>, vector<1x8x512xf32>
    %65 = vector.shape_cast %64 : vector<1x8x512xf32> to vector<8x512xf32>
    %cst_16 = arith.constant dense<0.000000e+00> : vector<8x512xf32>
    %66 = tpu.matmul %62, %0, %cst_16 {dimension_numbers = #tpu.dot_dimension_numbers<[1], [0], [0], [1], [0, 0, 1, 1], [], []>} : vector<8x128xf32>, vector<128x512xf32>, vector<8x512xf32> -> vector<8x512xf32>
    %67 = arith.addf %65, %66 : vector<8x512xf32>
    %68 = vector.extract_strided_slice %67 {offsets = [0, 0], sizes = [8, 128], strides = [1, 1]} : vector<8x512xf32> to vector<8x128xf32>
    %69 = arith.negf %68 : vector<8x128xf32>
    %70 = math.exp %69 : vector<8x128xf32>
    %cst_17 = arith.constant 1.000000e+00 : f32
    %71 = vector.broadcast %cst_17 : f32 to vector<8x128xf32>
    %72 = arith.addf %71, %70 : vector<8x128xf32>
    %73 = arith.divf %71, %72 : vector<8x128xf32>
    %74 = vector.extract_strided_slice %67 {offsets = [0, 128], sizes = [8, 128], strides = [1, 1]} : vector<8x512xf32> to vector<8x128xf32>
    %75 = arith.negf %74 : vector<8x128xf32>
    %76 = math.exp %75 : vector<8x128xf32>
    %cst_18 = arith.constant 1.000000e+00 : f32
    %77 = vector.broadcast %cst_18 : f32 to vector<8x128xf32>
    %78 = arith.addf %77, %76 : vector<8x128xf32>
    %79 = arith.divf %77, %78 : vector<8x128xf32>
    %80 = vector.extract_strided_slice %67 {offsets = [0, 256], sizes = [8, 128], strides = [1, 1]} : vector<8x512xf32> to vector<8x128xf32>
    %81 = math.tanh %80 : vector<8x128xf32>
    %82 = vector.extract_strided_slice %67 {offsets = [0, 384], sizes = [8, 128], strides = [1, 1]} : vector<8x512xf32> to vector<8x128xf32>
    %83 = arith.negf %82 : vector<8x128xf32>
    %84 = math.exp %83 : vector<8x128xf32>
    %cst_19 = arith.constant 1.000000e+00 : f32
    %85 = vector.broadcast %cst_19 : f32 to vector<8x128xf32>
    %86 = arith.addf %85, %84 : vector<8x128xf32>
    %87 = arith.divf %85, %86 : vector<8x128xf32>
    %88 = arith.mulf %79, %60 : vector<8x128xf32>
    %89 = arith.mulf %73, %81 : vector<8x128xf32>
    %90 = arith.addf %88, %89 : vector<8x128xf32>
    %91 = math.tanh %90 : vector<8x128xf32>
    %92 = arith.mulf %87, %91 : vector<8x128xf32>
    %c3_i32 = arith.constant 3 : i32
    %93 = arith.index_cast %c3_i32 : i32 to index
    %c0_20 = arith.constant 0 : index
    %c0_21 = arith.constant 0 : index
    %94 = vector.load %arg0[%93, %c0_20, %c0_21] : memref<16x8x512xf32, #tpu.memory_space<vmem>>, vector<1x8x512xf32>
    %95 = vector.shape_cast %94 : vector<1x8x512xf32> to vector<8x512xf32>
    %cst_22 = arith.constant dense<0.000000e+00> : vector<8x512xf32>
    %96 = tpu.matmul %92, %0, %cst_22 {dimension_numbers = #tpu.dot_dimension_numbers<[1], [0], [0], [1], [0, 0, 1, 1], [], []>} : vector<8x128xf32>, vector<128x512xf32>, vector<8x512xf32> -> vector<8x512xf32>
    %97 = arith.addf %95, %96 : vector<8x512xf32>
    %98 = vector.extract_strided_slice %97 {offsets = [0, 0], sizes = [8, 128], strides = [1, 1]} : vector<8x512xf32> to vector<8x128xf32>
    %99 = arith.negf %98 : vector<8x128xf32>
    %100 = math.exp %99 : vector<8x128xf32>
    %cst_23 = arith.constant 1.000000e+00 : f32
    %101 = vector.broadcast %cst_23 : f32 to vector<8x128xf32>
    %102 = arith.addf %101, %100 : vector<8x128xf32>
    %103 = arith.divf %101, %102 : vector<8x128xf32>
    %104 = vector.extract_strided_slice %97 {offsets = [0, 128], sizes = [8, 128], strides = [1, 1]} : vector<8x512xf32> to vector<8x128xf32>
    %105 = arith.negf %104 : vector<8x128xf32>
    %106 = math.exp %105 : vector<8x128xf32>
    %cst_24 = arith.constant 1.000000e+00 : f32
    %107 = vector.broadcast %cst_24 : f32 to vector<8x128xf32>
    %108 = arith.addf %107, %106 : vector<8x128xf32>
    %109 = arith.divf %107, %108 : vector<8x128xf32>
    %110 = vector.extract_strided_slice %97 {offsets = [0, 256], sizes = [8, 128], strides = [1, 1]} : vector<8x512xf32> to vector<8x128xf32>
    %111 = math.tanh %110 : vector<8x128xf32>
    %112 = vector.extract_strided_slice %97 {offsets = [0, 384], sizes = [8, 128], strides = [1, 1]} : vector<8x512xf32> to vector<8x128xf32>
    %113 = arith.negf %112 : vector<8x128xf32>
    %114 = math.exp %113 : vector<8x128xf32>
    %cst_25 = arith.constant 1.000000e+00 : f32
    %115 = vector.broadcast %cst_25 : f32 to vector<8x128xf32>
    %116 = arith.addf %115, %114 : vector<8x128xf32>
    %117 = arith.divf %115, %116 : vector<8x128xf32>
    %118 = arith.mulf %109, %90 : vector<8x128xf32>
    %119 = arith.mulf %103, %111 : vector<8x128xf32>
    %120 = arith.addf %118, %119 : vector<8x128xf32>
    %121 = math.tanh %120 : vector<8x128xf32>
    %122 = arith.mulf %117, %121 : vector<8x128xf32>
    %c4_i32 = arith.constant 4 : i32
    %123 = arith.index_cast %c4_i32 : i32 to index
    %c0_26 = arith.constant 0 : index
    %c0_27 = arith.constant 0 : index
    %124 = vector.load %arg0[%123, %c0_26, %c0_27] : memref<16x8x512xf32, #tpu.memory_space<vmem>>, vector<1x8x512xf32>
    %125 = vector.shape_cast %124 : vector<1x8x512xf32> to vector<8x512xf32>
    %cst_28 = arith.constant dense<0.000000e+00> : vector<8x512xf32>
    %126 = tpu.matmul %122, %0, %cst_28 {dimension_numbers = #tpu.dot_dimension_numbers<[1], [0], [0], [1], [0, 0, 1, 1], [], []>} : vector<8x128xf32>, vector<128x512xf32>, vector<8x512xf32> -> vector<8x512xf32>
    %127 = arith.addf %125, %126 : vector<8x512xf32>
    %128 = vector.extract_strided_slice %127 {offsets = [0, 0], sizes = [8, 128], strides = [1, 1]} : vector<8x512xf32> to vector<8x128xf32>
    %129 = arith.negf %128 : vector<8x128xf32>
    %130 = math.exp %129 : vector<8x128xf32>
    %cst_29 = arith.constant 1.000000e+00 : f32
    %131 = vector.broadcast %cst_29 : f32 to vector<8x128xf32>
    %132 = arith.addf %131, %130 : vector<8x128xf32>
    %133 = arith.divf %131, %132 : vector<8x128xf32>
    %134 = vector.extract_strided_slice %127 {offsets = [0, 128], sizes = [8, 128], strides = [1, 1]} : vector<8x512xf32> to vector<8x128xf32>
    %135 = arith.negf %134 : vector<8x128xf32>
    %136 = math.exp %135 : vector<8x128xf32>
    %cst_30 = arith.constant 1.000000e+00 : f32
    %137 = vector.broadcast %cst_30 : f32 to vector<8x128xf32>
    %138 = arith.addf %137, %136 : vector<8x128xf32>
    %139 = arith.divf %137, %138 : vector<8x128xf32>
    %140 = vector.extract_strided_slice %127 {offsets = [0, 256], sizes = [8, 128], strides = [1, 1]} : vector<8x512xf32> to vector<8x128xf32>
    %141 = math.tanh %140 : vector<8x128xf32>
    %142 = vector.extract_strided_slice %127 {offsets = [0, 384], sizes = [8, 128], strides = [1, 1]} : vector<8x512xf32> to vector<8x128xf32>
    %143 = arith.negf %142 : vector<8x128xf32>
    %144 = math.exp %143 : vector<8x128xf32>
    %cst_31 = arith.constant 1.000000e+00 : f32
    %145 = vector.broadcast %cst_31 : f32 to vector<8x128xf32>
    %146 = arith.addf %145, %144 : vector<8x128xf32>
    %147 = arith.divf %145, %146 : vector<8x128xf32>
    %148 = arith.mulf %139, %120 : vector<8x128xf32>
    %149 = arith.mulf %133, %141 : vector<8x128xf32>
    %150 = arith.addf %148, %149 : vector<8x128xf32>
    %151 = math.tanh %150 : vector<8x128xf32>
    %152 = arith.mulf %147, %151 : vector<8x128xf32>
    %c5_i32 = arith.constant 5 : i32
    %153 = arith.index_cast %c5_i32 : i32 to index
    %c0_32 = arith.constant 0 : index
    %c0_33 = arith.constant 0 : index
    %154 = vector.load %arg0[%153, %c0_32, %c0_33] : memref<16x8x512xf32, #tpu.memory_space<vmem>>, vector<1x8x512xf32>
    %155 = vector.shape_cast %154 : vector<1x8x512xf32> to vector<8x512xf32>
    %cst_34 = arith.constant dense<0.000000e+00> : vector<8x512xf32>
    %156 = tpu.matmul %152, %0, %cst_34 {dimension_numbers = #tpu.dot_dimension_numbers<[1], [0], [0], [1], [0, 0, 1, 1], [], []>} : vector<8x128xf32>, vector<128x512xf32>, vector<8x512xf32> -> vector<8x512xf32>
    %157 = arith.addf %155, %156 : vector<8x512xf32>
    %158 = vector.extract_strided_slice %157 {offsets = [0, 0], sizes = [8, 128], strides = [1, 1]} : vector<8x512xf32> to vector<8x128xf32>
    %159 = arith.negf %158 : vector<8x128xf32>
    %160 = math.exp %159 : vector<8x128xf32>
    %cst_35 = arith.constant 1.000000e+00 : f32
    %161 = vector.broadcast %cst_35 : f32 to vector<8x128xf32>
    %162 = arith.addf %161, %160 : vector<8x128xf32>
    %163 = arith.divf %161, %162 : vector<8x128xf32>
    %164 = vector.extract_strided_slice %157 {offsets = [0, 128], sizes = [8, 128], strides = [1, 1]} : vector<8x512xf32> to vector<8x128xf32>
    %165 = arith.negf %164 : vector<8x128xf32>
    %166 = math.exp %165 : vector<8x128xf32>
    %cst_36 = arith.constant 1.000000e+00 : f32
    %167 = vector.broadcast %cst_36 : f32 to vector<8x128xf32>
    %168 = arith.addf %167, %166 : vector<8x128xf32>
    %169 = arith.divf %167, %168 : vector<8x128xf32>
    %170 = vector.extract_strided_slice %157 {offsets = [0, 256], sizes = [8, 128], strides = [1, 1]} : vector<8x512xf32> to vector<8x128xf32>
    %171 = math.tanh %170 : vector<8x128xf32>
    %172 = vector.extract_strided_slice %157 {offsets = [0, 384], sizes = [8, 128], strides = [1, 1]} : vector<8x512xf32> to vector<8x128xf32>
    %173 = arith.negf %172 : vector<8x128xf32>
    %174 = math.exp %173 : vector<8x128xf32>
    %cst_37 = arith.constant 1.000000e+00 : f32
    %175 = vector.broadcast %cst_37 : f32 to vector<8x128xf32>
    %176 = arith.addf %175, %174 : vector<8x128xf32>
    %177 = arith.divf %175, %176 : vector<8x128xf32>
    %178 = arith.mulf %169, %150 : vector<8x128xf32>
    %179 = arith.mulf %163, %171 : vector<8x128xf32>
    %180 = arith.addf %178, %179 : vector<8x128xf32>
    %181 = math.tanh %180 : vector<8x128xf32>
    %182 = arith.mulf %177, %181 : vector<8x128xf32>
    %c6_i32 = arith.constant 6 : i32
    %183 = arith.index_cast %c6_i32 : i32 to index
    %c0_38 = arith.constant 0 : index
    %c0_39 = arith.constant 0 : index
    %184 = vector.load %arg0[%183, %c0_38, %c0_39] : memref<16x8x512xf32, #tpu.memory_space<vmem>>, vector<1x8x512xf32>
    %185 = vector.shape_cast %184 : vector<1x8x512xf32> to vector<8x512xf32>
    %cst_40 = arith.constant dense<0.000000e+00> : vector<8x512xf32>
    %186 = tpu.matmul %182, %0, %cst_40 {dimension_numbers = #tpu.dot_dimension_numbers<[1], [0], [0], [1], [0, 0, 1, 1], [], []>} : vector<8x128xf32>, vector<128x512xf32>, vector<8x512xf32> -> vector<8x512xf32>
    %187 = arith.addf %185, %186 : vector<8x512xf32>
    %188 = vector.extract_strided_slice %187 {offsets = [0, 0], sizes = [8, 128], strides = [1, 1]} : vector<8x512xf32> to vector<8x128xf32>
    %189 = arith.negf %188 : vector<8x128xf32>
    %190 = math.exp %189 : vector<8x128xf32>
    %cst_41 = arith.constant 1.000000e+00 : f32
    %191 = vector.broadcast %cst_41 : f32 to vector<8x128xf32>
    %192 = arith.addf %191, %190 : vector<8x128xf32>
    %193 = arith.divf %191, %192 : vector<8x128xf32>
    %194 = vector.extract_strided_slice %187 {offsets = [0, 128], sizes = [8, 128], strides = [1, 1]} : vector<8x512xf32> to vector<8x128xf32>
    %195 = arith.negf %194 : vector<8x128xf32>
    %196 = math.exp %195 : vector<8x128xf32>
    %cst_42 = arith.constant 1.000000e+00 : f32
    %197 = vector.broadcast %cst_42 : f32 to vector<8x128xf32>
    %198 = arith.addf %197, %196 : vector<8x128xf32>
    %199 = arith.divf %197, %198 : vector<8x128xf32>
    %200 = vector.extract_strided_slice %187 {offsets = [0, 256], sizes = [8, 128], strides = [1, 1]} : vector<8x512xf32> to vector<8x128xf32>
    %201 = math.tanh %200 : vector<8x128xf32>
    %202 = vector.extract_strided_slice %187 {offsets = [0, 384], sizes = [8, 128], strides = [1, 1]} : vector<8x512xf32> to vector<8x128xf32>
    %203 = arith.negf %202 : vector<8x128xf32>
    %204 = math.exp %203 : vector<8x128xf32>
    %cst_43 = arith.constant 1.000000e+00 : f32
    %205 = vector.broadcast %cst_43 : f32 to vector<8x128xf32>
    %206 = arith.addf %205, %204 : vector<8x128xf32>
    %207 = arith.divf %205, %206 : vector<8x128xf32>
    %208 = arith.mulf %199, %180 : vector<8x128xf32>
    %209 = arith.mulf %193, %201 : vector<8x128xf32>
    %210 = arith.addf %208, %209 : vector<8x128xf32>
    %211 = math.tanh %210 : vector<8x128xf32>
    %212 = arith.mulf %207, %211 : vector<8x128xf32>
    %c7_i32 = arith.constant 7 : i32
    %213 = arith.index_cast %c7_i32 : i32 to index
    %c0_44 = arith.constant 0 : index
    %c0_45 = arith.constant 0 : index
    %214 = vector.load %arg0[%213, %c0_44, %c0_45] : memref<16x8x512xf32, #tpu.memory_space<vmem>>, vector<1x8x512xf32>
    %215 = vector.shape_cast %214 : vector<1x8x512xf32> to vector<8x512xf32>
    %cst_46 = arith.constant dense<0.000000e+00> : vector<8x512xf32>
    %216 = tpu.matmul %212, %0, %cst_46 {dimension_numbers = #tpu.dot_dimension_numbers<[1], [0], [0], [1], [0, 0, 1, 1], [], []>} : vector<8x128xf32>, vector<128x512xf32>, vector<8x512xf32> -> vector<8x512xf32>
    %217 = arith.addf %215, %216 : vector<8x512xf32>
    %218 = vector.extract_strided_slice %217 {offsets = [0, 0], sizes = [8, 128], strides = [1, 1]} : vector<8x512xf32> to vector<8x128xf32>
    %219 = arith.negf %218 : vector<8x128xf32>
    %220 = math.exp %219 : vector<8x128xf32>
    %cst_47 = arith.constant 1.000000e+00 : f32
    %221 = vector.broadcast %cst_47 : f32 to vector<8x128xf32>
    %222 = arith.addf %221, %220 : vector<8x128xf32>
    %223 = arith.divf %221, %222 : vector<8x128xf32>
    %224 = vector.extract_strided_slice %217 {offsets = [0, 128], sizes = [8, 128], strides = [1, 1]} : vector<8x512xf32> to vector<8x128xf32>
    %225 = arith.negf %224 : vector<8x128xf32>
    %226 = math.exp %225 : vector<8x128xf32>
    %cst_48 = arith.constant 1.000000e+00 : f32
    %227 = vector.broadcast %cst_48 : f32 to vector<8x128xf32>
    %228 = arith.addf %227, %226 : vector<8x128xf32>
    %229 = arith.divf %227, %228 : vector<8x128xf32>
    %230 = vector.extract_strided_slice %217 {offsets = [0, 256], sizes = [8, 128], strides = [1, 1]} : vector<8x512xf32> to vector<8x128xf32>
    %231 = math.tanh %230 : vector<8x128xf32>
    %232 = vector.extract_strided_slice %217 {offsets = [0, 384], sizes = [8, 128], strides = [1, 1]} : vector<8x512xf32> to vector<8x128xf32>
    %233 = arith.negf %232 : vector<8x128xf32>
    %234 = math.exp %233 : vector<8x128xf32>
    %cst_49 = arith.constant 1.000000e+00 : f32
    %235 = vector.broadcast %cst_49 : f32 to vector<8x128xf32>
    %236 = arith.addf %235, %234 : vector<8x128xf32>
    %237 = arith.divf %235, %236 : vector<8x128xf32>
    %238 = arith.mulf %229, %210 : vector<8x128xf32>
    %239 = arith.mulf %223, %231 : vector<8x128xf32>
    %240 = arith.addf %238, %239 : vector<8x128xf32>
    %241 = math.tanh %240 : vector<8x128xf32>
    %242 = arith.mulf %237, %241 : vector<8x128xf32>
    %c8_i32 = arith.constant 8 : i32
    %243 = arith.index_cast %c8_i32 : i32 to index
    %c0_50 = arith.constant 0 : index
    %c0_51 = arith.constant 0 : index
    %244 = vector.load %arg0[%243, %c0_50, %c0_51] : memref<16x8x512xf32, #tpu.memory_space<vmem>>, vector<1x8x512xf32>
    %245 = vector.shape_cast %244 : vector<1x8x512xf32> to vector<8x512xf32>
    %cst_52 = arith.constant dense<0.000000e+00> : vector<8x512xf32>
    %246 = tpu.matmul %242, %0, %cst_52 {dimension_numbers = #tpu.dot_dimension_numbers<[1], [0], [0], [1], [0, 0, 1, 1], [], []>} : vector<8x128xf32>, vector<128x512xf32>, vector<8x512xf32> -> vector<8x512xf32>
    %247 = arith.addf %245, %246 : vector<8x512xf32>
    %248 = vector.extract_strided_slice %247 {offsets = [0, 0], sizes = [8, 128], strides = [1, 1]} : vector<8x512xf32> to vector<8x128xf32>
    %249 = arith.negf %248 : vector<8x128xf32>
    %250 = math.exp %249 : vector<8x128xf32>
    %cst_53 = arith.constant 1.000000e+00 : f32
    %251 = vector.broadcast %cst_53 : f32 to vector<8x128xf32>
    %252 = arith.addf %251, %250 : vector<8x128xf32>
    %253 = arith.divf %251, %252 : vector<8x128xf32>
    %254 = vector.extract_strided_slice %247 {offsets = [0, 128], sizes = [8, 128], strides = [1, 1]} : vector<8x512xf32> to vector<8x128xf32>
    %255 = arith.negf %254 : vector<8x128xf32>
    %256 = math.exp %255 : vector<8x128xf32>
    %cst_54 = arith.constant 1.000000e+00 : f32
    %257 = vector.broadcast %cst_54 : f32 to vector<8x128xf32>
    %258 = arith.addf %257, %256 : vector<8x128xf32>
    %259 = arith.divf %257, %258 : vector<8x128xf32>
    %260 = vector.extract_strided_slice %247 {offsets = [0, 256], sizes = [8, 128], strides = [1, 1]} : vector<8x512xf32> to vector<8x128xf32>
    %261 = math.tanh %260 : vector<8x128xf32>
    %262 = vector.extract_strided_slice %247 {offsets = [0, 384], sizes = [8, 128], strides = [1, 1]} : vector<8x512xf32> to vector<8x128xf32>
    %263 = arith.negf %262 : vector<8x128xf32>
    %264 = math.exp %263 : vector<8x128xf32>
    %cst_55 = arith.constant 1.000000e+00 : f32
    %265 = vector.broadcast %cst_55 : f32 to vector<8x128xf32>
    %266 = arith.addf %265, %264 : vector<8x128xf32>
    %267 = arith.divf %265, %266 : vector<8x128xf32>
    %268 = arith.mulf %259, %240 : vector<8x128xf32>
    %269 = arith.mulf %253, %261 : vector<8x128xf32>
    %270 = arith.addf %268, %269 : vector<8x128xf32>
    %271 = math.tanh %270 : vector<8x128xf32>
    %272 = arith.mulf %267, %271 : vector<8x128xf32>
    %c9_i32 = arith.constant 9 : i32
    %273 = arith.index_cast %c9_i32 : i32 to index
    %c0_56 = arith.constant 0 : index
    %c0_57 = arith.constant 0 : index
    %274 = vector.load %arg0[%273, %c0_56, %c0_57] : memref<16x8x512xf32, #tpu.memory_space<vmem>>, vector<1x8x512xf32>
    %275 = vector.shape_cast %274 : vector<1x8x512xf32> to vector<8x512xf32>
    %cst_58 = arith.constant dense<0.000000e+00> : vector<8x512xf32>
    %276 = tpu.matmul %272, %0, %cst_58 {dimension_numbers = #tpu.dot_dimension_numbers<[1], [0], [0], [1], [0, 0, 1, 1], [], []>} : vector<8x128xf32>, vector<128x512xf32>, vector<8x512xf32> -> vector<8x512xf32>
    %277 = arith.addf %275, %276 : vector<8x512xf32>
    %278 = vector.extract_strided_slice %277 {offsets = [0, 0], sizes = [8, 128], strides = [1, 1]} : vector<8x512xf32> to vector<8x128xf32>
    %279 = arith.negf %278 : vector<8x128xf32>
    %280 = math.exp %279 : vector<8x128xf32>
    %cst_59 = arith.constant 1.000000e+00 : f32
    %281 = vector.broadcast %cst_59 : f32 to vector<8x128xf32>
    %282 = arith.addf %281, %280 : vector<8x128xf32>
    %283 = arith.divf %281, %282 : vector<8x128xf32>
    %284 = vector.extract_strided_slice %277 {offsets = [0, 128], sizes = [8, 128], strides = [1, 1]} : vector<8x512xf32> to vector<8x128xf32>
    %285 = arith.negf %284 : vector<8x128xf32>
    %286 = math.exp %285 : vector<8x128xf32>
    %cst_60 = arith.constant 1.000000e+00 : f32
    %287 = vector.broadcast %cst_60 : f32 to vector<8x128xf32>
    %288 = arith.addf %287, %286 : vector<8x128xf32>
    %289 = arith.divf %287, %288 : vector<8x128xf32>
    %290 = vector.extract_strided_slice %277 {offsets = [0, 256], sizes = [8, 128], strides = [1, 1]} : vector<8x512xf32> to vector<8x128xf32>
    %291 = math.tanh %290 : vector<8x128xf32>
    %292 = vector.extract_strided_slice %277 {offsets = [0, 384], sizes = [8, 128], strides = [1, 1]} : vector<8x512xf32> to vector<8x128xf32>
    %293 = arith.negf %292 : vector<8x128xf32>
    %294 = math.exp %293 : vector<8x128xf32>
    %cst_61 = arith.constant 1.000000e+00 : f32
    %295 = vector.broadcast %cst_61 : f32 to vector<8x128xf32>
    %296 = arith.addf %295, %294 : vector<8x128xf32>
    %297 = arith.divf %295, %296 : vector<8x128xf32>
    %298 = arith.mulf %289, %270 : vector<8x128xf32>
    %299 = arith.mulf %283, %291 : vector<8x128xf32>
    %300 = arith.addf %298, %299 : vector<8x128xf32>
    %301 = math.tanh %300 : vector<8x128xf32>
    %302 = arith.mulf %297, %301 : vector<8x128xf32>
    %c10_i32 = arith.constant 10 : i32
    %303 = arith.index_cast %c10_i32 : i32 to index
    %c0_62 = arith.constant 0 : index
    %c0_63 = arith.constant 0 : index
    %304 = vector.load %arg0[%303, %c0_62, %c0_63] : memref<16x8x512xf32, #tpu.memory_space<vmem>>, vector<1x8x512xf32>
    %305 = vector.shape_cast %304 : vector<1x8x512xf32> to vector<8x512xf32>
    %cst_64 = arith.constant dense<0.000000e+00> : vector<8x512xf32>
    %306 = tpu.matmul %302, %0, %cst_64 {dimension_numbers = #tpu.dot_dimension_numbers<[1], [0], [0], [1], [0, 0, 1, 1], [], []>} : vector<8x128xf32>, vector<128x512xf32>, vector<8x512xf32> -> vector<8x512xf32>
    %307 = arith.addf %305, %306 : vector<8x512xf32>
    %308 = vector.extract_strided_slice %307 {offsets = [0, 0], sizes = [8, 128], strides = [1, 1]} : vector<8x512xf32> to vector<8x128xf32>
    %309 = arith.negf %308 : vector<8x128xf32>
    %310 = math.exp %309 : vector<8x128xf32>
    %cst_65 = arith.constant 1.000000e+00 : f32
    %311 = vector.broadcast %cst_65 : f32 to vector<8x128xf32>
    %312 = arith.addf %311, %310 : vector<8x128xf32>
    %313 = arith.divf %311, %312 : vector<8x128xf32>
    %314 = vector.extract_strided_slice %307 {offsets = [0, 128], sizes = [8, 128], strides = [1, 1]} : vector<8x512xf32> to vector<8x128xf32>
    %315 = arith.negf %314 : vector<8x128xf32>
    %316 = math.exp %315 : vector<8x128xf32>
    %cst_66 = arith.constant 1.000000e+00 : f32
    %317 = vector.broadcast %cst_66 : f32 to vector<8x128xf32>
    %318 = arith.addf %317, %316 : vector<8x128xf32>
    %319 = arith.divf %317, %318 : vector<8x128xf32>
    %320 = vector.extract_strided_slice %307 {offsets = [0, 256], sizes = [8, 128], strides = [1, 1]} : vector<8x512xf32> to vector<8x128xf32>
    %321 = math.tanh %320 : vector<8x128xf32>
    %322 = vector.extract_strided_slice %307 {offsets = [0, 384], sizes = [8, 128], strides = [1, 1]} : vector<8x512xf32> to vector<8x128xf32>
    %323 = arith.negf %322 : vector<8x128xf32>
    %324 = math.exp %323 : vector<8x128xf32>
    %cst_67 = arith.constant 1.000000e+00 : f32
    %325 = vector.broadcast %cst_67 : f32 to vector<8x128xf32>
    %326 = arith.addf %325, %324 : vector<8x128xf32>
    %327 = arith.divf %325, %326 : vector<8x128xf32>
    %328 = arith.mulf %319, %300 : vector<8x128xf32>
    %329 = arith.mulf %313, %321 : vector<8x128xf32>
    %330 = arith.addf %328, %329 : vector<8x128xf32>
    %331 = math.tanh %330 : vector<8x128xf32>
    %332 = arith.mulf %327, %331 : vector<8x128xf32>
    %c11_i32 = arith.constant 11 : i32
    %333 = arith.index_cast %c11_i32 : i32 to index
    %c0_68 = arith.constant 0 : index
    %c0_69 = arith.constant 0 : index
    %334 = vector.load %arg0[%333, %c0_68, %c0_69] : memref<16x8x512xf32, #tpu.memory_space<vmem>>, vector<1x8x512xf32>
    %335 = vector.shape_cast %334 : vector<1x8x512xf32> to vector<8x512xf32>
    %cst_70 = arith.constant dense<0.000000e+00> : vector<8x512xf32>
    %336 = tpu.matmul %332, %0, %cst_70 {dimension_numbers = #tpu.dot_dimension_numbers<[1], [0], [0], [1], [0, 0, 1, 1], [], []>} : vector<8x128xf32>, vector<128x512xf32>, vector<8x512xf32> -> vector<8x512xf32>
    %337 = arith.addf %335, %336 : vector<8x512xf32>
    %338 = vector.extract_strided_slice %337 {offsets = [0, 0], sizes = [8, 128], strides = [1, 1]} : vector<8x512xf32> to vector<8x128xf32>
    %339 = arith.negf %338 : vector<8x128xf32>
    %340 = math.exp %339 : vector<8x128xf32>
    %cst_71 = arith.constant 1.000000e+00 : f32
    %341 = vector.broadcast %cst_71 : f32 to vector<8x128xf32>
    %342 = arith.addf %341, %340 : vector<8x128xf32>
    %343 = arith.divf %341, %342 : vector<8x128xf32>
    %344 = vector.extract_strided_slice %337 {offsets = [0, 128], sizes = [8, 128], strides = [1, 1]} : vector<8x512xf32> to vector<8x128xf32>
    %345 = arith.negf %344 : vector<8x128xf32>
    %346 = math.exp %345 : vector<8x128xf32>
    %cst_72 = arith.constant 1.000000e+00 : f32
    %347 = vector.broadcast %cst_72 : f32 to vector<8x128xf32>
    %348 = arith.addf %347, %346 : vector<8x128xf32>
    %349 = arith.divf %347, %348 : vector<8x128xf32>
    %350 = vector.extract_strided_slice %337 {offsets = [0, 256], sizes = [8, 128], strides = [1, 1]} : vector<8x512xf32> to vector<8x128xf32>
    %351 = math.tanh %350 : vector<8x128xf32>
    %352 = vector.extract_strided_slice %337 {offsets = [0, 384], sizes = [8, 128], strides = [1, 1]} : vector<8x512xf32> to vector<8x128xf32>
    %353 = arith.negf %352 : vector<8x128xf32>
    %354 = math.exp %353 : vector<8x128xf32>
    %cst_73 = arith.constant 1.000000e+00 : f32
    %355 = vector.broadcast %cst_73 : f32 to vector<8x128xf32>
    %356 = arith.addf %355, %354 : vector<8x128xf32>
    %357 = arith.divf %355, %356 : vector<8x128xf32>
    %358 = arith.mulf %349, %330 : vector<8x128xf32>
    %359 = arith.mulf %343, %351 : vector<8x128xf32>
    %360 = arith.addf %358, %359 : vector<8x128xf32>
    %361 = math.tanh %360 : vector<8x128xf32>
    %362 = arith.mulf %357, %361 : vector<8x128xf32>
    %c12_i32 = arith.constant 12 : i32
    %363 = arith.index_cast %c12_i32 : i32 to index
    %c0_74 = arith.constant 0 : index
    %c0_75 = arith.constant 0 : index
    %364 = vector.load %arg0[%363, %c0_74, %c0_75] : memref<16x8x512xf32, #tpu.memory_space<vmem>>, vector<1x8x512xf32>
    %365 = vector.shape_cast %364 : vector<1x8x512xf32> to vector<8x512xf32>
    %cst_76 = arith.constant dense<0.000000e+00> : vector<8x512xf32>
    %366 = tpu.matmul %362, %0, %cst_76 {dimension_numbers = #tpu.dot_dimension_numbers<[1], [0], [0], [1], [0, 0, 1, 1], [], []>} : vector<8x128xf32>, vector<128x512xf32>, vector<8x512xf32> -> vector<8x512xf32>
    %367 = arith.addf %365, %366 : vector<8x512xf32>
    %368 = vector.extract_strided_slice %367 {offsets = [0, 0], sizes = [8, 128], strides = [1, 1]} : vector<8x512xf32> to vector<8x128xf32>
    %369 = arith.negf %368 : vector<8x128xf32>
    %370 = math.exp %369 : vector<8x128xf32>
    %cst_77 = arith.constant 1.000000e+00 : f32
    %371 = vector.broadcast %cst_77 : f32 to vector<8x128xf32>
    %372 = arith.addf %371, %370 : vector<8x128xf32>
    %373 = arith.divf %371, %372 : vector<8x128xf32>
    %374 = vector.extract_strided_slice %367 {offsets = [0, 128], sizes = [8, 128], strides = [1, 1]} : vector<8x512xf32> to vector<8x128xf32>
    %375 = arith.negf %374 : vector<8x128xf32>
    %376 = math.exp %375 : vector<8x128xf32>
    %cst_78 = arith.constant 1.000000e+00 : f32
    %377 = vector.broadcast %cst_78 : f32 to vector<8x128xf32>
    %378 = arith.addf %377, %376 : vector<8x128xf32>
    %379 = arith.divf %377, %378 : vector<8x128xf32>
    %380 = vector.extract_strided_slice %367 {offsets = [0, 256], sizes = [8, 128], strides = [1, 1]} : vector<8x512xf32> to vector<8x128xf32>
    %381 = math.tanh %380 : vector<8x128xf32>
    %382 = vector.extract_strided_slice %367 {offsets = [0, 384], sizes = [8, 128], strides = [1, 1]} : vector<8x512xf32> to vector<8x128xf32>
    %383 = arith.negf %382 : vector<8x128xf32>
    %384 = math.exp %383 : vector<8x128xf32>
    %cst_79 = arith.constant 1.000000e+00 : f32
    %385 = vector.broadcast %cst_79 : f32 to vector<8x128xf32>
    %386 = arith.addf %385, %384 : vector<8x128xf32>
    %387 = arith.divf %385, %386 : vector<8x128xf32>
    %388 = arith.mulf %379, %360 : vector<8x128xf32>
    %389 = arith.mulf %373, %381 : vector<8x128xf32>
    %390 = arith.addf %388, %389 : vector<8x128xf32>
    %391 = math.tanh %390 : vector<8x128xf32>
    %392 = arith.mulf %387, %391 : vector<8x128xf32>
    %c13_i32 = arith.constant 13 : i32
    %393 = arith.index_cast %c13_i32 : i32 to index
    %c0_80 = arith.constant 0 : index
    %c0_81 = arith.constant 0 : index
    %394 = vector.load %arg0[%393, %c0_80, %c0_81] : memref<16x8x512xf32, #tpu.memory_space<vmem>>, vector<1x8x512xf32>
    %395 = vector.shape_cast %394 : vector<1x8x512xf32> to vector<8x512xf32>
    %cst_82 = arith.constant dense<0.000000e+00> : vector<8x512xf32>
    %396 = tpu.matmul %392, %0, %cst_82 {dimension_numbers = #tpu.dot_dimension_numbers<[1], [0], [0], [1], [0, 0, 1, 1], [], []>} : vector<8x128xf32>, vector<128x512xf32>, vector<8x512xf32> -> vector<8x512xf32>
    %397 = arith.addf %395, %396 : vector<8x512xf32>
    %398 = vector.extract_strided_slice %397 {offsets = [0, 0], sizes = [8, 128], strides = [1, 1]} : vector<8x512xf32> to vector<8x128xf32>
    %399 = arith.negf %398 : vector<8x128xf32>
    %400 = math.exp %399 : vector<8x128xf32>
    %cst_83 = arith.constant 1.000000e+00 : f32
    %401 = vector.broadcast %cst_83 : f32 to vector<8x128xf32>
    %402 = arith.addf %401, %400 : vector<8x128xf32>
    %403 = arith.divf %401, %402 : vector<8x128xf32>
    %404 = vector.extract_strided_slice %397 {offsets = [0, 128], sizes = [8, 128], strides = [1, 1]} : vector<8x512xf32> to vector<8x128xf32>
    %405 = arith.negf %404 : vector<8x128xf32>
    %406 = math.exp %405 : vector<8x128xf32>
    %cst_84 = arith.constant 1.000000e+00 : f32
    %407 = vector.broadcast %cst_84 : f32 to vector<8x128xf32>
    %408 = arith.addf %407, %406 : vector<8x128xf32>
    %409 = arith.divf %407, %408 : vector<8x128xf32>
    %410 = vector.extract_strided_slice %397 {offsets = [0, 256], sizes = [8, 128], strides = [1, 1]} : vector<8x512xf32> to vector<8x128xf32>
    %411 = math.tanh %410 : vector<8x128xf32>
    %412 = vector.extract_strided_slice %397 {offsets = [0, 384], sizes = [8, 128], strides = [1, 1]} : vector<8x512xf32> to vector<8x128xf32>
    %413 = arith.negf %412 : vector<8x128xf32>
    %414 = math.exp %413 : vector<8x128xf32>
    %cst_85 = arith.constant 1.000000e+00 : f32
    %415 = vector.broadcast %cst_85 : f32 to vector<8x128xf32>
    %416 = arith.addf %415, %414 : vector<8x128xf32>
    %417 = arith.divf %415, %416 : vector<8x128xf32>
    %418 = arith.mulf %409, %390 : vector<8x128xf32>
    %419 = arith.mulf %403, %411 : vector<8x128xf32>
    %420 = arith.addf %418, %419 : vector<8x128xf32>
    %421 = math.tanh %420 : vector<8x128xf32>
    %422 = arith.mulf %417, %421 : vector<8x128xf32>
    %c14_i32 = arith.constant 14 : i32
    %423 = arith.index_cast %c14_i32 : i32 to index
    %c0_86 = arith.constant 0 : index
    %c0_87 = arith.constant 0 : index
    %424 = vector.load %arg0[%423, %c0_86, %c0_87] : memref<16x8x512xf32, #tpu.memory_space<vmem>>, vector<1x8x512xf32>
    %425 = vector.shape_cast %424 : vector<1x8x512xf32> to vector<8x512xf32>
    %cst_88 = arith.constant dense<0.000000e+00> : vector<8x512xf32>
    %426 = tpu.matmul %422, %0, %cst_88 {dimension_numbers = #tpu.dot_dimension_numbers<[1], [0], [0], [1], [0, 0, 1, 1], [], []>} : vector<8x128xf32>, vector<128x512xf32>, vector<8x512xf32> -> vector<8x512xf32>
    %427 = arith.addf %425, %426 : vector<8x512xf32>
    %428 = vector.extract_strided_slice %427 {offsets = [0, 0], sizes = [8, 128], strides = [1, 1]} : vector<8x512xf32> to vector<8x128xf32>
    %429 = arith.negf %428 : vector<8x128xf32>
    %430 = math.exp %429 : vector<8x128xf32>
    %cst_89 = arith.constant 1.000000e+00 : f32
    %431 = vector.broadcast %cst_89 : f32 to vector<8x128xf32>
    %432 = arith.addf %431, %430 : vector<8x128xf32>
    %433 = arith.divf %431, %432 : vector<8x128xf32>
    %434 = vector.extract_strided_slice %427 {offsets = [0, 128], sizes = [8, 128], strides = [1, 1]} : vector<8x512xf32> to vector<8x128xf32>
    %435 = arith.negf %434 : vector<8x128xf32>
    %436 = math.exp %435 : vector<8x128xf32>
    %cst_90 = arith.constant 1.000000e+00 : f32
    %437 = vector.broadcast %cst_90 : f32 to vector<8x128xf32>
    %438 = arith.addf %437, %436 : vector<8x128xf32>
    %439 = arith.divf %437, %438 : vector<8x128xf32>
    %440 = vector.extract_strided_slice %427 {offsets = [0, 256], sizes = [8, 128], strides = [1, 1]} : vector<8x512xf32> to vector<8x128xf32>
    %441 = math.tanh %440 : vector<8x128xf32>
    %442 = vector.extract_strided_slice %427 {offsets = [0, 384], sizes = [8, 128], strides = [1, 1]} : vector<8x512xf32> to vector<8x128xf32>
    %443 = arith.negf %442 : vector<8x128xf32>
    %444 = math.exp %443 : vector<8x128xf32>
    %cst_91 = arith.constant 1.000000e+00 : f32
    %445 = vector.broadcast %cst_91 : f32 to vector<8x128xf32>
    %446 = arith.addf %445, %444 : vector<8x128xf32>
    %447 = arith.divf %445, %446 : vector<8x128xf32>
    %448 = arith.mulf %439, %420 : vector<8x128xf32>
    %449 = arith.mulf %433, %441 : vector<8x128xf32>
    %450 = arith.addf %448, %449 : vector<8x128xf32>
    %451 = math.tanh %450 : vector<8x128xf32>
    %452 = arith.mulf %447, %451 : vector<8x128xf32>
    %c15_i32 = arith.constant 15 : i32
    %453 = arith.index_cast %c15_i32 : i32 to index
    %c0_92 = arith.constant 0 : index
    %c0_93 = arith.constant 0 : index
    %454 = vector.load %arg0[%453, %c0_92, %c0_93] : memref<16x8x512xf32, #tpu.memory_space<vmem>>, vector<1x8x512xf32>
    %455 = vector.shape_cast %454 : vector<1x8x512xf32> to vector<8x512xf32>
    %cst_94 = arith.constant dense<0.000000e+00> : vector<8x512xf32>
    %456 = tpu.matmul %452, %0, %cst_94 {dimension_numbers = #tpu.dot_dimension_numbers<[1], [0], [0], [1], [0, 0, 1, 1], [], []>} : vector<8x128xf32>, vector<128x512xf32>, vector<8x512xf32> -> vector<8x512xf32>
    %457 = arith.addf %455, %456 : vector<8x512xf32>
    %458 = vector.extract_strided_slice %457 {offsets = [0, 0], sizes = [8, 128], strides = [1, 1]} : vector<8x512xf32> to vector<8x128xf32>
    %459 = arith.negf %458 : vector<8x128xf32>
    %460 = math.exp %459 : vector<8x128xf32>
    %cst_95 = arith.constant 1.000000e+00 : f32
    %461 = vector.broadcast %cst_95 : f32 to vector<8x128xf32>
    %462 = arith.addf %461, %460 : vector<8x128xf32>
    %463 = arith.divf %461, %462 : vector<8x128xf32>
    %464 = vector.extract_strided_slice %457 {offsets = [0, 128], sizes = [8, 128], strides = [1, 1]} : vector<8x512xf32> to vector<8x128xf32>
    %465 = arith.negf %464 : vector<8x128xf32>
    %466 = math.exp %465 : vector<8x128xf32>
    %cst_96 = arith.constant 1.000000e+00 : f32
    %467 = vector.broadcast %cst_96 : f32 to vector<8x128xf32>
    %468 = arith.addf %467, %466 : vector<8x128xf32>
    %469 = arith.divf %467, %468 : vector<8x128xf32>
    %470 = vector.extract_strided_slice %457 {offsets = [0, 256], sizes = [8, 128], strides = [1, 1]} : vector<8x512xf32> to vector<8x128xf32>
    %471 = math.tanh %470 : vector<8x128xf32>
    %472 = vector.extract_strided_slice %457 {offsets = [0, 384], sizes = [8, 128], strides = [1, 1]} : vector<8x512xf32> to vector<8x128xf32>
    %473 = arith.negf %472 : vector<8x128xf32>
    %474 = math.exp %473 : vector<8x128xf32>
    %cst_97 = arith.constant 1.000000e+00 : f32
    %475 = vector.broadcast %cst_97 : f32 to vector<8x128xf32>
    %476 = arith.addf %475, %474 : vector<8x128xf32>
    %477 = arith.divf %475, %476 : vector<8x128xf32>
    %478 = arith.mulf %469, %450 : vector<8x128xf32>
    %479 = arith.mulf %463, %471 : vector<8x128xf32>
    %480 = arith.addf %478, %479 : vector<8x128xf32>
    %481 = math.tanh %480 : vector<8x128xf32>
    %482 = arith.mulf %477, %481 : vector<8x128xf32>
    %c16_i32 = arith.constant 16 : i32
    %c0_98 = arith.constant 0 : index
    %c0_99 = arith.constant 0 : index
    %483 = vector.load %arg2[%c0_98, %c0_99] : memref<128x128xf32, #tpu.memory_space<vmem>>, vector<128x128xf32>
    %cst_100 = arith.constant dense<0.000000e+00> : vector<8x128xf32>
    %484 = tpu.matmul %482, %483, %cst_100 {dimension_numbers = #tpu.dot_dimension_numbers<[1], [0], [0], [1], [0, 0, 1, 1], [], []>} : vector<8x128xf32>, vector<128x128xf32>, vector<8x128xf32> -> vector<8x128xf32>
    %c0_101 = arith.constant 0 : index
    %c0_102 = arith.constant 0 : index
    %485 = vector.load %arg3[%c0_101, %c0_102] : memref<1x128xf32, #tpu.memory_space<vmem>>, vector<1x128xf32>
    %486 = vector.broadcast %485 : vector<1x128xf32> to vector<8x128xf32>
    %487 = arith.addf %484, %486 : vector<8x128xf32>
    %c0_103 = arith.constant 0 : index
    %c0_104 = arith.constant 0 : index
    %488 = vector.load %arg4[%c0_103, %c0_104] : memref<8x128xf32, #tpu.memory_space<vmem>>, vector<8x128xf32>
    tpu.vector_store %arg4[%c0_103, %c0_104], %487 {strides = array<i32>} : memref<8x128xf32, #tpu.memory_space<vmem>>, vector<8x128xf32>,
    return
  }
}

</mosaic_0001>

<llo_original>
// kernel: tpu_custom_call.1
$region0: #{tpu_custom_call.1}
  #allocation0 [shape = 'u32[]', space=smem, size = 0x4, offset = 0x4, fixed_abs, tag = 'smem constant byte address 0x4 - core index']
  #allocation1 [shape = 'u32[72,128]{1,0:T(1,128)}', space=vmem, size = 0x9000, scoped, tag = 'internal scratch']
  %s0 = inlined_call_operand.hbm [shape: f32[16,8,512], index: 0, kind: input, shape index: {}]
  %s1 = inlined_call_operand.hbm [shape: f32[128,512], index: 1, kind: input, shape index: {}]
  %s2 = inlined_call_operand.hbm [shape: f32[128,128], index: 2, kind: input, shape index: {}]
  %s3 = inlined_call_operand.vmem [shape: f32[1,128], index: 3, kind: input, shape index: {}]
  %s4 = inlined_call_operand.hbm [shape: f32[8,128], index: 4, kind: output, shape index: {}]
  %s5 = sld [smem:[#allocation0]]
  $region38: #{tpu_custom_call.1} parent=0
    _
  %s7 = ssub.s32 1, %s5
  %s8 = scalar_select 0, %s7, %s5
  $region1: #{tpu_custom_call.1} parent=0
    #allocation2 [shape = 'u8[262144]{0}', space=vmem, size = 0x40000, scoped, tag = 'input window, operand 0, single buffered']
    #allocation3 [shape = 's32[1]{0}', space=sflag, size = 0x4, scoped, tag = 'scoped memory for tpu_custom_call.1']
    #allocation4 [shape = 's32[1]{0}', space=sflag, size = 0x4, scoped, tag = 'scoped memory for tpu_custom_call.1']
    #allocation5 [shape = 'u8[262144]{0}', space=vmem, size = 0x40000, scoped, tag = 'input window, operand 1, single buffered']
    #allocation6 [shape = 's32[1]{0}', space=sflag, size = 0x4, scoped, tag = 'scoped memory for tpu_custom_call.1']
    #allocation7 [shape = 'u8[65536]{0}', space=vmem, size = 0x10000, scoped, tag = 'input window, operand 2, single buffered']
    #allocation8 [shape = 'u8[4096]{0}', space=vmem, size = 0x1000, scoped, tag = 'output window, operand 0, single buffered']
    %9 = vsyncpa [#allocation3], 0
    %10 = vsyncpa [#allocation6], 0
    %11 = vsyncpa [#allocation4], 0
    // Predicated region
    $region2: #{tpu_custom_call.1} parent=1 // pred_check
      _
    $region3: #{tpu_custom_call.1} parent=1 // pred_check_branch
      %13 = sbr.rel (0) target = $region5
    $region4: #{tpu_custom_call.1} parent=1 // pred_region
      %15 = vsyncadd [#allocation3], 0
      %s16 = sshll.u32 %s0, 4
      %s17 = int_to_ptr.hbm [resolvable:$true] %s16
      %s18 = sshll.u32 [#allocation2], 4
      %s19 = int_to_ptr.vmem [resolvable:$true] %s18
      %24 = dma.hbm_to_vmem [thread:$0]  %s17, 8192, %s19, [#allocation3], 512, 512, 32
    $region5: #{tpu_custom_call.1} parent=1 // pred_fallthru
      _
    // Predicated region
    $region6: #{tpu_custom_call.1} parent=1 // pred_check
      _
    $region7: #{tpu_custom_call.1} parent=1 // pred_check_branch
      %26 = sbr.rel (0) target = $region9
    $region8: #{tpu_custom_call.1} parent=1 // pred_region
      %28 = vsyncadd [#allocation6], 0
      %s29 = sshll.u32 %s1, 4
      %s30 = int_to_ptr.hbm [resolvable:$true] %s29
      %s31 = sshll.u32 [#allocation5], 4
      %s32 = int_to_ptr.vmem [resolvable:$true] %s31
      %37 = dma.hbm_to_vmem [thread:$0]  %s30, 8192, %s32, [#allocation6], 512, 512, 32
    $region9: #{tpu_custom_call.1} parent=1 // pred_fallthru
      _
    // Predicated region
    $region10: #{tpu_custom_call.1} parent=1 // pred_check
      _
    $region11: #{tpu_custom_call.1} parent=1 // pred_check_branch
      %39 = sbr.rel (0) target = $region13
    $region12: #{tpu_custom_call.1} parent=1 // pred_region
      %41 = vsyncadd [#allocation6], 0
      %s42 = sshll.u32 %s2, 4
      %s43 = int_to_ptr.hbm [resolvable:$true] %s42
      %s44 = sshll.u32 [#allocation7], 4
      %s45 = int_to_ptr.vmem [resolvable:$true] %s44
      %50 = dma.hbm_to_vmem [thread:$0]  %s43, 2048, %s45, [#allocation6], 128, 128, 8
    $region13: #{tpu_custom_call.1} parent=1 // pred_fallthru
      _
    // Predicated region
    $region14: #{tpu_custom_call.1} parent=1 // pred_check
      _
    $region15: #{tpu_custom_call.1} parent=1 // pred_check_branch
      %52 = sbr.rel (0) target = $region17
    $region16: #{tpu_custom_call.1} parent=1 // pred_region
      _
    $region17: #{tpu_custom_call.1} parent=1 // pred_fallthru
      _
    // Predicated region
    $region18: #{tpu_custom_call.1} parent=1 // pred_check
      _
    $region19: #{tpu_custom_call.1} parent=1 // pred_check_branch
      %54 = sbr.rel (0) target = $region21
    $region20: #{tpu_custom_call.1} parent=1 // pred_region
      %56 = dma.done [#allocation3], 8192
    $region21: #{tpu_custom_call.1} parent=1 // pred_fallthru
      _
    // Predicated region
    $region22: #{tpu_custom_call.1} parent=1 // pred_check
      _
    $region23: #{tpu_custom_call.1} parent=1 // pred_check_branch
      %58 = sbr.rel (0) target = $region25
    $region24: #{tpu_custom_call.1} parent=1 // pred_region
      %60 = dma.done [#allocation6], 8192
    $region25: #{tpu_custom_call.1} parent=1 // pred_fallthru
      _
    // Predicated region
    $region26: #{tpu_custom_call.1} parent=1 // pred_check
      _
    $region27: #{tpu_custom_call.1} parent=1 // pred_check_branch
      %62 = sbr.rel (0) target = $region29
    $region28: #{tpu_custom_call.1} parent=1 // pred_region
      %64 = dma.done [#allocation6], 2048
    $region29: #{tpu_custom_call.1} parent=1 // pred_fallthru
      _
    %v65 = vld [vmem:[#allocation5] sm:$0xff]
    %v66 = vld [vmem:[#allocation5 + $0x8] sm:$0xff]
    %v67 = vld [vmem:[#allocation5 + $0x10] sm:$0xff]
    %v68 = vld [vmem:[#allocation5 + $0x18] sm:$0xff]
    %v69 = vld [vmem:[#allocation5 + $0x20] sm:$0xff]
    %v70 = vld [vmem:[#allocation5 + $0x28] sm:$0xff]
    %v71 = vld [vmem:[#allocation5 + $0x30] sm:$0xff]
    %v72 = vld [vmem:[#allocation5 + $0x38] sm:$0xff]
    %v73 = vld [vmem:[#allocation5 + $0x40] sm:$0xff]
    %v74 = vld [vmem:[#allocation5 + $0x48] sm:$0xff]
    %v75 = vld [vmem:[#allocation5 + $0x50] sm:$0xff]
    %v76 = vld [vmem:[#allocation5 + $0x58] sm:$0xff]
    %v77 = vld [vmem:[#allocation5 + $0x60] sm:$0xff]
    %v78 = vld [vmem:[#allocation5 + $0x68] sm:$0xff]
    %v79 = vld [vmem:[#allocation5 + $0x70] sm:$0xff]
    %v80 = vld [vmem:[#allocation5 + $0x78] sm:$0xff]
    %v81 = vld [vmem:[#allocation5 + $0x80] sm:$0xff]
    %v82 = vld [vmem:[#allocation5 + $0x88] sm:$0xff]
    %v83 = vld [vmem:[#allocation5 + $0x90] sm:$0xff]
    %v84 = vld [vmem:[#allocation5 + $0x98] sm:$0xff]
    %v85 = vld [vmem:[#allocation5 + $0xa0] sm:$0xff]
    %v86 = vld [vmem:[#allocation5 + $0xa8] sm:$0xff]
    %v87 = vld [vmem:[#allocation5 + $0xb0] sm:$0xff]
    %v88 = vld [vmem:[#allocation5 + $0xb8] sm:$0xff]
    %v89 = vld [vmem:[#allocation5 + $0xc0] sm:$0xff]
    %v90 = vld [vmem:[#allocation5 + $0xc8] sm:$0xff]
    %v91 = vld [vmem:[#allocation5 + $0xd0] sm:$0xff]
    %v92 = vld [vmem:[#allocation5 + $0xd8] sm:$0xff]
    %v93 = vld [vmem:[#allocation5 + $0xe0] sm:$0xff]
    %v94 = vld [vmem:[#allocation5 + $0xe8] sm:$0xff]
    %v95 = vld [vmem:[#allocation5 + $0xf0] sm:$0xff]
    %v96 = vld [vmem:[#allocation5 + $0xf8] sm:$0xff]
    %v97 = vld [vmem:[#allocation5 + $0x100] sm:$0xff]
    %v98 = vld [vmem:[#allocation5 + $0x108] sm:$0xff]
    %v99 = vld [vmem:[#allocation5 + $0x110] sm:$0xff]
    %v100 = vld [vmem:[#allocation5 + $0x118] sm:$0xff]
    %v101 = vld [vmem:[#allocation5 + $0x120] sm:$0xff]
    %v102 = vld [vmem:[#allocation5 + $0x128] sm:$0xff]
    %v103 = vld [vmem:[#allocation5 + $0x130] sm:$0xff]
    %v104 = vld [vmem:[#allocation5 + $0x138] sm:$0xff]
    %v105 = vld [vmem:[#allocation5 + $0x140] sm:$0xff]
    %v106 = vld [vmem:[#allocation5 + $0x148] sm:$0xff]
    %v107 = vld [vmem:[#allocation5 + $0x150] sm:$0xff]
    %v108 = vld [vmem:[#allocation5 + $0x158] sm:$0xff]
    %v109 = vld [vmem:[#allocation5 + $0x160] sm:$0xff]
    %v110 = vld [vmem:[#allocation5 + $0x168] sm:$0xff]
    %v111 = vld [vmem:[#allocation5 + $0x170] sm:$0xff]
    %v112 = vld [vmem:[#allocation5 + $0x178] sm:$0xff]
    %v113 = vld [vmem:[#allocation5 + $0x180] sm:$0xff]
    %v114 = vld [vmem:[#allocation5 + $0x188] sm:$0xff]
    %v115 = vld [vmem:[#allocation5 + $0x190] sm:$0xff]
    %v116 = vld [vmem:[#allocation5 + $0x198] sm:$0xff]
    %v117 = vld [vmem:[#allocation5 + $0x1a0] sm:$0xff]
    %v118 = vld [vmem:[#allocation5 + $0x1a8] sm:$0xff]
    %v119 = vld [vmem:[#allocation5 + $0x1b0] sm:$0xff]
    %v120 = vld [vmem:[#allocation5 + $0x1b8] sm:$0xff]
    %v121 = vld [vmem:[#allocation5 + $0x1c0] sm:$0xff]
    %v122 = vld [vmem:[#allocation5 + $0x1c8] sm:$0xff]
    %v123 = vld [vmem:[#allocation5 + $0x1d0] sm:$0xff]
    %v124 = vld [vmem:[#allocation5 + $0x1d8] sm:$0xff]
    %v125 = vld [vmem:[#allocation5 + $0x1e0] sm:$0xff]
    %v126 = vld [vmem:[#allocation5 + $0x1e8] sm:$0xff]
    %v127 = vld [vmem:[#allocation5 + $0x1f0] sm:$0xff]
    %v128 = vld [vmem:[#allocation5 + $0x1f8] sm:$0xff]
    %v129 = vld [vmem:[#allocation2] sm:$0xff]
    %v130 = vld [vmem:[#allocation2 + $0x8] sm:$0xff]
    %v131 = vld [vmem:[#allocation2 + $0x10] sm:$0xff]
    %v132 = vld [vmem:[#allocation2 + $0x18] sm:$0xff]
    %133 = vmatpush.msra.mxu0 %v125
    %134 = vmatpush.msra.mxu0 %v121
    %135 = vmatpush.msra.mxu0 %v117
    %136 = vmatpush.msra.mxu0 %v113
    %137 = vmatpush.msra.mxu0 %v109
    %138 = vmatpush.msra.mxu0 %v105
    %139 = vmatpush.msra.mxu0 %v101
    %140 = vmatpush.msra.mxu0 %v97
    %141 = vmatpush.msra.mxu0 %v93
    %142 = vmatpush.msra.mxu0 %v89
    %143 = vmatpush.msra.mxu0 %v85
    %144 = vmatpush.msra.mxu0 %v81
    %145 = vmatpush.msra.mxu0 %v77
    %146 = vmatpush.msra.mxu0 %v73
    %147 = vmatpush.msra.mxu0 %v69
    %148 = vmatpush.msra.mxu0 %v65
    %149 = vmatmul.f32.gmra.mxu0 0.0
    %v150 = vpop.f32.mrf.mxu0
    %v151 = vadd.f32 0.0, %v150
    %152 = vdwg.mxu0
    %153 = vmatpush.msra.mxu0 %v126
    %154 = vmatpush.msra.mxu0 %v122
    %155 = vmatpush.msra.mxu0 %v118
    %156 = vmatpush.msra.mxu0 %v114
    %157 = vmatpush.msra.mxu0 %v110
    %158 = vmatpush.msra.mxu0 %v106
    %159 = vmatpush.msra.mxu0 %v102
    %160 = vmatpush.msra.mxu0 %v98
    %161 = vmatpush.msra.mxu0 %v94
    %162 = vmatpush.msra.mxu0 %v90
    %163 = vmatpush.msra.mxu0 %v86
    %164 = vmatpush.msra.mxu0 %v82
    %165 = vmatpush.msra.mxu0 %v78
    %166 = vmatpush.msra.mxu0 %v74
    %167 = vmatpush.msra.mxu0 %v70
    %168 = vmatpush.msra.mxu0 %v66
    %169 = vmatmul.f32.gmra.mxu0 0.0
    %v170 = vpop.f32.mrf.mxu0
    %v171 = vadd.f32 0.0, %v170
    %172 = vdwg.mxu0
    %173 = vmatpush.msra.mxu0 %v127
    %174 = vmatpush.msra.mxu0 %v123
    %175 = vmatpush.msra.mxu0 %v119
    %176 = vmatpush.msra.mxu0 %v115
    %177 = vmatpush.msra.mxu0 %v111
    %178 = vmatpush.msra.mxu0 %v107
    %179 = vmatpush.msra.mxu0 %v103
    %180 = vmatpush.msra.mxu0 %v99
    %181 = vmatpush.msra.mxu0 %v95
    %182 = vmatpush.msra.mxu0 %v91
    %183 = vmatpush.msra.mxu0 %v87
    %184 = vmatpush.msra.mxu0 %v83
    %185 = vmatpush.msra.mxu0 %v79
    %186 = vmatpush.msra.mxu0 %v75
    %187 = vmatpush.msra.mxu0 %v71
    %188 = vmatpush.msra.mxu0 %v67
    %189 = vmatmul.f32.gmra.mxu0 0.0
    %v190 = vpop.f32.mrf.mxu0
    %v191 = vadd.f32 0.0, %v190
    %192 = vdwg.mxu0
    %193 = vmatpush.msra.mxu0 %v128
    %194 = vmatpush.msra.mxu0 %v124
    %195 = vmatpush.msra.mxu0 %v120
    %196 = vmatpush.msra.mxu0 %v116
    %197 = vmatpush.msra.mxu0 %v112
    %198 = vmatpush.msra.mxu0 %v108
    %199 = vmatpush.msra.mxu0 %v104
    %200 = vmatpush.msra.mxu0 %v100
    %201 = vmatpush.msra.mxu0 %v96
    %202 = vmatpush.msra.mxu0 %v92
    %203 = vmatpush.msra.mxu0 %v88
    %204 = vmatpush.msra.mxu0 %v84
    %205 = vmatpush.msra.mxu0 %v80
    %206 = vmatpush.msra.mxu0 %v76
    %207 = vmatpush.msra.mxu0 %v72
    %208 = vmatpush.msra.mxu0 %v68
    %209 = vmatmul.f32.gmra.mxu0 0.0
    %v210 = vpop.f32.mrf.mxu0
    %v211 = vadd.f32 0.0, %v210
    %212 = vdwg.mxu0
    %v213 = vadd.f32 %v129, %v151
    %v214 = vadd.f32 %v130, %v171
    %v215 = vadd.f32 %v131, %v191
    %v216 = vadd.f32 %v132, %v211
    %v217 = vxor.u32 %v213, 2147483648
    %v218 = vmul.f32 %v217, 1.442695
    %v219 = vpow.pop %v218
    %v220 = vadd.f32 %v219, 1.0
    %v221 = vrcp.pop %v220
    %v222 = vmul.f32 %v220, %v221
    %v223 = vsub.f32 1.0, %v222
    %v224 = vmul.f32 %v221, %v223
    %v225 = vadd.f32 %v221, %v224
    %vm226 = vweird.f32 %v220
    %vm227 = vweird.f32 %v221
    %vm228 = vmor %vm226, %vm227
    %v229 = vsel %vm228, %v221, %v225
    %v230 = vand.u32 2147483647, %v220
    %vm231 = vcmp.eq.f32.partialorder %v230, 8.507059e+37
    %v232 = vand.u32 %v220, 2147483648
    %v233 = vor.u32 1.1754944e-38, %v232
    %v234 = vsel %vm231, %v233, %v229
    %v235 = vmul.f32 1.0, %v234
    %v236 = vxor.u32 %v214, 2147483648
    %v237 = vmul.f32 %v236, 1.442695
    %v238 = vpow.pop %v237
    %v239 = vadd.f32 %v238, 1.0
    %v240 = vrcp.pop %v239
    %v241 = vmul.f32 %v239, %v240
    %v242 = vsub.f32 1.0, %v241
    %v243 = vmul.f32 %v240, %v242
    %v244 = vadd.f32 %v240, %v243
    %vm245 = vweird.f32 %v239
    %vm246 = vweird.f32 %v240
    %vm247 = vmor %vm245, %vm246
    %v248 = vsel %vm247, %v240, %v244
    %v249 = vand.u32 2147483647, %v239
    %vm250 = vcmp.eq.f32.partialorder %v249, 8.507059e+37
    %v251 = vand.u32 %v239, 2147483648
    %v252 = vor.u32 1.1754944e-38, %v251
    %v253 = vsel %vm250, %v252, %v248
    %v254 = vmul.f32 1.0, %v253
    %v255 = vtanh.pop %v215
    %v256 = vxor.u32 %v216, 2147483648
    %v257 = vmul.f32 %v256, 1.442695
    %v258 = vpow.pop %v257
    %v259 = vadd.f32 %v258, 1.0
    %v260 = vrcp.pop %v259
    %v261 = vmul.f32 %v259, %v260
    %v262 = vsub.f32 1.0, %v261
    %v263 = vmul.f32 %v260, %v262
    %v264 = vadd.f32 %v260, %v263
    %vm265 = vweird.f32 %v259
    %vm266 = vweird.f32 %v260
    %vm267 = vmor %vm265, %vm266
    %v268 = vsel %vm267, %v260, %v264
    %v269 = vand.u32 2147483647, %v259
    %vm270 = vcmp.eq.f32.partialorder %v269, 8.507059e+37
    %v271 = vand.u32 %v259, 2147483648
    %v272 = vor.u32 1.1754944e-38, %v271
    %v273 = vsel %vm270, %v272, %v268
    %v274 = vmul.f32 1.0, %v273
    %v275 = vmul.f32 %v254, 0.0
    %v276 = vmul.f32 %v235, %v255
    %v277 = vadd.f32 %v275, %v276
    %v278 = vtanh.pop %v277
    %v279 = vmul.f32 %v274, %v278
    %s280 = scalar_lea.vmem [#allocation2], 32
    %v281 = vld [vmem:[%s280] sm:$0xff]
    %v282 = vld [vmem:[%s280 + $0x8] sm:$0xff]
    %v283 = vld [vmem:[%s280 + $0x10] sm:$0xff]
    %v284 = vld [vmem:[%s280 + $0x18] sm:$0xff]
    %285 = vmatpush.msra.mxu0 %v125
    %286 = vmatpush.msra.mxu0 %v121
    %287 = vmatpush.msra.mxu0 %v117
    %288 = vmatpush.msra.mxu0 %v113
    %289 = vmatpush.msra.mxu0 %v109
    %290 = vmatpush.msra.mxu0 %v105
    %291 = vmatpush.msra.mxu0 %v101
    %292 = vmatpush.msra.mxu0 %v97
    %293 = vmatpush.msra.mxu0 %v93
    %294 = vmatpush.msra.mxu0 %v89
    %295 = vmatpush.msra.mxu0 %v85
    %296 = vmatpush.msra.mxu0 %v81
    %297 = vmatpush.msra.mxu0 %v77
    %298 = vmatpush.msra.mxu0 %v73
    %299 = vmatpush.msra.mxu0 %v69
    %300 = vmatpush.msra.mxu0 %v65
    %301 = vmatmul.f32.gmra.mxu0 %v279
    %v302 = vpop.f32.mrf.mxu0
    %v303 = vadd.f32 0.0, %v302
    %304 = vdwg.mxu0
    %305 = vmatpush.msra.mxu0 %v126
    %306 = vmatpush.msra.mxu0 %v122
    %307 = vmatpush.msra.mxu0 %v118
    %308 = vmatpush.msra.mxu0 %v114
    %309 = vmatpush.msra.mxu0 %v110
    %310 = vmatpush.msra.mxu0 %v106
    %311 = vmatpush.msra.mxu0 %v102
    %312 = vmatpush.msra.mxu0 %v98
    %313 = vmatpush.msra.mxu0 %v94
    %314 = vmatpush.msra.mxu0 %v90
    %315 = vmatpush.msra.mxu0 %v86
    %316 = vmatpush.msra.mxu0 %v82
    %317 = vmatpush.msra.mxu0 %v78
    %318 = vmatpush.msra.mxu0 %v74
    %319 = vmatpush.msra.mxu0 %v70
    %320 = vmatpush.msra.mxu0 %v66
    %321 = vmatmul.f32.gmra.mxu0 %v279
    %v322 = vpop.f32.mrf.mxu0
    %v323 = vadd.f32 0.0, %v322
    %324 = vdwg.mxu0
    %325 = vmatpush.msra.mxu0 %v127
    %326 = vmatpush.msra.mxu0 %v123
    %327 = vmatpush.msra.mxu0 %v119
    %328 = vmatpush.msra.mxu0 %v115
    %329 = vmatpush.msra.mxu0 %v111
    %330 = vmatpush.msra.mxu0 %v107
    %331 = vmatpush.msra.mxu0 %v103
    %332 = vmatpush.msra.mxu0 %v99
    %333 = vmatpush.msra.mxu0 %v95
    %334 = vmatpush.msra.mxu0 %v91
    %335 = vmatpush.msra.mxu0 %v87
    %336 = vmatpush.msra.mxu0 %v83
    %337 = vmatpush.msra.mxu0 %v79
    %338 = vmatpush.msra.mxu0 %v75
    %339 = vmatpush.msra.mxu0 %v71
    %340 = vmatpush.msra.mxu0 %v67
    %341 = vmatmul.f32.gmra.mxu0 %v279
    %v342 = vpop.f32.mrf.mxu0
    %v343 = vadd.f32 0.0, %v342
    %344 = vdwg.mxu0
    %345 = vmatpush.msra.mxu0 %v128
    %346 = vmatpush.msra.mxu0 %v124
    %347 = vmatpush.msra.mxu0 %v120
    %348 = vmatpush.msra.mxu0 %v116
    %349 = vmatpush.msra.mxu0 %v112
    %350 = vmatpush.msra.mxu0 %v108
    %351 = vmatpush.msra.mxu0 %v104
    %352 = vmatpush.msra.mxu0 %v100
    %353 = vmatpush.msra.mxu0 %v96
    %354 = vmatpush.msra.mxu0 %v92
    %355 = vmatpush.msra.mxu0 %v88
    %356 = vmatpush.msra.mxu0 %v84
    %357 = vmatpush.msra.mxu0 %v80
    %358 = vmatpush.msra.mxu0 %v76
    %359 = vmatpush.msra.mxu0 %v72
    %360 = vmatpush.msra.mxu0 %v68
    %361 = vmatmul.f32.gmra.mxu0 %v279
    %v362 = vpop.f32.mrf.mxu0
    %v363 = vadd.f32 0.0, %v362
    %364 = vdwg.mxu0
    %v365 = vadd.f32 %v281, %v303
    %v366 = vadd.f32 %v282, %v323
    %v367 = vadd.f32 %v283, %v343
    %v368 = vadd.f32 %v284, %v363
    %v369 = vxor.u32 %v365, 2147483648
    %v370 = vmul.f32 %v369, 1.442695
    %v371 = vpow.pop %v370
    %v372 = vadd.f32 %v371, 1.0
    %v373 = vrcp.pop %v372
    %v374 = vmul.f32 %v372, %v373
    %v375 = vsub.f32 1.0, %v374
    %v376 = vmul.f32 %v373, %v375
    %v377 = vadd.f32 %v373, %v376
    %vm378 = vweird.f32 %v372
    %vm379 = vweird.f32 %v373
    %vm380 = vmor %vm378, %vm379
    %v381 = vsel %vm380, %v373, %v377
    %v382 = vand.u32 2147483647, %v372
    %vm383 = vcmp.eq.f32.partialorder %v382, 8.507059e+37
    %v384 = vand.u32 %v372, 2147483648
    %v385 = vor.u32 1.1754944e-38, %v384
    %v386 = vsel %vm383, %v385, %v381
    %v387 = vmul.f32 1.0, %v386
    %v388 = vxor.u32 %v366, 2147483648
    %v389 = vmul.f32 %v388, 1.442695
    %v390 = vpow.pop %v389
    %v391 = vadd.f32 %v390, 1.0
    %v392 = vrcp.pop %v391
    %v393 = vmul.f32 %v391, %v392
    %v394 = vsub.f32 1.0, %v393
    %v395 = vmul.f32 %v392, %v394
    %v396 = vadd.f32 %v392, %v395
    %vm397 = vweird.f32 %v391
    %vm398 = vweird.f32 %v392
    %vm399 = vmor %vm397, %vm398
    %v400 = vsel %vm399, %v392, %v396
    %v401 = vand.u32 2147483647, %v391
    %vm402 = vcmp.eq.f32.partialorder %v401, 8.507059e+37
    %v403 = vand.u32 %v391, 2147483648
    %v404 = vor.u32 1.1754944e-38, %v403
    %v405 = vsel %vm402, %v404, %v400
    %v406 = vmul.f32 1.0, %v405
    %v407 = vtanh.pop %v367
    %v408 = vxor.u32 %v368, 2147483648
    %v409 = vmul.f32 %v408, 1.442695
    %v410 = vpow.pop %v409
    %v411 = vadd.f32 %v410, 1.0
    %v412 = vrcp.pop %v411
    %v413 = vmul.f32 %v411, %v412
    %v414 = vsub.f32 1.0, %v413
    %v415 = vmul.f32 %v412, %v414
    %v416 = vadd.f32 %v412, %v415
    %vm417 = vweird.f32 %v411
    %vm418 = vweird.f32 %v412
    %vm419 = vmor %vm417, %vm418
    %v420 = vsel %vm419, %v412, %v416
    %v421 = vand.u32 2147483647, %v411
    %vm422 = vcmp.eq.f32.partialorder %v421, 8.507059e+37
    %v423 = vand.u32 %v411, 2147483648
    %v424 = vor.u32 1.1754944e-38, %v423
    %v425 = vsel %vm422, %v424, %v420
    %v426 = vmul.f32 1.0, %v425
    %v427 = vmul.f32 %v406, %v277
    %v428 = vmul.f32 %v387, %v407
    %v429 = vadd.f32 %v427, %v428
    %v430 = vtanh.pop %v429
    %v431 = vmul.f32 %v426, %v430
    %s432 = scalar_lea.vmem [#allocation2], 64
    %v433 = vld [vmem:[%s432] sm:$0xff]
    %v434 = vld [vmem:[%s432 + $0x8] sm:$0xff]
    %v435 = vld [vmem:[%s432 + $0x10] sm:$0xff]
    %v436 = vld [vmem:[%s432 + $0x18] sm:$0xff]
    %437 = vmatpush.msra.mxu0 %v125
    %438 = vmatpush.msra.mxu0 %v121
    %439 = vmatpush.msra.mxu0 %v117
    %440 = vmatpush.msra.mxu0 %v113
    %441 = vmatpush.msra.mxu0 %v109
    %442 = vmatpush.msra.mxu0 %v105
    %443 = vmatpush.msra.mxu0 %v101
    %444 = vmatpush.msra.mxu0 %v97
    %445 = vmatpush.msra.mxu0 %v93
    %446 = vmatpush.msra.mxu0 %v89
    %447 = vmatpush.msra.mxu0 %v85
    %448 = vmatpush.msra.mxu0 %v81
    %449 = vmatpush.msra.mxu0 %v77
    %450 = vmatpush.msra.mxu0 %v73
    %451 = vmatpush.msra.mxu0 %v69
    %452 = vmatpush.msra.mxu0 %v65
    %453 = vmatmul.f32.gmra.mxu0 %v431
    %v454 = vpop.f32.mrf.mxu0
    %v455 = vadd.f32 0.0, %v454
    %456 = vdwg.mxu0
    %457 = vmatpush.msra.mxu0 %v126
    %458 = vmatpush.msra.mxu0 %v122
    %459 = vmatpush.msra.mxu0 %v118
    %460 = vmatpush.msra.mxu0 %v114
    %461 = vmatpush.msra.mxu0 %v110
    %462 = vmatpush.msra.mxu0 %v106
    %463 = vmatpush.msra.mxu0 %v102
    %464 = vmatpush.msra.mxu0 %v98
    %465 = vmatpush.msra.mxu0 %v94
    %466 = vmatpush.msra.mxu0 %v90
    %467 = vmatpush.msra.mxu0 %v86
    %468 = vmatpush.msra.mxu0 %v82
    %469 = vmatpush.msra.mxu0 %v78
    %470 = vmatpush.msra.mxu0 %v74
    %471 = vmatpush.msra.mxu0 %v70
    %472 = vmatpush.msra.mxu0 %v66
    %473 = vmatmul.f32.gmra.mxu0 %v431
    %v474 = vpop.f32.mrf.mxu0
    %v475 = vadd.f32 0.0, %v474
    %476 = vdwg.mxu0
    %477 = vmatpush.msra.mxu0 %v127
    %478 = vmatpush.msra.mxu0 %v123
    %479 = vmatpush.msra.mxu0 %v119
    %480 = vmatpush.msra.mxu0 %v115
    %481 = vmatpush.msra.mxu0 %v111
    %482 = vmatpush.msra.mxu0 %v107
    %483 = vmatpush.msra.mxu0 %v103
    %484 = vmatpush.msra.mxu0 %v99
    %485 = vmatpush.msra.mxu0 %v95
    %486 = vmatpush.msra.mxu0 %v91
    %487 = vmatpush.msra.mxu0 %v87
    %488 = vmatpush.msra.mxu0 %v83
    %489 = vmatpush.msra.mxu0 %v79
    %490 = vmatpush.msra.mxu0 %v75
    %491 = vmatpush.msra.mxu0 %v71
    %492 = vmatpush.msra.mxu0 %v67
    %493 = vmatmul.f32.gmra.mxu0 %v431
    %v494 = vpop.f32.mrf.mxu0
    %v495 = vadd.f32 0.0, %v494
    %496 = vdwg.mxu0
    %497 = vmatpush.msra.mxu0 %v128
    %498 = vmatpush.msra.mxu0 %v124
    %499 = vmatpush.msra.mxu0 %v120
    %500 = vmatpush.msra.mxu0 %v116
    %501 = vmatpush.msra.mxu0 %v112
    %502 = vmatpush.msra.mxu0 %v108
    %503 = vmatpush.msra.mxu0 %v104
    %504 = vmatpush.msra.mxu0 %v100
    %505 = vmatpush.msra.mxu0 %v96
    %506 = vmatpush.msra.mxu0 %v92
    %507 = vmatpush.msra.mxu0 %v88
    %508 = vmatpush.msra.mxu0 %v84
    %509 = vmatpush.msra.mxu0 %v80
    %510 = vmatpush.msra.mxu0 %v76
    %511 = vmatpush.msra.mxu0 %v72
    %512 = vmatpush.msra.mxu0 %v68
    %513 = vmatmul.f32.gmra.mxu0 %v431
    %v514 = vpop.f32.mrf.mxu0
    %v515 = vadd.f32 0.0, %v514
    %516 = vdwg.mxu0
    %v517 = vadd.f32 %v433, %v455
    %v518 = vadd.f32 %v434, %v475
    %v519 = vadd.f32 %v435, %v495
    %v520 = vadd.f32 %v436, %v515
    %v521 = vxor.u32 %v517, 2147483648
    %v522 = vmul.f32 %v521, 1.442695
    %v523 = vpow.pop %v522
    %v524 = vadd.f32 %v523, 1.0
    %v525 = vrcp.pop %v524
    %v526 = vmul.f32 %v524, %v525
    %v527 = vsub.f32 1.0, %v526
    %v528 = vmul.f32 %v525, %v527
    %v529 = vadd.f32 %v525, %v528
    %vm530 = vweird.f32 %v524
    %vm531 = vweird.f32 %v525
    %vm532 = vmor %vm530, %vm531
    %v533 = vsel %vm532, %v525, %v529
    %v534 = vand.u32 2147483647, %v524
    %vm535 = vcmp.eq.f32.partialorder %v534, 8.507059e+37
    %v536 = vand.u32 %v524, 2147483648
    %v537 = vor.u32 1.1754944e-38, %v536
    %v538 = vsel %vm535, %v537, %v533
    %v539 = vmul.f32 1.0, %v538
    %v540 = vxor.u32 %v518, 2147483648
    %v541 = vmul.f32 %v540, 1.442695
    %v542 = vpow.pop %v541
    %v543 = vadd.f32 %v542, 1.0
    %v544 = vrcp.pop %v543
    %v545 = vmul.f32 %v543, %v544
    %v546 = vsub.f32 1.0, %v545
    %v547 = vmul.f32 %v544, %v546
    %v548 = vadd.f32 %v544, %v547
    %vm549 = vweird.f32 %v543
    %vm550 = vweird.f32 %v544
    %vm551 = vmor %vm549, %vm550
    %v552 = vsel %vm551, %v544, %v548
    %v553 = vand.u32 2147483647, %v543
    %vm554 = vcmp.eq.f32.partialorder %v553, 8.507059e+37
    %v555 = vand.u32 %v543, 2147483648
    %v556 = vor.u32 1.1754944e-38, %v555
    %v557 = vsel %vm554, %v556, %v552
    %v558 = vmul.f32 1.0, %v557
    %v559 = vtanh.pop %v519
    %v560 = vxor.u32 %v520, 2147483648
    %v561 = vmul.f32 %v560, 1.442695
    %v562 = vpow.pop %v561
    %v563 = vadd.f32 %v562, 1.0
    %v564 = vrcp.pop %v563
    %v565 = vmul.f32 %v563, %v564
    %v566 = vsub.f32 1.0, %v565
    %v567 = vmul.f32 %v564, %v566
    %v568 = vadd.f32 %v564, %v567
    %vm569 = vweird.f32 %v563
    %vm570 = vweird.f32 %v564
    %vm571 = vmor %vm569, %vm570
    %v572 = vsel %vm571, %v564, %v568
    %v573 = vand.u32 2147483647, %v563
    %vm574 = vcmp.eq.f32.partialorder %v573, 8.507059e+37
    %v575 = vand.u32 %v563, 2147483648
    %v576 = vor.u32 1.1754944e-38, %v575
    %v577 = vsel %vm574, %v576, %v572
    %v578 = vmul.f32 1.0, %v577
    %v579 = vmul.f32 %v558, %v429
    %v580 = vmul.f32 %v539, %v559
    %v581 = vadd.f32 %v579, %v580
    %v582 = vtanh.pop %v581
    %v583 = vmul.f32 %v578, %v582
    %s584 = scalar_lea.vmem [#allocation2], 96
    %v585 = vld [vmem:[%s584] sm:$0xff]
    %v586 = vld [vmem:[%s584 + $0x8] sm:$0xff]
    %v587 = vld [vmem:[%s584 + $0x10] sm:$0xff]
    %v588 = vld [vmem:[%s584 + $0x18] sm:$0xff]
    %589 = vmatpush.msra.mxu0 %v125
    %590 = vmatpush.msra.mxu0 %v121
    %591 = vmatpush.msra.mxu0 %v117
    %592 = vmatpush.msra.mxu0 %v113
    %593 = vmatpush.msra.mxu0 %v109
    %594 = vmatpush.msra.mxu0 %v105
    %595 = vmatpush.msra.mxu0 %v101
    %596 = vmatpush.msra.mxu0 %v97
    %597 = vmatpush.msra.mxu0 %v93
    %598 = vmatpush.msra.mxu0 %v89
    %599 = vmatpush.msra.mxu0 %v85
    %600 = vmatpush.msra.mxu0 %v81
    %601 = vmatpush.msra.mxu0 %v77
    %602 = vmatpush.msra.mxu0 %v73
    %603 = vmatpush.msra.mxu0 %v69
    %604 = vmatpush.msra.mxu0 %v65
    %605 = vmatmul.f32.gmra.mxu0 %v583
    %v606 = vpop.f32.mrf.mxu0
    %v607 = vadd.f32 0.0, %v606
    %608 = vdwg.mxu0
    %609 = vmatpush.msra.mxu0 %v126
    %610 = vmatpush.msra.mxu0 %v122
    %611 = vmatpush.msra.mxu0 %v118
    %612 = vmatpush.msra.mxu0 %v114
    %613 = vmatpush.msra.mxu0 %v110
    %614 = vmatpush.msra.mxu0 %v106
    %615 = vmatpush.msra.mxu0 %v102
    %616 = vmatpush.msra.mxu0 %v98
    %617 = vmatpush.msra.mxu0 %v94
    %618 = vmatpush.msra.mxu0 %v90
    %619 = vmatpush.msra.mxu0 %v86
    %620 = vmatpush.msra.mxu0 %v82
    %621 = vmatpush.msra.mxu0 %v78
    %622 = vmatpush.msra.mxu0 %v74
    %623 = vmatpush.msra.mxu0 %v70
    %624 = vmatpush.msra.mxu0 %v66
    %625 = vmatmul.f32.gmra.mxu0 %v583
    %v626 = vpop.f32.mrf.mxu0
    %v627 = vadd.f32 0.0, %v626
    %628 = vdwg.mxu0
    %629 = vmatpush.msra.mxu0 %v127
    %630 = vmatpush.msra.mxu0 %v123
    %631 = vmatpush.msra.mxu0 %v119
    %632 = vmatpush.msra.mxu0 %v115
    %633 = vmatpush.msra.mxu0 %v111
    %634 = vmatpush.msra.mxu0 %v107
    %635 = vmatpush.msra.mxu0 %v103
    %636 = vmatpush.msra.mxu0 %v99
    %637 = vmatpush.msra.mxu0 %v95
    %638 = vmatpush.msra.mxu0 %v91
    %639 = vmatpush.msra.mxu0 %v87
    %640 = vmatpush.msra.mxu0 %v83
    %641 = vmatpush.msra.mxu0 %v79
    %642 = vmatpush.msra.mxu0 %v75
    %643 = vmatpush.msra.mxu0 %v71
    %644 = vmatpush.msra.mxu0 %v67
    %645 = vmatmul.f32.gmra.mxu0 %v583
    %v646 = vpop.f32.mrf.mxu0
    %v647 = vadd.f32 0.0, %v646
    %648 = vdwg.mxu0
    %649 = vmatpush.msra.mxu0 %v128
    %650 = vmatpush.msra.mxu0 %v124
    %651 = vmatpush.msra.mxu0 %v120
    %652 = vmatpush.msra.mxu0 %v116
    %653 = vmatpush.msra.mxu0 %v112
    %654 = vmatpush.msra.mxu0 %v108
    %655 = vmatpush.msra.mxu0 %v104
    %656 = vmatpush.msra.mxu0 %v100
    %657 = vmatpush.msra.mxu0 %v96
    %658 = vmatpush.msra.mxu0 %v92
    %659 = vmatpush.msra.mxu0 %v88
    %660 = vmatpush.msra.mxu0 %v84
    %661 = vmatpush.msra.mxu0 %v80
    %662 = vmatpush.msra.mxu0 %v76
    %663 = vmatpush.msra.mxu0 %v72
    %664 = vmatpush.msra.mxu0 %v68
    %665 = vmatmul.f32.gmra.mxu0 %v583
    %v666 = vpop.f32.mrf.mxu0
    %v667 = vadd.f32 0.0, %v666
    %668 = vdwg.mxu0
    %v669 = vadd.f32 %v585, %v607
    %v670 = vadd.f32 %v586, %v627
    %v671 = vadd.f32 %v587, %v647
    %v672 = vadd.f32 %v588, %v667
    %v673 = vxor.u32 %v669, 2147483648
    %v674 = vmul.f32 %v673, 1.442695
    %v675 = vpow.pop %v674
    %v676 = vadd.f32 %v675, 1.0
    %v677 = vrcp.pop %v676
    %v678 = vmul.f32 %v676, %v677
    %v679 = vsub.f32 1.0, %v678
    %v680 = vmul.f32 %v677, %v679
    %v681 = vadd.f32 %v677, %v680
    %vm682 = vweird.f32 %v676
    %vm683 = vweird.f32 %v677
    %vm684 = vmor %vm682, %vm683
    %v685 = vsel %vm684, %v677, %v681
    %v686 = vand.u32 2147483647, %v676
    %vm687 = vcmp.eq.f32.partialorder %v686, 8.507059e+37
    %v688 = vand.u32 %v676, 2147483648
    %v689 = vor.u32 1.1754944e-38, %v688
    %v690 = vsel %vm687, %v689, %v685
    %v691 = vmul.f32 1.0, %v690
    %v692 = vxor.u32 %v670, 2147483648
    %v693 = vmul.f32 %v692, 1.442695
    %v694 = vpow.pop %v693
    %v695 = vadd.f32 %v694, 1.0
    %v696 = vrcp.pop %v695
    %v697 = vmul.f32 %v695, %v696
    %v698 = vsub.f32 1.0, %v697
    %v699 = vmul.f32 %v696, %v698
    %v700 = vadd.f32 %v696, %v699
    %vm701 = vweird.f32 %v695
    %vm702 = vweird.f32 %v696
    %vm703 = vmor %vm701, %vm702
    %v704 = vsel %vm703, %v696, %v700
    %v705 = vand.u32 2147483647, %v695
    %vm706 = vcmp.eq.f32.partialorder %v705, 8.507059e+37
    %v707 = vand.u32 %v695, 2147483648
    %v708 = vor.u32 1.1754944e-38, %v707
    %v709 = vsel %vm706, %v708, %v704
    %v710 = vmul.f32 1.0, %v709
    %v711 = vtanh.pop %v671
    %v712 = vxor.u32 %v672, 2147483648
    %v713 = vmul.f32 %v712, 1.442695
    %v714 = vpow.pop %v713
    %v715 = vadd.f32 %v714, 1.0
    %v716 = vrcp.pop %v715
    %v717 = vmul.f32 %v715, %v716
    %v718 = vsub.f32 1.0, %v717
    %v719 = vmul.f32 %v716, %v718
    %v720 = vadd.f32 %v716, %v719
    %vm721 = vweird.f32 %v715
    %vm722 = vweird.f32 %v716
    %vm723 = vmor %vm721, %vm722
    %v724 = vsel %vm723, %v716, %v720
    %v725 = vand.u32 2147483647, %v715
    %vm726 = vcmp.eq.f32.partialorder %v725, 8.507059e+37
    %v727 = vand.u32 %v715, 2147483648
    %v728 = vor.u32 1.1754944e-38, %v727
    %v729 = vsel %vm726, %v728, %v724
    %v730 = vmul.f32 1.0, %v729
    %v731 = vmul.f32 %v710, %v581
    %v732 = vmul.f32 %v691, %v711
    %v733 = vadd.f32 %v731, %v732
    %v734 = vtanh.pop %v733
    %v735 = vmul.f32 %v730, %v734
    %s736 = scalar_lea.vmem [#allocation2], 128
    %v737 = vld [vmem:[%s736] sm:$0xff]
    %v738 = vld [vmem:[%s736 + $0x8] sm:$0xff]
    %v739 = vld [vmem:[%s736 + $0x10] sm:$0xff]
    %v740 = vld [vmem:[%s736 + $0x18] sm:$0xff]
    %741 = vmatpush.msra.mxu0 %v125
    %742 = vmatpush.msra.mxu0 %v121
    %743 = vmatpush.msra.mxu0 %v117
    %744 = vmatpush.msra.mxu0 %v113
    %745 = vmatpush.msra.mxu0 %v109
    %746 = vmatpush.msra.mxu0 %v105
    %747 = vmatpush.msra.mxu0 %v101
    %748 = vmatpush.msra.mxu0 %v97
    %749 = vmatpush.msra.mxu0 %v93
    %750 = vmatpush.msra.mxu0 %v89
    %751 = vmatpush.msra.mxu0 %v85
    %752 = vmatpush.msra.mxu0 %v81
    %753 = vmatpush.msra.mxu0 %v77
    %754 = vmatpush.msra.mxu0 %v73
    %755 = vmatpush.msra.mxu0 %v69
    %756 = vmatpush.msra.mxu0 %v65
    %757 = vmatmul.f32.gmra.mxu0 %v735
    %v758 = vpop.f32.mrf.mxu0
    %v759 = vadd.f32 0.0, %v758
    %760 = vdwg.mxu0
    %761 = vmatpush.msra.mxu0 %v126
    %762 = vmatpush.msra.mxu0 %v122
    %763 = vmatpush.msra.mxu0 %v118
    %764 = vmatpush.msra.mxu0 %v114
    %765 = vmatpush.msra.mxu0 %v110
    %766 = vmatpush.msra.mxu0 %v106
    %767 = vmatpush.msra.mxu0 %v102
    %768 = vmatpush.msra.mxu0 %v98
    %769 = vmatpush.msra.mxu0 %v94
    %770 = vmatpush.msra.mxu0 %v90
    %771 = vmatpush.msra.mxu0 %v86
    %772 = vmatpush.msra.mxu0 %v82
    %773 = vmatpush.msra.mxu0 %v78
    %774 = vmatpush.msra.mxu0 %v74
    %775 = vmatpush.msra.mxu0 %v70
    %776 = vmatpush.msra.mxu0 %v66
    %777 = vmatmul.f32.gmra.mxu0 %v735
    %v778 = vpop.f32.mrf.mxu0
    %v779 = vadd.f32 0.0, %v778
    %780 = vdwg.mxu0
    %781 = vmatpush.msra.mxu0 %v127
    %782 = vmatpush.msra.mxu0 %v123
    %783 = vmatpush.msra.mxu0 %v119
    %784 = vmatpush.msra.mxu0 %v115
    %785 = vmatpush.msra.mxu0 %v111
    %786 = vmatpush.msra.mxu0 %v107
    %787 = vmatpush.msra.mxu0 %v103
    %788 = vmatpush.msra.mxu0 %v99
    %789 = vmatpush.msra.mxu0 %v95
    %790 = vmatpush.msra.mxu0 %v91
    %791 = vmatpush.msra.mxu0 %v87
    %792 = vmatpush.msra.mxu0 %v83
    %793 = vmatpush.msra.mxu0 %v79
    %794 = vmatpush.msra.mxu0 %v75
    %795 = vmatpush.msra.mxu0 %v71
    %796 = vmatpush.msra.mxu0 %v67
    %797 = vmatmul.f32.gmra.mxu0 %v735
    %v798 = vpop.f32.mrf.mxu0
    %v799 = vadd.f32 0.0, %v798
    %800 = vdwg.mxu0
    %801 = vmatpush.msra.mxu0 %v128
    %802 = vmatpush.msra.mxu0 %v124
    %803 = vmatpush.msra.mxu0 %v120
    %804 = vmatpush.msra.mxu0 %v116
    %805 = vmatpush.msra.mxu0 %v112
    %806 = vmatpush.msra.mxu0 %v108
    %807 = vmatpush.msra.mxu0 %v104
    %808 = vmatpush.msra.mxu0 %v100
    %809 = vmatpush.msra.mxu0 %v96
    %810 = vmatpush.msra.mxu0 %v92
    %811 = vmatpush.msra.mxu0 %v88
    %812 = vmatpush.msra.mxu0 %v84
    %813 = vmatpush.msra.mxu0 %v80
    %814 = vmatpush.msra.mxu0 %v76
    %815 = vmatpush.msra.mxu0 %v72
    %816 = vmatpush.msra.mxu0 %v68
    %817 = vmatmul.f32.gmra.mxu0 %v735
    %v818 = vpop.f32.mrf.mxu0
    %v819 = vadd.f32 0.0, %v818
    %820 = vdwg.mxu0
    %v821 = vadd.f32 %v737, %v759
    %v822 = vadd.f32 %v738, %v779
    %v823 = vadd.f32 %v739, %v799
    %v824 = vadd.f32 %v740, %v819
    %v825 = vxor.u32 %v821, 2147483648
    %v826 = vmul.f32 %v825, 1.442695
    %v827 = vpow.pop %v826
    %v828 = vadd.f32 %v827, 1.0
    %v829 = vrcp.pop %v828
    %v830 = vmul.f32 %v828, %v829
    %v831 = vsub.f32 1.0, %v830
    %v832 = vmul.f32 %v829, %v831
    %v833 = vadd.f32 %v829, %v832
    %vm834 = vweird.f32 %v828
    %vm835 = vweird.f32 %v829
    %vm836 = vmor %vm834, %vm835
    %v837 = vsel %vm836, %v829, %v833
    %v838 = vand.u32 2147483647, %v828
    %vm839 = vcmp.eq.f32.partialorder %v838, 8.507059e+37
    %v840 = vand.u32 %v828, 2147483648
    %v841 = vor.u32 1.1754944e-38, %v840
    %v842 = vsel %vm839, %v841, %v837
    %v843 = vmul.f32 1.0, %v842
    %v844 = vxor.u32 %v822, 2147483648
    %v845 = vmul.f32 %v844, 1.442695
    %v846 = vpow.pop %v845
    %v847 = vadd.f32 %v846, 1.0
    %v848 = vrcp.pop %v847
    %v849 = vmul.f32 %v847, %v848
    %v850 = vsub.f32 1.0, %v849
    %v851 = vmul.f32 %v848, %v850
    %v852 = vadd.f32 %v848, %v851
    %vm853 = vweird.f32 %v847
    %vm854 = vweird.f32 %v848
    %vm855 = vmor %vm853, %vm854
    %v856 = vsel %vm855, %v848, %v852
    %v857 = vand.u32 2147483647, %v847
    %vm858 = vcmp.eq.f32.partialorder %v857, 8.507059e+37
    %v859 = vand.u32 %v847, 2147483648
    %v860 = vor.u32 1.1754944e-38, %v859
    %v861 = vsel %vm858, %v860, %v856
    %v862 = vmul.f32 1.0, %v861
    %v863 = vtanh.pop %v823
    %v864 = vxor.u32 %v824, 2147483648
    %v865 = vmul.f32 %v864, 1.442695
    %v866 = vpow.pop %v865
    %v867 = vadd.f32 %v866, 1.0
    %v868 = vrcp.pop %v867
    %v869 = vmul.f32 %v867, %v868
    %v870 = vsub.f32 1.0, %v869
    %v871 = vmul.f32 %v868, %v870
    %v872 = vadd.f32 %v868, %v871
    %vm873 = vweird.f32 %v867
    %vm874 = vweird.f32 %v868
    %vm875 = vmor %vm873, %vm874
    %v876 = vsel %vm875, %v868, %v872
    %v877 = vand.u32 2147483647, %v867
    %vm878 = vcmp.eq.f32.partialorder %v877, 8.507059e+37
    %v879 = vand.u32 %v867, 2147483648
    %v880 = vor.u32 1.1754944e-38, %v879
    %v881 = vsel %vm878, %v880, %v876
    %v882 = vmul.f32 1.0, %v881
    %v883 = vmul.f32 %v862, %v733
    %v884 = vmul.f32 %v843, %v863
    %v885 = vadd.f32 %v883, %v884
    %v886 = vtanh.pop %v885
    %v887 = vmul.f32 %v882, %v886
    %s888 = scalar_lea.vmem [#allocation2], 160
    %v889 = vld [vmem:[%s888] sm:$0xff]
    %v890 = vld [vmem:[%s888 + $0x8] sm:$0xff]
    %v891 = vld [vmem:[%s888 + $0x10] sm:$0xff]
    %v892 = vld [vmem:[%s888 + $0x18] sm:$0xff]
    %893 = vmatpush.msra.mxu0 %v125
    %894 = vmatpush.msra.mxu0 %v121
    %895 = vmatpush.msra.mxu0 %v117
    %896 = vmatpush.msra.mxu0 %v113
    %897 = vmatpush.msra.mxu0 %v109
    %898 = vmatpush.msra.mxu0 %v105
    %899 = vmatpush.msra.mxu0 %v101
    %900 = vmatpush.msra.mxu0 %v97
    %901 = vmatpush.msra.mxu0 %v93
    %902 = vmatpush.msra.mxu0 %v89
    %903 = vmatpush.msra.mxu0 %v85
    %904 = vmatpush.msra.mxu0 %v81
    %905 = vmatpush.msra.mxu0 %v77
    %906 = vmatpush.msra.mxu0 %v73
    %907 = vmatpush.msra.mxu0 %v69
    %908 = vmatpush.msra.mxu0 %v65
    %909 = vmatmul.f32.gmra.mxu0 %v887
    %v910 = vpop.f32.mrf.mxu0
    %v911 = vadd.f32 0.0, %v910
    %912 = vdwg.mxu0
    %913 = vmatpush.msra.mxu0 %v126
    %914 = vmatpush.msra.mxu0 %v122
    %915 = vmatpush.msra.mxu0 %v118
    %916 = vmatpush.msra.mxu0 %v114
    %917 = vmatpush.msra.mxu0 %v110
    %918 = vmatpush.msra.mxu0 %v106
    %919 = vmatpush.msra.mxu0 %v102
    %920 = vmatpush.msra.mxu0 %v98
    %921 = vmatpush.msra.mxu0 %v94
    %922 = vmatpush.msra.mxu0 %v90
    %923 = vmatpush.msra.mxu0 %v86
    %924 = vmatpush.msra.mxu0 %v82
    %925 = vmatpush.msra.mxu0 %v78
    %926 = vmatpush.msra.mxu0 %v74
    %927 = vmatpush.msra.mxu0 %v70
    %928 = vmatpush.msra.mxu0 %v66
    %929 = vmatmul.f32.gmra.mxu0 %v887
    %v930 = vpop.f32.mrf.mxu0
    %v931 = vadd.f32 0.0, %v930
    %932 = vdwg.mxu0
    %933 = vmatpush.msra.mxu0 %v127
    %934 = vmatpush.msra.mxu0 %v123
    %935 = vmatpush.msra.mxu0 %v119
    %936 = vmatpush.msra.mxu0 %v115
    %937 = vmatpush.msra.mxu0 %v111
    %938 = vmatpush.msra.mxu0 %v107
    %939 = vmatpush.msra.mxu0 %v103
    %940 = vmatpush.msra.mxu0 %v99
    %941 = vmatpush.msra.mxu0 %v95
    %942 = vmatpush.msra.mxu0 %v91
    %943 = vmatpush.msra.mxu0 %v87
    %944 = vmatpush.msra.mxu0 %v83
    %945 = vmatpush.msra.mxu0 %v79
    %946 = vmatpush.msra.mxu0 %v75
    %947 = vmatpush.msra.mxu0 %v71
    %948 = vmatpush.msra.mxu0 %v67
    %949 = vmatmul.f32.gmra.mxu0 %v887
    %v950 = vpop.f32.mrf.mxu0
    %v951 = vadd.f32 0.0, %v950
    %952 = vdwg.mxu0
    %953 = vmatpush.msra.mxu0 %v128
    %954 = vmatpush.msra.mxu0 %v124
    %955 = vmatpush.msra.mxu0 %v120
    %956 = vmatpush.msra.mxu0 %v116
    %957 = vmatpush.msra.mxu0 %v112
    %958 = vmatpush.msra.mxu0 %v108
    %959 = vmatpush.msra.mxu0 %v104
    %960 = vmatpush.msra.mxu0 %v100
    %961 = vmatpush.msra.mxu0 %v96
    %962 = vmatpush.msra.mxu0 %v92
    %963 = vmatpush.msra.mxu0 %v88
    %964 = vmatpush.msra.mxu0 %v84
    %965 = vmatpush.msra.mxu0 %v80
    %966 = vmatpush.msra.mxu0 %v76
    %967 = vmatpush.msra.mxu0 %v72
    %968 = vmatpush.msra.mxu0 %v68
    %969 = vmatmul.f32.gmra.mxu0 %v887
    %v970 = vpop.f32.mrf.mxu0
    %v971 = vadd.f32 0.0, %v970
    %972 = vdwg.mxu0
    %v973 = vadd.f32 %v889, %v911
    %v974 = vadd.f32 %v890, %v931
    %v975 = vadd.f32 %v891, %v951
    %v976 = vadd.f32 %v892, %v971
    %v977 = vxor.u32 %v973, 2147483648
    %v978 = vmul.f32 %v977, 1.442695
    %v979 = vpow.pop %v978
    %v980 = vadd.f32 %v979, 1.0
    %v981 = vrcp.pop %v980
    %v982 = vmul.f32 %v980, %v981
    %v983 = vsub.f32 1.0, %v982
    %v984 = vmul.f32 %v981, %v983
    %v985 = vadd.f32 %v981, %v984
    %vm986 = vweird.f32 %v980
    %vm987 = vweird.f32 %v981
    %vm988 = vmor %vm986, %vm987
    %v989 = vsel %vm988, %v981, %v985
    %v990 = vand.u32 2147483647, %v980
    %vm991 = vcmp.eq.f32.partialorder %v990, 8.507059e+37
    %v992 = vand.u32 %v980, 2147483648
    %v993 = vor.u32 1.1754944e-38, %v992
    %v994 = vsel %vm991, %v993, %v989
    %v995 = vmul.f32 1.0, %v994
    %v996 = vxor.u32 %v974, 2147483648
    %v997 = vmul.f32 %v996, 1.442695
    %v998 = vpow.pop %v997
    %v999 = vadd.f32 %v998, 1.0
    %v1000 = vrcp.pop %v999
    %v1001 = vmul.f32 %v999, %v1000
    %v1002 = vsub.f32 1.0, %v1001
    %v1003 = vmul.f32 %v1000, %v1002
    %v1004 = vadd.f32 %v1000, %v1003
    %vm1005 = vweird.f32 %v999
    %vm1006 = vweird.f32 %v1000
    %vm1007 = vmor %vm1005, %vm1006
    %v1008 = vsel %vm1007, %v1000, %v1004
    %v1009 = vand.u32 2147483647, %v999
    %vm1010 = vcmp.eq.f32.partialorder %v1009, 8.507059e+37
    %v1011 = vand.u32 %v999, 2147483648
    %v1012 = vor.u32 1.1754944e-38, %v1011
    %v1013 = vsel %vm1010, %v1012, %v1008
    %v1014 = vmul.f32 1.0, %v1013
    %v1015 = vtanh.pop %v975
    %v1016 = vxor.u32 %v976, 2147483648
    %v1017 = vmul.f32 %v1016, 1.442695
    %v1018 = vpow.pop %v1017
    %v1019 = vadd.f32 %v1018, 1.0
    %v1020 = vrcp.pop %v1019
    %v1021 = vmul.f32 %v1019, %v1020
    %v1022 = vsub.f32 1.0, %v1021
    %v1023 = vmul.f32 %v1020, %v1022
    %v1024 = vadd.f32 %v1020, %v1023
    %vm1025 = vweird.f32 %v1019
    %vm1026 = vweird.f32 %v1020
    %vm1027 = vmor %vm1025, %vm1026
    %v1028 = vsel %vm1027, %v1020, %v1024
    %v1029 = vand.u32 2147483647, %v1019
    %vm1030 = vcmp.eq.f32.partialorder %v1029, 8.507059e+37
    %v1031 = vand.u32 %v1019, 2147483648
    %v1032 = vor.u32 1.1754944e-38, %v1031
    %v1033 = vsel %vm1030, %v1032, %v1028
    %v1034 = vmul.f32 1.0, %v1033
    %v1035 = vmul.f32 %v1014, %v885
    %v1036 = vmul.f32 %v995, %v1015
    %v1037 = vadd.f32 %v1035, %v1036
    %v1038 = vtanh.pop %v1037
    %v1039 = vmul.f32 %v1034, %v1038
    %s1040 = scalar_lea.vmem [#allocation2], 192
    %v1041 = vld [vmem:[%s1040] sm:$0xff]
    %v1042 = vld [vmem:[%s1040 + $0x8] sm:$0xff]
    %v1043 = vld [vmem:[%s1040 + $0x10] sm:$0xff]
    %v1044 = vld [vmem:[%s1040 + $0x18] sm:$0xff]
    %1045 = vmatpush.msra.mxu0 %v125
    %1046 = vmatpush.msra.mxu0 %v121
    %1047 = vmatpush.msra.mxu0 %v117
    %1048 = vmatpush.msra.mxu0 %v113
    %1049 = vmatpush.msra.mxu0 %v109
    %1050 = vmatpush.msra.mxu0 %v105
    %1051 = vmatpush.msra.mxu0 %v101
    %1052 = vmatpush.msra.mxu0 %v97
    %1053 = vmatpush.msra.mxu0 %v93
    %1054 = vmatpush.msra.mxu0 %v89
    %1055 = vmatpush.msra.mxu0 %v85
    %1056 = vmatpush.msra.mxu0 %v81
    %1057 = vmatpush.msra.mxu0 %v77
    %1058 = vmatpush.msra.mxu0 %v73
    %1059 = vmatpush.msra.mxu0 %v69
    %1060 = vmatpush.msra.mxu0 %v65
    %1061 = vmatmul.f32.gmra.mxu0 %v1039
    %v1062 = vpop.f32.mrf.mxu0
    %v1063 = vadd.f32 0.0, %v1062
    %1064 = vdwg.mxu0
    %1065 = vmatpush.msra.mxu0 %v126
    %1066 = vmatpush.msra.mxu0 %v122
    %1067 = vmatpush.msra.mxu0 %v118
    %1068 = vmatpush.msra.mxu0 %v114
    %1069 = vmatpush.msra.mxu0 %v110
    %1070 = vmatpush.msra.mxu0 %v106
    %1071 = vmatpush.msra.mxu0 %v102
    %1072 = vmatpush.msra.mxu0 %v98
    %1073 = vmatpush.msra.mxu0 %v94
    %1074 = vmatpush.msra.mxu0 %v90
    %1075 = vmatpush.msra.mxu0 %v86
    %1076 = vmatpush.msra.mxu0 %v82
    %1077 = vmatpush.msra.mxu0 %v78
    %1078 = vmatpush.msra.mxu0 %v74
    %1079 = vmatpush.msra.mxu0 %v70
    %1080 = vmatpush.msra.mxu0 %v66
    %1081 = vmatmul.f32.gmra.mxu0 %v1039
    %v1082 = vpop.f32.mrf.mxu0
    %v1083 = vadd.f32 0.0, %v1082
    %1084 = vdwg.mxu0
    %1085 = vmatpush.msra.mxu0 %v127
    %1086 = vmatpush.msra.mxu0 %v123
    %1087 = vmatpush.msra.mxu0 %v119
    %1088 = vmatpush.msra.mxu0 %v115
    %1089 = vmatpush.msra.mxu0 %v111
    %1090 = vmatpush.msra.mxu0 %v107
    %1091 = vmatpush.msra.mxu0 %v103
    %1092 = vmatpush.msra.mxu0 %v99
    %1093 = vmatpush.msra.mxu0 %v95
    %1094 = vmatpush.msra.mxu0 %v91
    %1095 = vmatpush.msra.mxu0 %v87
    %1096 = vmatpush.msra.mxu0 %v83
    %1097 = vmatpush.msra.mxu0 %v79
    %1098 = vmatpush.msra.mxu0 %v75
    %1099 = vmatpush.msra.mxu0 %v71
    %1100 = vmatpush.msra.mxu0 %v67
    %1101 = vmatmul.f32.gmra.mxu0 %v1039
    %v1102 = vpop.f32.mrf.mxu0
    %v1103 = vadd.f32 0.0, %v1102
    %1104 = vdwg.mxu0
    %1105 = vmatpush.msra.mxu0 %v128
    %1106 = vmatpush.msra.mxu0 %v124
    %1107 = vmatpush.msra.mxu0 %v120
    %1108 = vmatpush.msra.mxu0 %v116
    %1109 = vmatpush.msra.mxu0 %v112
    %1110 = vmatpush.msra.mxu0 %v108
    %1111 = vmatpush.msra.mxu0 %v104
    %1112 = vmatpush.msra.mxu0 %v100
    %1113 = vmatpush.msra.mxu0 %v96
    %1114 = vmatpush.msra.mxu0 %v92
    %1115 = vmatpush.msra.mxu0 %v88
    %1116 = vmatpush.msra.mxu0 %v84
    %1117 = vmatpush.msra.mxu0 %v80
    %1118 = vmatpush.msra.mxu0 %v76
    %1119 = vmatpush.msra.mxu0 %v72
    %1120 = vmatpush.msra.mxu0 %v68
    %1121 = vmatmul.f32.gmra.mxu0 %v1039
    %v1122 = vpop.f32.mrf.mxu0
    %v1123 = vadd.f32 0.0, %v1122
    %1124 = vdwg.mxu0
    %v1125 = vadd.f32 %v1041, %v1063
    %v1126 = vadd.f32 %v1042, %v1083
    %v1127 = vadd.f32 %v1043, %v1103
    %v1128 = vadd.f32 %v1044, %v1123
    %v1129 = vxor.u32 %v1125, 2147483648
    %v1130 = vmul.f32 %v1129, 1.442695
    %v1131 = vpow.pop %v1130
    %v1132 = vadd.f32 %v1131, 1.0
    %v1133 = vrcp.pop %v1132
    %v1134 = vmul.f32 %v1132, %v1133
    %v1135 = vsub.f32 1.0, %v1134
    %v1136 = vmul.f32 %v1133, %v1135
    %v1137 = vadd.f32 %v1133, %v1136
    %vm1138 = vweird.f32 %v1132
    %vm1139 = vweird.f32 %v1133
    %vm1140 = vmor %vm1138, %vm1139
    %v1141 = vsel %vm1140, %v1133, %v1137
    %v1142 = vand.u32 2147483647, %v1132
    %vm1143 = vcmp.eq.f32.partialorder %v1142, 8.507059e+37
    %v1144 = vand.u32 %v1132, 2147483648
    %v1145 = vor.u32 1.1754944e-38, %v1144
    %v1146 = vsel %vm1143, %v1145, %v1141
    %v1147 = vmul.f32 1.0, %v1146
    %v1148 = vxor.u32 %v1126, 2147483648
    %v1149 = vmul.f32 %v1148, 1.442695
    %v1150 = vpow.pop %v1149
    %v1151 = vadd.f32 %v1150, 1.0
    %v1152 = vrcp.pop %v1151
    %v1153 = vmul.f32 %v1151, %v1152
    %v1154 = vsub.f32 1.0, %v1153
    %v1155 = vmul.f32 %v1152, %v1154
    %v1156 = vadd.f32 %v1152, %v1155
    %vm1157 = vweird.f32 %v1151
    %vm1158 = vweird.f32 %v1152
    %vm1159 = vmor %vm1157, %vm1158
    %v1160 = vsel %vm1159, %v1152, %v1156
    %v1161 = vand.u32 2147483647, %v1151
    %vm1162 = vcmp.eq.f32.partialorder %v1161, 8.507059e+37
    %v1163 = vand.u32 %v1151, 2147483648
    %v1164 = vor.u32 1.1754944e-38, %v1163
    %v1165 = vsel %vm1162, %v1164, %v1160
    %v1166 = vmul.f32 1.0, %v1165
    %v1167 = vtanh.pop %v1127
    %v1168 = vxor.u32 %v1128, 2147483648
    %v1169 = vmul.f32 %v1168, 1.442695
    %v1170 = vpow.pop %v1169
    %v1171 = vadd.f32 %v1170, 1.0
    %v1172 = vrcp.pop %v1171
    %v1173 = vmul.f32 %v1171, %v1172
    %v1174 = vsub.f32 1.0, %v1173
    %v1175 = vmul.f32 %v1172, %v1174
    %v1176 = vadd.f32 %v1172, %v1175
    %vm1177 = vweird.f32 %v1171
    %vm1178 = vweird.f32 %v1172
    %vm1179 = vmor %vm1177, %vm1178
    %v1180 = vsel %vm1179, %v1172, %v1176
    %v1181 = vand.u32 2147483647, %v1171
    %vm1182 = vcmp.eq.f32.partialorder %v1181, 8.507059e+37
    %v1183 = vand.u32 %v1171, 2147483648
    %v1184 = vor.u32 1.1754944e-38, %v1183
    %v1185 = vsel %vm1182, %v1184, %v1180
    %v1186 = vmul.f32 1.0, %v1185
    %v1187 = vmul.f32 %v1166, %v1037
    %v1188 = vmul.f32 %v1147, %v1167
    %v1189 = vadd.f32 %v1187, %v1188
    %v1190 = vtanh.pop %v1189
    %v1191 = vmul.f32 %v1186, %v1190
    %s1192 = scalar_lea.vmem [#allocation2], 224
    %v1193 = vld [vmem:[%s1192] sm:$0xff]
    %v1194 = vld [vmem:[%s1192 + $0x8] sm:$0xff]
    %v1195 = vld [vmem:[%s1192 + $0x10] sm:$0xff]
    %v1196 = vld [vmem:[%s1192 + $0x18] sm:$0xff]
    %1197 = vmatpush.msra.mxu0 %v125
    %1198 = vmatpush.msra.mxu0 %v121
    %1199 = vmatpush.msra.mxu0 %v117
    %1200 = vmatpush.msra.mxu0 %v113
    %1201 = vmatpush.msra.mxu0 %v109
    %1202 = vmatpush.msra.mxu0 %v105
    %1203 = vmatpush.msra.mxu0 %v101
    %1204 = vmatpush.msra.mxu0 %v97
    %1205 = vmatpush.msra.mxu0 %v93
    %1206 = vmatpush.msra.mxu0 %v89
    %1207 = vmatpush.msra.mxu0 %v85
    %1208 = vmatpush.msra.mxu0 %v81
    %1209 = vmatpush.msra.mxu0 %v77
    %1210 = vmatpush.msra.mxu0 %v73
    %1211 = vmatpush.msra.mxu0 %v69
    %1212 = vmatpush.msra.mxu0 %v65
    %1213 = vmatmul.f32.gmra.mxu0 %v1191
    %v1214 = vpop.f32.mrf.mxu0
    %v1215 = vadd.f32 0.0, %v1214
    %1216 = vdwg.mxu0
    %1217 = vmatpush.msra.mxu0 %v126
    %1218 = vmatpush.msra.mxu0 %v122
    %1219 = vmatpush.msra.mxu0 %v118
    %1220 = vmatpush.msra.mxu0 %v114
    %1221 = vmatpush.msra.mxu0 %v110
    %1222 = vmatpush.msra.mxu0 %v106
    %1223 = vmatpush.msra.mxu0 %v102
    %1224 = vmatpush.msra.mxu0 %v98
    %1225 = vmatpush.msra.mxu0 %v94
    %1226 = vmatpush.msra.mxu0 %v90
    %1227 = vmatpush.msra.mxu0 %v86
    %1228 = vmatpush.msra.mxu0 %v82
    %1229 = vmatpush.msra.mxu0 %v78
    %1230 = vmatpush.msra.mxu0 %v74
    %1231 = vmatpush.msra.mxu0 %v70
    %1232 = vmatpush.msra.mxu0 %v66
    %1233 = vmatmul.f32.gmra.mxu0 %v1191
    %v1234 = vpop.f32.mrf.mxu0
    %v1235 = vadd.f32 0.0, %v1234
    %1236 = vdwg.mxu0
    %1237 = vmatpush.msra.mxu0 %v127
    %1238 = vmatpush.msra.mxu0 %v123
    %1239 = vmatpush.msra.mxu0 %v119
    %1240 = vmatpush.msra.mxu0 %v115
    %1241 = vmatpush.msra.mxu0 %v111
    %1242 = vmatpush.msra.mxu0 %v107
    %1243 = vmatpush.msra.mxu0 %v103
    %1244 = vmatpush.msra.mxu0 %v99
    %1245 = vmatpush.msra.mxu0 %v95
    %1246 = vmatpush.msra.mxu0 %v91
    %1247 = vmatpush.msra.mxu0 %v87
    %1248 = vmatpush.msra.mxu0 %v83
    %1249 = vmatpush.msra.mxu0 %v79
    %1250 = vmatpush.msra.mxu0 %v75
    %1251 = vmatpush.msra.mxu0 %v71
    %1252 = vmatpush.msra.mxu0 %v67
    %1253 = vmatmul.f32.gmra.mxu0 %v1191
    %v1254 = vpop.f32.mrf.mxu0
    %v1255 = vadd.f32 0.0, %v1254
    %1256 = vdwg.mxu0
    %1257 = vmatpush.msra.mxu0 %v128
    %1258 = vmatpush.msra.mxu0 %v124
    %1259 = vmatpush.msra.mxu0 %v120
    %1260 = vmatpush.msra.mxu0 %v116
    %1261 = vmatpush.msra.mxu0 %v112
    %1262 = vmatpush.msra.mxu0 %v108
    %1263 = vmatpush.msra.mxu0 %v104
    %1264 = vmatpush.msra.mxu0 %v100
    %1265 = vmatpush.msra.mxu0 %v96
    %1266 = vmatpush.msra.mxu0 %v92
    %1267 = vmatpush.msra.mxu0 %v88
    %1268 = vmatpush.msra.mxu0 %v84
    %1269 = vmatpush.msra.mxu0 %v80
    %1270 = vmatpush.msra.mxu0 %v76
    %1271 = vmatpush.msra.mxu0 %v72
    %1272 = vmatpush.msra.mxu0 %v68
    %1273 = vmatmul.f32.gmra.mxu0 %v1191
    %v1274 = vpop.f32.mrf.mxu0
    %v1275 = vadd.f32 0.0, %v1274
    %1276 = vdwg.mxu0
    %v1277 = vadd.f32 %v1193, %v1215
    %v1278 = vadd.f32 %v1194, %v1235
    %v1279 = vadd.f32 %v1195, %v1255
    %v1280 = vadd.f32 %v1196, %v1275
    %v1281 = vxor.u32 %v1277, 2147483648
    %v1282 = vmul.f32 %v1281, 1.442695
    %v1283 = vpow.pop %v1282
    %v1284 = vadd.f32 %v1283, 1.0
    %v1285 = vrcp.pop %v1284
    %v1286 = vmul.f32 %v1284, %v1285
    %v1287 = vsub.f32 1.0, %v1286
    %v1288 = vmul.f32 %v1285, %v1287
    %v1289 = vadd.f32 %v1285, %v1288
    %vm1290 = vweird.f32 %v1284
    %vm1291 = vweird.f32 %v1285
    %vm1292 = vmor %vm1290, %vm1291
    %v1293 = vsel %vm1292, %v1285, %v1289
    %v1294 = vand.u32 2147483647, %v1284
    %vm1295 = vcmp.eq.f32.partialorder %v1294, 8.507059e+37
    %v1296 = vand.u32 %v1284, 2147483648
    %v1297 = vor.u32 1.1754944e-38, %v1296
    %v1298 = vsel %vm1295, %v1297, %v1293
    %v1299 = vmul.f32 1.0, %v1298
    %v1300 = vxor.u32 %v1278, 2147483648
    %v1301 = vmul.f32 %v1300, 1.442695
    %v1302 = vpow.pop %v1301
    %v1303 = vadd.f32 %v1302, 1.0
    %v1304 = vrcp.pop %v1303
    %v1305 = vmul.f32 %v1303, %v1304
    %v1306 = vsub.f32 1.0, %v1305
    %v1307 = vmul.f32 %v1304, %v1306
    %v1308 = vadd.f32 %v1304, %v1307
    %vm1309 = vweird.f32 %v1303
    %vm1310 = vweird.f32 %v1304
    %vm1311 = vmor %vm1309, %vm1310
    %v1312 = vsel %vm1311, %v1304, %v1308
    %v1313 = vand.u32 2147483647, %v1303
    %vm1314 = vcmp.eq.f32.partialorder %v1313, 8.507059e+37
    %v1315 = vand.u32 %v1303, 2147483648
    %v1316 = vor.u32 1.1754944e-38, %v1315
    %v1317 = vsel %vm1314, %v1316, %v1312
    %v1318 = vmul.f32 1.0, %v1317
    %v1319 = vtanh.pop %v1279
    %v1320 = vxor.u32 %v1280, 2147483648
    %v1321 = vmul.f32 %v1320, 1.442695
    %v1322 = vpow.pop %v1321
    %v1323 = vadd.f32 %v1322, 1.0
    %v1324 = vrcp.pop %v1323
    %v1325 = vmul.f32 %v1323, %v1324
    %v1326 = vsub.f32 1.0, %v1325
    %v1327 = vmul.f32 %v1324, %v1326
    %v1328 = vadd.f32 %v1324, %v1327
    %vm1329 = vweird.f32 %v1323
    %vm1330 = vweird.f32 %v1324
    %vm1331 = vmor %vm1329, %vm1330
    %v1332 = vsel %vm1331, %v1324, %v1328
    %v1333 = vand.u32 2147483647, %v1323
    %vm1334 = vcmp.eq.f32.partialorder %v1333, 8.507059e+37
    %v1335 = vand.u32 %v1323, 2147483648
    %v1336 = vor.u32 1.1754944e-38, %v1335
    %v1337 = vsel %vm1334, %v1336, %v1332
    %v1338 = vmul.f32 1.0, %v1337
    %v1339 = vmul.f32 %v1318, %v1189
    %v1340 = vmul.f32 %v1299, %v1319
    %v1341 = vadd.f32 %v1339, %v1340
    %v1342 = vtanh.pop %v1341
    %v1343 = vmul.f32 %v1338, %v1342
    %s1344 = scalar_lea.vmem [#allocation2], 256
    %v1345 = vld [vmem:[%s1344] sm:$0xff]
    %v1346 = vld [vmem:[%s1344 + $0x8] sm:$0xff]
    %v1347 = vld [vmem:[%s1344 + $0x10] sm:$0xff]
    %v1348 = vld [vmem:[%s1344 + $0x18] sm:$0xff]
    %1349 = vmatpush.msra.mxu0 %v125
    %1350 = vmatpush.msra.mxu0 %v121
    %1351 = vmatpush.msra.mxu0 %v117
    %1352 = vmatpush.msra.mxu0 %v113
    %1353 = vmatpush.msra.mxu0 %v109
    %1354 = vmatpush.msra.mxu0 %v105
    %1355 = vmatpush.msra.mxu0 %v101
    %1356 = vmatpush.msra.mxu0 %v97
    %1357 = vmatpush.msra.mxu0 %v93
    %1358 = vmatpush.msra.mxu0 %v89
    %1359 = vmatpush.msra.mxu0 %v85
    %1360 = vmatpush.msra.mxu0 %v81
    %1361 = vmatpush.msra.mxu0 %v77
    %1362 = vmatpush.msra.mxu0 %v73
    %1363 = vmatpush.msra.mxu0 %v69
    %1364 = vmatpush.msra.mxu0 %v65
    %1365 = vmatmul.f32.gmra.mxu0 %v1343
    %v1366 = vpop.f32.mrf.mxu0
    %v1367 = vadd.f32 0.0, %v1366
    %1368 = vdwg.mxu0
    %1369 = vmatpush.msra.mxu0 %v126
    %1370 = vmatpush.msra.mxu0 %v122
    %1371 = vmatpush.msra.mxu0 %v118
    %1372 = vmatpush.msra.mxu0 %v114
    %1373 = vmatpush.msra.mxu0 %v110
    %1374 = vmatpush.msra.mxu0 %v106
    %1375 = vmatpush.msra.mxu0 %v102
    %1376 = vmatpush.msra.mxu0 %v98
    %1377 = vmatpush.msra.mxu0 %v94
    %1378 = vmatpush.msra.mxu0 %v90
    %1379 = vmatpush.msra.mxu0 %v86
    %1380 = vmatpush.msra.mxu0 %v82
    %1381 = vmatpush.msra.mxu0 %v78
    %1382 = vmatpush.msra.mxu0 %v74
    %1383 = vmatpush.msra.mxu0 %v70
    %1384 = vmatpush.msra.mxu0 %v66
    %1385 = vmatmul.f32.gmra.mxu0 %v1343
    %v1386 = vpop.f32.mrf.mxu0
    %v1387 = vadd.f32 0.0, %v1386
    %1388 = vdwg.mxu0
    %1389 = vmatpush.msra.mxu0 %v127
    %1390 = vmatpush.msra.mxu0 %v123
    %1391 = vmatpush.msra.mxu0 %v119
    %1392 = vmatpush.msra.mxu0 %v115
    %1393 = vmatpush.msra.mxu0 %v111
    %1394 = vmatpush.msra.mxu0 %v107
    %1395 = vmatpush.msra.mxu0 %v103
    %1396 = vmatpush.msra.mxu0 %v99
    %1397 = vmatpush.msra.mxu0 %v95
    %1398 = vmatpush.msra.mxu0 %v91
    %1399 = vmatpush.msra.mxu0 %v87
    %1400 = vmatpush.msra.mxu0 %v83
    %1401 = vmatpush.msra.mxu0 %v79
    %1402 = vmatpush.msra.mxu0 %v75
    %1403 = vmatpush.msra.mxu0 %v71
    %1404 = vmatpush.msra.mxu0 %v67
    %1405 = vmatmul.f32.gmra.mxu0 %v1343
    %v1406 = vpop.f32.mrf.mxu0
    %v1407 = vadd.f32 0.0, %v1406
    %1408 = vdwg.mxu0
    %1409 = vmatpush.msra.mxu0 %v128
    %1410 = vmatpush.msra.mxu0 %v124
    %1411 = vmatpush.msra.mxu0 %v120
    %1412 = vmatpush.msra.mxu0 %v116
    %1413 = vmatpush.msra.mxu0 %v112
    %1414 = vmatpush.msra.mxu0 %v108
    %1415 = vmatpush.msra.mxu0 %v104
    %1416 = vmatpush.msra.mxu0 %v100
    %1417 = vmatpush.msra.mxu0 %v96
    %1418 = vmatpush.msra.mxu0 %v92
    %1419 = vmatpush.msra.mxu0 %v88
    %1420 = vmatpush.msra.mxu0 %v84
    %1421 = vmatpush.msra.mxu0 %v80
    %1422 = vmatpush.msra.mxu0 %v76
    %1423 = vmatpush.msra.mxu0 %v72
    %1424 = vmatpush.msra.mxu0 %v68
    %1425 = vmatmul.f32.gmra.mxu0 %v1343
    %v1426 = vpop.f32.mrf.mxu0
    %v1427 = vadd.f32 0.0, %v1426
    %1428 = vdwg.mxu0
    %v1429 = vadd.f32 %v1345, %v1367
    %v1430 = vadd.f32 %v1346, %v1387
    %v1431 = vadd.f32 %v1347, %v1407
    %v1432 = vadd.f32 %v1348, %v1427
    %v1433 = vxor.u32 %v1429, 2147483648
    %v1434 = vmul.f32 %v1433, 1.442695
    %v1435 = vpow.pop %v1434
    %v1436 = vadd.f32 %v1435, 1.0
    %v1437 = vrcp.pop %v1436
    %v1438 = vmul.f32 %v1436, %v1437
    %v1439 = vsub.f32 1.0, %v1438
    %v1440 = vmul.f32 %v1437, %v1439
    %v1441 = vadd.f32 %v1437, %v1440
    %vm1442 = vweird.f32 %v1436
    %vm1443 = vweird.f32 %v1437
    %vm1444 = vmor %vm1442, %vm1443
    %v1445 = vsel %vm1444, %v1437, %v1441
    %v1446 = vand.u32 2147483647, %v1436
    %vm1447 = vcmp.eq.f32.partialorder %v1446, 8.507059e+37
    %v1448 = vand.u32 %v1436, 2147483648
    %v1449 = vor.u32 1.1754944e-38, %v1448
    %v1450 = vsel %vm1447, %v1449, %v1445
    %v1451 = vmul.f32 1.0, %v1450
    %v1452 = vxor.u32 %v1430, 2147483648
    %v1453 = vmul.f32 %v1452, 1.442695
    %v1454 = vpow.pop %v1453
    %v1455 = vadd.f32 %v1454, 1.0
    %v1456 = vrcp.pop %v1455
    %v1457 = vmul.f32 %v1455, %v1456
    %v1458 = vsub.f32 1.0, %v1457
    %v1459 = vmul.f32 %v1456, %v1458
    %v1460 = vadd.f32 %v1456, %v1459
    %vm1461 = vweird.f32 %v1455
    %vm1462 = vweird.f32 %v1456
    %vm1463 = vmor %vm1461, %vm1462
    %v1464 = vsel %vm1463, %v1456, %v1460
    %v1465 = vand.u32 2147483647, %v1455
    %vm1466 = vcmp.eq.f32.partialorder %v1465, 8.507059e+37
    %v1467 = vand.u32 %v1455, 2147483648
    %v1468 = vor.u32 1.1754944e-38, %v1467
    %v1469 = vsel %vm1466, %v1468, %v1464
    %v1470 = vmul.f32 1.0, %v1469
    %v1471 = vtanh.pop %v1431
    %v1472 = vxor.u32 %v1432, 2147483648
    %v1473 = vmul.f32 %v1472, 1.442695
    %v1474 = vpow.pop %v1473
    %v1475 = vadd.f32 %v1474, 1.0
    %v1476 = vrcp.pop %v1475
    %v1477 = vmul.f32 %v1475, %v1476
    %v1478 = vsub.f32 1.0, %v1477
    %v1479 = vmul.f32 %v1476, %v1478
    %v1480 = vadd.f32 %v1476, %v1479
    %vm1481 = vweird.f32 %v1475
    %vm1482 = vweird.f32 %v1476
    %vm1483 = vmor %vm1481, %vm1482
    %v1484 = vsel %vm1483, %v1476, %v1480
    %v1485 = vand.u32 2147483647, %v1475
    %vm1486 = vcmp.eq.f32.partialorder %v1485, 8.507059e+37
    %v1487 = vand.u32 %v1475, 2147483648
    %v1488 = vor.u32 1.1754944e-38, %v1487
    %v1489 = vsel %vm1486, %v1488, %v1484
    %v1490 = vmul.f32 1.0, %v1489
    %v1491 = vmul.f32 %v1470, %v1341
    %v1492 = vmul.f32 %v1451, %v1471
    %v1493 = vadd.f32 %v1491, %v1492
    %v1494 = vtanh.pop %v1493
    %v1495 = vmul.f32 %v1490, %v1494
    %s1496 = scalar_lea.vmem [#allocation2], 288
    %v1497 = vld [vmem:[%s1496] sm:$0xff]
    %v1498 = vld [vmem:[%s1496 + $0x8] sm:$0xff]
    %v1499 = vld [vmem:[%s1496 + $0x10] sm:$0xff]
    %v1500 = vld [vmem:[%s1496 + $0x18] sm:$0xff]
    %1501 = vmatpush.msra.mxu0 %v125
    %1502 = vmatpush.msra.mxu0 %v121
    %1503 = vmatpush.msra.mxu0 %v117
    %1504 = vmatpush.msra.mxu0 %v113
    %1505 = vmatpush.msra.mxu0 %v109
    %1506 = vmatpush.msra.mxu0 %v105
    %1507 = vmatpush.msra.mxu0 %v101
    %1508 = vmatpush.msra.mxu0 %v97
    %1509 = vmatpush.msra.mxu0 %v93
    %1510 = vmatpush.msra.mxu0 %v89
    %1511 = vmatpush.msra.mxu0 %v85
    %1512 = vmatpush.msra.mxu0 %v81
    %1513 = vmatpush.msra.mxu0 %v77
    %1514 = vmatpush.msra.mxu0 %v73
    %1515 = vmatpush.msra.mxu0 %v69
    %1516 = vmatpush.msra.mxu0 %v65
    %1517 = vmatmul.f32.gmra.mxu0 %v1495
    %v1518 = vpop.f32.mrf.mxu0
    %v1519 = vadd.f32 0.0, %v1518
    %1520 = vdwg.mxu0
    %1521 = vmatpush.msra.mxu0 %v126
    %1522 = vmatpush.msra.mxu0 %v122
    %1523 = vmatpush.msra.mxu0 %v118
    %1524 = vmatpush.msra.mxu0 %v114
    %1525 = vmatpush.msra.mxu0 %v110
    %1526 = vmatpush.msra.mxu0 %v106
    %1527 = vmatpush.msra.mxu0 %v102
    %1528 = vmatpush.msra.mxu0 %v98
    %1529 = vmatpush.msra.mxu0 %v94
    %1530 = vmatpush.msra.mxu0 %v90
    %1531 = vmatpush.msra.mxu0 %v86
    %1532 = vmatpush.msra.mxu0 %v82
    %1533 = vmatpush.msra.mxu0 %v78
    %1534 = vmatpush.msra.mxu0 %v74
    %1535 = vmatpush.msra.mxu0 %v70
    %1536 = vmatpush.msra.mxu0 %v66
    %1537 = vmatmul.f32.gmra.mxu0 %v1495
    %v1538 = vpop.f32.mrf.mxu0
    %v1539 = vadd.f32 0.0, %v1538
    %1540 = vdwg.mxu0
    %1541 = vmatpush.msra.mxu0 %v127
    %1542 = vmatpush.msra.mxu0 %v123
    %1543 = vmatpush.msra.mxu0 %v119
    %1544 = vmatpush.msra.mxu0 %v115
    %1545 = vmatpush.msra.mxu0 %v111
    %1546 = vmatpush.msra.mxu0 %v107
    %1547 = vmatpush.msra.mxu0 %v103
    %1548 = vmatpush.msra.mxu0 %v99
    %1549 = vmatpush.msra.mxu0 %v95
    %1550 = vmatpush.msra.mxu0 %v91
    %1551 = vmatpush.msra.mxu0 %v87
    %1552 = vmatpush.msra.mxu0 %v83
    %1553 = vmatpush.msra.mxu0 %v79
    %1554 = vmatpush.msra.mxu0 %v75
    %1555 = vmatpush.msra.mxu0 %v71
    %1556 = vmatpush.msra.mxu0 %v67
    %1557 = vmatmul.f32.gmra.mxu0 %v1495
    %v1558 = vpop.f32.mrf.mxu0
    %v1559 = vadd.f32 0.0, %v1558
    %1560 = vdwg.mxu0
    %1561 = vmatpush.msra.mxu0 %v128
    %1562 = vmatpush.msra.mxu0 %v124
    %1563 = vmatpush.msra.mxu0 %v120
    %1564 = vmatpush.msra.mxu0 %v116
    %1565 = vmatpush.msra.mxu0 %v112
    %1566 = vmatpush.msra.mxu0 %v108
    %1567 = vmatpush.msra.mxu0 %v104
    %1568 = vmatpush.msra.mxu0 %v100
    %1569 = vmatpush.msra.mxu0 %v96
    %1570 = vmatpush.msra.mxu0 %v92
    %1571 = vmatpush.msra.mxu0 %v88
    %1572 = vmatpush.msra.mxu0 %v84
    %1573 = vmatpush.msra.mxu0 %v80
    %1574 = vmatpush.msra.mxu0 %v76
    %1575 = vmatpush.msra.mxu0 %v72
    %1576 = vmatpush.msra.mxu0 %v68
    %1577 = vmatmul.f32.gmra.mxu0 %v1495
    %v1578 = vpop.f32.mrf.mxu0
    %v1579 = vadd.f32 0.0, %v1578
    %1580 = vdwg.mxu0
    %v1581 = vadd.f32 %v1497, %v1519
    %v1582 = vadd.f32 %v1498, %v1539
    %v1583 = vadd.f32 %v1499, %v1559
    %v1584 = vadd.f32 %v1500, %v1579
    %v1585 = vxor.u32 %v1581, 2147483648
    %v1586 = vmul.f32 %v1585, 1.442695
    %v1587 = vpow.pop %v1586
    %v1588 = vadd.f32 %v1587, 1.0
    %v1589 = vrcp.pop %v1588
    %v1590 = vmul.f32 %v1588, %v1589
    %v1591 = vsub.f32 1.0, %v1590
    %v1592 = vmul.f32 %v1589, %v1591
    %v1593 = vadd.f32 %v1589, %v1592
    %vm1594 = vweird.f32 %v1588
    %vm1595 = vweird.f32 %v1589
    %vm1596 = vmor %vm1594, %vm1595
    %v1597 = vsel %vm1596, %v1589, %v1593
    %v1598 = vand.u32 2147483647, %v1588
    %vm1599 = vcmp.eq.f32.partialorder %v1598, 8.507059e+37
    %v1600 = vand.u32 %v1588, 2147483648
    %v1601 = vor.u32 1.1754944e-38, %v1600
    %v1602 = vsel %vm1599, %v1601, %v1597
    %v1603 = vmul.f32 1.0, %v1602
    %v1604 = vxor.u32 %v1582, 2147483648
    %v1605 = vmul.f32 %v1604, 1.442695
    %v1606 = vpow.pop %v1605
    %v1607 = vadd.f32 %v1606, 1.0
    %v1608 = vrcp.pop %v1607
    %v1609 = vmul.f32 %v1607, %v1608
    %v1610 = vsub.f32 1.0, %v1609
    %v1611 = vmul.f32 %v1608, %v1610
    %v1612 = vadd.f32 %v1608, %v1611
    %vm1613 = vweird.f32 %v1607
    %vm1614 = vweird.f32 %v1608
    %vm1615 = vmor %vm1613, %vm1614
    %v1616 = vsel %vm1615, %v1608, %v1612
    %v1617 = vand.u32 2147483647, %v1607
    %vm1618 = vcmp.eq.f32.partialorder %v1617, 8.507059e+37
    %v1619 = vand.u32 %v1607, 2147483648
    %v1620 = vor.u32 1.1754944e-38, %v1619
    %v1621 = vsel %vm1618, %v1620, %v1616
    %v1622 = vmul.f32 1.0, %v1621
    %v1623 = vtanh.pop %v1583
    %v1624 = vxor.u32 %v1584, 2147483648
    %v1625 = vmul.f32 %v1624, 1.442695
    %v1626 = vpow.pop %v1625
    %v1627 = vadd.f32 %v1626, 1.0
    %v1628 = vrcp.pop %v1627
    %v1629 = vmul.f32 %v1627, %v1628
    %v1630 = vsub.f32 1.0, %v1629
    %v1631 = vmul.f32 %v1628, %v1630
    %v1632 = vadd.f32 %v1628, %v1631
    %vm1633 = vweird.f32 %v1627
    %vm1634 = vweird.f32 %v1628
    %vm1635 = vmor %vm1633, %vm1634
    %v1636 = vsel %vm1635, %v1628, %v1632
    %v1637 = vand.u32 2147483647, %v1627
    %vm1638 = vcmp.eq.f32.partialorder %v1637, 8.507059e+37
    %v1639 = vand.u32 %v1627, 2147483648
    %v1640 = vor.u32 1.1754944e-38, %v1639
    %v1641 = vsel %vm1638, %v1640, %v1636
    %v1642 = vmul.f32 1.0, %v1641
    %v1643 = vmul.f32 %v1622, %v1493
    %v1644 = vmul.f32 %v1603, %v1623
    %v1645 = vadd.f32 %v1643, %v1644
    %v1646 = vtanh.pop %v1645
    %v1647 = vmul.f32 %v1642, %v1646
    %s1648 = scalar_lea.vmem [#allocation2], 320
    %v1649 = vld [vmem:[%s1648] sm:$0xff]
    %v1650 = vld [vmem:[%s1648 + $0x8] sm:$0xff]
    %v1651 = vld [vmem:[%s1648 + $0x10] sm:$0xff]
    %v1652 = vld [vmem:[%s1648 + $0x18] sm:$0xff]
    %1653 = vmatpush.msra.mxu0 %v125
    %1654 = vmatpush.msra.mxu0 %v121
    %1655 = vmatpush.msra.mxu0 %v117
    %1656 = vmatpush.msra.mxu0 %v113
    %1657 = vmatpush.msra.mxu0 %v109
    %1658 = vmatpush.msra.mxu0 %v105
    %1659 = vmatpush.msra.mxu0 %v101
    %1660 = vmatpush.msra.mxu0 %v97
    %1661 = vmatpush.msra.mxu0 %v93
    %1662 = vmatpush.msra.mxu0 %v89
    %1663 = vmatpush.msra.mxu0 %v85
    %1664 = vmatpush.msra.mxu0 %v81
    %1665 = vmatpush.msra.mxu0 %v77
    %1666 = vmatpush.msra.mxu0 %v73
    %1667 = vmatpush.msra.mxu0 %v69
    %1668 = vmatpush.msra.mxu0 %v65
    %1669 = vmatmul.f32.gmra.mxu0 %v1647
    %v1670 = vpop.f32.mrf.mxu0
    %v1671 = vadd.f32 0.0, %v1670
    %1672 = vdwg.mxu0
    %1673 = vmatpush.msra.mxu0 %v126
    %1674 = vmatpush.msra.mxu0 %v122
    %1675 = vmatpush.msra.mxu0 %v118
    %1676 = vmatpush.msra.mxu0 %v114
    %1677 = vmatpush.msra.mxu0 %v110
    %1678 = vmatpush.msra.mxu0 %v106
    %1679 = vmatpush.msra.mxu0 %v102
    %1680 = vmatpush.msra.mxu0 %v98
    %1681 = vmatpush.msra.mxu0 %v94
    %1682 = vmatpush.msra.mxu0 %v90
    %1683 = vmatpush.msra.mxu0 %v86
    %1684 = vmatpush.msra.mxu0 %v82
    %1685 = vmatpush.msra.mxu0 %v78
    %1686 = vmatpush.msra.mxu0 %v74
    %1687 = vmatpush.msra.mxu0 %v70
    %1688 = vmatpush.msra.mxu0 %v66
    %1689 = vmatmul.f32.gmra.mxu0 %v1647
    %v1690 = vpop.f32.mrf.mxu0
    %v1691 = vadd.f32 0.0, %v1690
    %1692 = vdwg.mxu0
    %1693 = vmatpush.msra.mxu0 %v127
    %1694 = vmatpush.msra.mxu0 %v123
    %1695 = vmatpush.msra.mxu0 %v119
    %1696 = vmatpush.msra.mxu0 %v115
    %1697 = vmatpush.msra.mxu0 %v111
    %1698 = vmatpush.msra.mxu0 %v107
    %1699 = vmatpush.msra.mxu0 %v103
    %1700 = vmatpush.msra.mxu0 %v99
    %1701 = vmatpush.msra.mxu0 %v95
    %1702 = vmatpush.msra.mxu0 %v91
    %1703 = vmatpush.msra.mxu0 %v87
    %1704 = vmatpush.msra.mxu0 %v83
    %1705 = vmatpush.msra.mxu0 %v79
    %1706 = vmatpush.msra.mxu0 %v75
    %1707 = vmatpush.msra.mxu0 %v71
    %1708 = vmatpush.msra.mxu0 %v67
    %1709 = vmatmul.f32.gmra.mxu0 %v1647
    %v1710 = vpop.f32.mrf.mxu0
    %v1711 = vadd.f32 0.0, %v1710
    %1712 = vdwg.mxu0
    %1713 = vmatpush.msra.mxu0 %v128
    %1714 = vmatpush.msra.mxu0 %v124
    %1715 = vmatpush.msra.mxu0 %v120
    %1716 = vmatpush.msra.mxu0 %v116
    %1717 = vmatpush.msra.mxu0 %v112
    %1718 = vmatpush.msra.mxu0 %v108
    %1719 = vmatpush.msra.mxu0 %v104
    %1720 = vmatpush.msra.mxu0 %v100
    %1721 = vmatpush.msra.mxu0 %v96
    %1722 = vmatpush.msra.mxu0 %v92
    %1723 = vmatpush.msra.mxu0 %v88
    %1724 = vmatpush.msra.mxu0 %v84
    %1725 = vmatpush.msra.mxu0 %v80
    %1726 = vmatpush.msra.mxu0 %v76
    %1727 = vmatpush.msra.mxu0 %v72
    %1728 = vmatpush.msra.mxu0 %v68
    %1729 = vmatmul.f32.gmra.mxu0 %v1647
    %v1730 = vpop.f32.mrf.mxu0
    %v1731 = vadd.f32 0.0, %v1730
    %1732 = vdwg.mxu0
    %v1733 = vadd.f32 %v1649, %v1671
    %v1734 = vadd.f32 %v1650, %v1691
    %v1735 = vadd.f32 %v1651, %v1711
    %v1736 = vadd.f32 %v1652, %v1731
    %v1737 = vxor.u32 %v1733, 2147483648
    %v1738 = vmul.f32 %v1737, 1.442695
    %v1739 = vpow.pop %v1738
    %v1740 = vadd.f32 %v1739, 1.0
    %v1741 = vrcp.pop %v1740
    %v1742 = vmul.f32 %v1740, %v1741
    %v1743 = vsub.f32 1.0, %v1742
    %v1744 = vmul.f32 %v1741, %v1743
    %v1745 = vadd.f32 %v1741, %v1744
    %vm1746 = vweird.f32 %v1740
    %vm1747 = vweird.f32 %v1741
    %vm1748 = vmor %vm1746, %vm1747
    %v1749 = vsel %vm1748, %v1741, %v1745
    %v1750 = vand.u32 2147483647, %v1740
    %vm1751 = vcmp.eq.f32.partialorder %v1750, 8.507059e+37
    %v1752 = vand.u32 %v1740, 2147483648
    %v1753 = vor.u32 1.1754944e-38, %v1752
    %v1754 = vsel %vm1751, %v1753, %v1749
    %v1755 = vmul.f32 1.0, %v1754
    %v1756 = vxor.u32 %v1734, 2147483648
    %v1757 = vmul.f32 %v1756, 1.442695
    %v1758 = vpow.pop %v1757
    %v1759 = vadd.f32 %v1758, 1.0
    %v1760 = vrcp.pop %v1759
    %v1761 = vmul.f32 %v1759, %v1760
    %v1762 = vsub.f32 1.0, %v1761
    %v1763 = vmul.f32 %v1760, %v1762
    %v1764 = vadd.f32 %v1760, %v1763
    %vm1765 = vweird.f32 %v1759
    %vm1766 = vweird.f32 %v1760
    %vm1767 = vmor %vm1765, %vm1766
    %v1768 = vsel %vm1767, %v1760, %v1764
    %v1769 = vand.u32 2147483647, %v1759
    %vm1770 = vcmp.eq.f32.partialorder %v1769, 8.507059e+37
    %v1771 = vand.u32 %v1759, 2147483648
    %v1772 = vor.u32 1.1754944e-38, %v1771
    %v1773 = vsel %vm1770, %v1772, %v1768
    %v1774 = vmul.f32 1.0, %v1773
    %v1775 = vtanh.pop %v1735
    %v1776 = vxor.u32 %v1736, 2147483648
    %v1777 = vmul.f32 %v1776, 1.442695
    %v1778 = vpow.pop %v1777
    %v1779 = vadd.f32 %v1778, 1.0
    %v1780 = vrcp.pop %v1779
    %v1781 = vmul.f32 %v1779, %v1780
    %v1782 = vsub.f32 1.0, %v1781
    %v1783 = vmul.f32 %v1780, %v1782
    %v1784 = vadd.f32 %v1780, %v1783
    %vm1785 = vweird.f32 %v1779
    %vm1786 = vweird.f32 %v1780
    %vm1787 = vmor %vm1785, %vm1786
    %v1788 = vsel %vm1787, %v1780, %v1784
    %v1789 = vand.u32 2147483647, %v1779
    %vm1790 = vcmp.eq.f32.partialorder %v1789, 8.507059e+37
    %v1791 = vand.u32 %v1779, 2147483648
    %v1792 = vor.u32 1.1754944e-38, %v1791
    %v1793 = vsel %vm1790, %v1792, %v1788
    %v1794 = vmul.f32 1.0, %v1793
    %v1795 = vmul.f32 %v1774, %v1645
    %v1796 = vmul.f32 %v1755, %v1775
    %v1797 = vadd.f32 %v1795, %v1796
    %v1798 = vtanh.pop %v1797
    %v1799 = vmul.f32 %v1794, %v1798
    %s1800 = scalar_lea.vmem [#allocation2], 352
    %v1801 = vld [vmem:[%s1800] sm:$0xff]
    %v1802 = vld [vmem:[%s1800 + $0x8] sm:$0xff]
    %v1803 = vld [vmem:[%s1800 + $0x10] sm:$0xff]
    %v1804 = vld [vmem:[%s1800 + $0x18] sm:$0xff]
    %1805 = vmatpush.msra.mxu0 %v125
    %1806 = vmatpush.msra.mxu0 %v121
    %1807 = vmatpush.msra.mxu0 %v117
    %1808 = vmatpush.msra.mxu0 %v113
    %1809 = vmatpush.msra.mxu0 %v109
    %1810 = vmatpush.msra.mxu0 %v105
    %1811 = vmatpush.msra.mxu0 %v101
    %1812 = vmatpush.msra.mxu0 %v97
    %1813 = vmatpush.msra.mxu0 %v93
    %1814 = vmatpush.msra.mxu0 %v89
    %1815 = vmatpush.msra.mxu0 %v85
    %1816 = vmatpush.msra.mxu0 %v81
    %1817 = vmatpush.msra.mxu0 %v77
    %1818 = vmatpush.msra.mxu0 %v73
    %1819 = vmatpush.msra.mxu0 %v69
    %1820 = vmatpush.msra.mxu0 %v65
    %1821 = vmatmul.f32.gmra.mxu0 %v1799
    %v1822 = vpop.f32.mrf.mxu0
    %v1823 = vadd.f32 0.0, %v1822
    %1824 = vdwg.mxu0
    %1825 = vmatpush.msra.mxu0 %v126
    %1826 = vmatpush.msra.mxu0 %v122
    %1827 = vmatpush.msra.mxu0 %v118
    %1828 = vmatpush.msra.mxu0 %v114
    %1829 = vmatpush.msra.mxu0 %v110
    %1830 = vmatpush.msra.mxu0 %v106
    %1831 = vmatpush.msra.mxu0 %v102
    %1832 = vmatpush.msra.mxu0 %v98
    %1833 = vmatpush.msra.mxu0 %v94
    %1834 = vmatpush.msra.mxu0 %v90
    %1835 = vmatpush.msra.mxu0 %v86
    %1836 = vmatpush.msra.mxu0 %v82
    %1837 = vmatpush.msra.mxu0 %v78
    %1838 = vmatpush.msra.mxu0 %v74
    %1839 = vmatpush.msra.mxu0 %v70
    %1840 = vmatpush.msra.mxu0 %v66
    %1841 = vmatmul.f32.gmra.mxu0 %v1799
    %v1842 = vpop.f32.mrf.mxu0
    %v1843 = vadd.f32 0.0, %v1842
    %1844 = vdwg.mxu0
    %1845 = vmatpush.msra.mxu0 %v127
    %1846 = vmatpush.msra.mxu0 %v123
    %1847 = vmatpush.msra.mxu0 %v119
    %1848 = vmatpush.msra.mxu0 %v115
    %1849 = vmatpush.msra.mxu0 %v111
    %1850 = vmatpush.msra.mxu0 %v107
    %1851 = vmatpush.msra.mxu0 %v103
    %1852 = vmatpush.msra.mxu0 %v99
    %1853 = vmatpush.msra.mxu0 %v95
    %1854 = vmatpush.msra.mxu0 %v91
    %1855 = vmatpush.msra.mxu0 %v87
    %1856 = vmatpush.msra.mxu0 %v83
    %1857 = vmatpush.msra.mxu0 %v79
    %1858 = vmatpush.msra.mxu0 %v75
    %1859 = vmatpush.msra.mxu0 %v71
    %1860 = vmatpush.msra.mxu0 %v67
    %1861 = vmatmul.f32.gmra.mxu0 %v1799
    %v1862 = vpop.f32.mrf.mxu0
    %v1863 = vadd.f32 0.0, %v1862
    %1864 = vdwg.mxu0
    %1865 = vmatpush.msra.mxu0 %v128
    %1866 = vmatpush.msra.mxu0 %v124
    %1867 = vmatpush.msra.mxu0 %v120
    %1868 = vmatpush.msra.mxu0 %v116
    %1869 = vmatpush.msra.mxu0 %v112
    %1870 = vmatpush.msra.mxu0 %v108
    %1871 = vmatpush.msra.mxu0 %v104
    %1872 = vmatpush.msra.mxu0 %v100
    %1873 = vmatpush.msra.mxu0 %v96
    %1874 = vmatpush.msra.mxu0 %v92
    %1875 = vmatpush.msra.mxu0 %v88
    %1876 = vmatpush.msra.mxu0 %v84
    %1877 = vmatpush.msra.mxu0 %v80
    %1878 = vmatpush.msra.mxu0 %v76
    %1879 = vmatpush.msra.mxu0 %v72
    %1880 = vmatpush.msra.mxu0 %v68
    %1881 = vmatmul.f32.gmra.mxu0 %v1799
    %v1882 = vpop.f32.mrf.mxu0
    %v1883 = vadd.f32 0.0, %v1882
    %1884 = vdwg.mxu0
    %v1885 = vadd.f32 %v1801, %v1823
    %v1886 = vadd.f32 %v1802, %v1843
    %v1887 = vadd.f32 %v1803, %v1863
    %v1888 = vadd.f32 %v1804, %v1883
    %v1889 = vxor.u32 %v1885, 2147483648
    %v1890 = vmul.f32 %v1889, 1.442695
    %v1891 = vpow.pop %v1890
    %v1892 = vadd.f32 %v1891, 1.0
    %v1893 = vrcp.pop %v1892
    %v1894 = vmul.f32 %v1892, %v1893
    %v1895 = vsub.f32 1.0, %v1894
    %v1896 = vmul.f32 %v1893, %v1895
    %v1897 = vadd.f32 %v1893, %v1896
    %vm1898 = vweird.f32 %v1892
    %vm1899 = vweird.f32 %v1893
    %vm1900 = vmor %vm1898, %vm1899
    %v1901 = vsel %vm1900, %v1893, %v1897
    %v1902 = vand.u32 2147483647, %v1892
    %vm1903 = vcmp.eq.f32.partialorder %v1902, 8.507059e+37
    %v1904 = vand.u32 %v1892, 2147483648
    %v1905 = vor.u32 1.1754944e-38, %v1904
    %v1906 = vsel %vm1903, %v1905, %v1901
    %v1907 = vmul.f32 1.0, %v1906
    %v1908 = vxor.u32 %v1886, 2147483648
    %v1909 = vmul.f32 %v1908, 1.442695
    %v1910 = vpow.pop %v1909
    %v1911 = vadd.f32 %v1910, 1.0
    %v1912 = vrcp.pop %v1911
    %v1913 = vmul.f32 %v1911, %v1912
    %v1914 = vsub.f32 1.0, %v1913
    %v1915 = vmul.f32 %v1912, %v1914
    %v1916 = vadd.f32 %v1912, %v1915
    %vm1917 = vweird.f32 %v1911
    %vm1918 = vweird.f32 %v1912
    %vm1919 = vmor %vm1917, %vm1918
    %v1920 = vsel %vm1919, %v1912, %v1916
    %v1921 = vand.u32 2147483647, %v1911
    %vm1922 = vcmp.eq.f32.partialorder %v1921, 8.507059e+37
    %v1923 = vand.u32 %v1911, 2147483648
    %v1924 = vor.u32 1.1754944e-38, %v1923
    %v1925 = vsel %vm1922, %v1924, %v1920
    %v1926 = vmul.f32 1.0, %v1925
    %v1927 = vtanh.pop %v1887
    %v1928 = vxor.u32 %v1888, 2147483648
    %v1929 = vmul.f32 %v1928, 1.442695
    %v1930 = vpow.pop %v1929
    %v1931 = vadd.f32 %v1930, 1.0
    %v1932 = vrcp.pop %v1931
    %v1933 = vmul.f32 %v1931, %v1932
    %v1934 = vsub.f32 1.0, %v1933
    %v1935 = vmul.f32 %v1932, %v1934
    %v1936 = vadd.f32 %v1932, %v1935
    %vm1937 = vweird.f32 %v1931
    %vm1938 = vweird.f32 %v1932
    %vm1939 = vmor %vm1937, %vm1938
    %v1940 = vsel %vm1939, %v1932, %v1936
    %v1941 = vand.u32 2147483647, %v1931
    %vm1942 = vcmp.eq.f32.partialorder %v1941, 8.507059e+37
    %v1943 = vand.u32 %v1931, 2147483648
    %v1944 = vor.u32 1.1754944e-38, %v1943
    %v1945 = vsel %vm1942, %v1944, %v1940
    %v1946 = vmul.f32 1.0, %v1945
    %v1947 = vmul.f32 %v1926, %v1797
    %v1948 = vmul.f32 %v1907, %v1927
    %v1949 = vadd.f32 %v1947, %v1948
    %v1950 = vtanh.pop %v1949
    %v1951 = vmul.f32 %v1946, %v1950
    %s1952 = scalar_lea.vmem [#allocation2], 384
    %v1953 = vld [vmem:[%s1952] sm:$0xff]
    %v1954 = vld [vmem:[%s1952 + $0x8] sm:$0xff]
    %v1955 = vld [vmem:[%s1952 + $0x10] sm:$0xff]
    %v1956 = vld [vmem:[%s1952 + $0x18] sm:$0xff]
    %1957 = vmatpush.msra.mxu0 %v125
    %1958 = vmatpush.msra.mxu0 %v121
    %1959 = vmatpush.msra.mxu0 %v117
    %1960 = vmatpush.msra.mxu0 %v113
    %1961 = vmatpush.msra.mxu0 %v109
    %1962 = vmatpush.msra.mxu0 %v105
    %1963 = vmatpush.msra.mxu0 %v101
    %1964 = vmatpush.msra.mxu0 %v97
    %1965 = vmatpush.msra.mxu0 %v93
    %1966 = vmatpush.msra.mxu0 %v89
    %1967 = vmatpush.msra.mxu0 %v85
    %1968 = vmatpush.msra.mxu0 %v81
    %1969 = vmatpush.msra.mxu0 %v77
    %1970 = vmatpush.msra.mxu0 %v73
    %1971 = vmatpush.msra.mxu0 %v69
    %1972 = vmatpush.msra.mxu0 %v65
    %1973 = vmatmul.f32.gmra.mxu0 %v1951
    %v1974 = vpop.f32.mrf.mxu0
    %v1975 = vadd.f32 0.0, %v1974
    %1976 = vdwg.mxu0
    %1977 = vmatpush.msra.mxu0 %v126
    %1978 = vmatpush.msra.mxu0 %v122
    %1979 = vmatpush.msra.mxu0 %v118
    %1980 = vmatpush.msra.mxu0 %v114
    %1981 = vmatpush.msra.mxu0 %v110
    %1982 = vmatpush.msra.mxu0 %v106
    %1983 = vmatpush.msra.mxu0 %v102
    %1984 = vmatpush.msra.mxu0 %v98
    %1985 = vmatpush.msra.mxu0 %v94
    %1986 = vmatpush.msra.mxu0 %v90
    %1987 = vmatpush.msra.mxu0 %v86
    %1988 = vmatpush.msra.mxu0 %v82
    %1989 = vmatpush.msra.mxu0 %v78
    %1990 = vmatpush.msra.mxu0 %v74
    %1991 = vmatpush.msra.mxu0 %v70
    %1992 = vmatpush.msra.mxu0 %v66
    %1993 = vmatmul.f32.gmra.mxu0 %v1951
    %v1994 = vpop.f32.mrf.mxu0
    %v1995 = vadd.f32 0.0, %v1994
    %1996 = vdwg.mxu0
    %1997 = vmatpush.msra.mxu0 %v127
    %1998 = vmatpush.msra.mxu0 %v123
    %1999 = vmatpush.msra.mxu0 %v119
    %2000 = vmatpush.msra.mxu0 %v115
    %2001 = vmatpush.msra.mxu0 %v111
    %2002 = vmatpush.msra.mxu0 %v107
    %2003 = vmatpush.msra.mxu0 %v103
    %2004 = vmatpush.msra.mxu0 %v99
    %2005 = vmatpush.msra.mxu0 %v95
    %2006 = vmatpush.msra.mxu0 %v91
    %2007 = vmatpush.msra.mxu0 %v87
    %2008 = vmatpush.msra.mxu0 %v83
    %2009 = vmatpush.msra.mxu0 %v79
    %2010 = vmatpush.msra.mxu0 %v75
    %2011 = vmatpush.msra.mxu0 %v71
    %2012 = vmatpush.msra.mxu0 %v67
    %2013 = vmatmul.f32.gmra.mxu0 %v1951
    %v2014 = vpop.f32.mrf.mxu0
    %v2015 = vadd.f32 0.0, %v2014
    %2016 = vdwg.mxu0
    %2017 = vmatpush.msra.mxu0 %v128
    %2018 = vmatpush.msra.mxu0 %v124
    %2019 = vmatpush.msra.mxu0 %v120
    %2020 = vmatpush.msra.mxu0 %v116
    %2021 = vmatpush.msra.mxu0 %v112
    %2022 = vmatpush.msra.mxu0 %v108
    %2023 = vmatpush.msra.mxu0 %v104
    %2024 = vmatpush.msra.mxu0 %v100
    %2025 = vmatpush.msra.mxu0 %v96
    %2026 = vmatpush.msra.mxu0 %v92
    %2027 = vmatpush.msra.mxu0 %v88
    %2028 = vmatpush.msra.mxu0 %v84
    %2029 = vmatpush.msra.mxu0 %v80
    %2030 = vmatpush.msra.mxu0 %v76
    %2031 = vmatpush.msra.mxu0 %v72
    %2032 = vmatpush.msra.mxu0 %v68
    %2033 = vmatmul.f32.gmra.mxu0 %v1951
    %v2034 = vpop.f32.mrf.mxu0
    %v2035 = vadd.f32 0.0, %v2034
    %2036 = vdwg.mxu0
    %v2037 = vadd.f32 %v1953, %v1975
    %v2038 = vadd.f32 %v1954, %v1995
    %v2039 = vadd.f32 %v1955, %v2015
    %v2040 = vadd.f32 %v1956, %v2035
    %v2041 = vxor.u32 %v2037, 2147483648
    %v2042 = vmul.f32 %v2041, 1.442695
    %v2043 = vpow.pop %v2042
    %v2044 = vadd.f32 %v2043, 1.0
    %v2045 = vrcp.pop %v2044
    %v2046 = vmul.f32 %v2044, %v2045
    %v2047 = vsub.f32 1.0, %v2046
    %v2048 = vmul.f32 %v2045, %v2047
    %v2049 = vadd.f32 %v2045, %v2048
    %vm2050 = vweird.f32 %v2044
    %vm2051 = vweird.f32 %v2045
    %vm2052 = vmor %vm2050, %vm2051
    %v2053 = vsel %vm2052, %v2045, %v2049
    %v2054 = vand.u32 2147483647, %v2044
    %vm2055 = vcmp.eq.f32.partialorder %v2054, 8.507059e+37
    %v2056 = vand.u32 %v2044, 2147483648
    %v2057 = vor.u32 1.1754944e-38, %v2056
    %v2058 = vsel %vm2055, %v2057, %v2053
    %v2059 = vmul.f32 1.0, %v2058
    %v2060 = vxor.u32 %v2038, 2147483648
    %v2061 = vmul.f32 %v2060, 1.442695
    %v2062 = vpow.pop %v2061
    %v2063 = vadd.f32 %v2062, 1.0
    %v2064 = vrcp.pop %v2063
    %v2065 = vmul.f32 %v2063, %v2064
    %v2066 = vsub.f32 1.0, %v2065
    %v2067 = vmul.f32 %v2064, %v2066
    %v2068 = vadd.f32 %v2064, %v2067
    %vm2069 = vweird.f32 %v2063
    %vm2070 = vweird.f32 %v2064
    %vm2071 = vmor %vm2069, %vm2070
    %v2072 = vsel %vm2071, %v2064, %v2068
    %v2073 = vand.u32 2147483647, %v2063
    %vm2074 = vcmp.eq.f32.partialorder %v2073, 8.507059e+37
    %v2075 = vand.u32 %v2063, 2147483648
    %v2076 = vor.u32 1.1754944e-38, %v2075
    %v2077 = vsel %vm2074, %v2076, %v2072
    %v2078 = vmul.f32 1.0, %v2077
    %v2079 = vtanh.pop %v2039
    %v2080 = vxor.u32 %v2040, 2147483648
    %v2081 = vmul.f32 %v2080, 1.442695
    %v2082 = vpow.pop %v2081
    %v2083 = vadd.f32 %v2082, 1.0
    %v2084 = vrcp.pop %v2083
    %v2085 = vmul.f32 %v2083, %v2084
    %v2086 = vsub.f32 1.0, %v2085
    %v2087 = vmul.f32 %v2084, %v2086
    %v2088 = vadd.f32 %v2084, %v2087
    %vm2089 = vweird.f32 %v2083
    %vm2090 = vweird.f32 %v2084
    %vm2091 = vmor %vm2089, %vm2090
    %v2092 = vsel %vm2091, %v2084, %v2088
    %v2093 = vand.u32 2147483647, %v2083
    %vm2094 = vcmp.eq.f32.partialorder %v2093, 8.507059e+37
    %v2095 = vand.u32 %v2083, 2147483648
    %v2096 = vor.u32 1.1754944e-38, %v2095
    %v2097 = vsel %vm2094, %v2096, %v2092
    %v2098 = vmul.f32 1.0, %v2097
    %v2099 = vmul.f32 %v2078, %v1949
    %v2100 = vmul.f32 %v2059, %v2079
    %v2101 = vadd.f32 %v2099, %v2100
    %v2102 = vtanh.pop %v2101
    %v2103 = vmul.f32 %v2098, %v2102
    %s2104 = scalar_lea.vmem [#allocation2], 416
    %v2105 = vld [vmem:[%s2104] sm:$0xff]
    %v2106 = vld [vmem:[%s2104 + $0x8] sm:$0xff]
    %v2107 = vld [vmem:[%s2104 + $0x10] sm:$0xff]
    %v2108 = vld [vmem:[%s2104 + $0x18] sm:$0xff]
    %2109 = vmatpush.msra.mxu0 %v125
    %2110 = vmatpush.msra.mxu0 %v121
    %2111 = vmatpush.msra.mxu0 %v117
    %2112 = vmatpush.msra.mxu0 %v113
    %2113 = vmatpush.msra.mxu0 %v109
    %2114 = vmatpush.msra.mxu0 %v105
    %2115 = vmatpush.msra.mxu0 %v101
    %2116 = vmatpush.msra.mxu0 %v97
    %2117 = vmatpush.msra.mxu0 %v93
    %2118 = vmatpush.msra.mxu0 %v89
    %2119 = vmatpush.msra.mxu0 %v85
    %2120 = vmatpush.msra.mxu0 %v81
    %2121 = vmatpush.msra.mxu0 %v77
    %2122 = vmatpush.msra.mxu0 %v73
    %2123 = vmatpush.msra.mxu0 %v69
    %2124 = vmatpush.msra.mxu0 %v65
    %2125 = vmatmul.f32.gmra.mxu0 %v2103
    %v2126 = vpop.f32.mrf.mxu0
    %v2127 = vadd.f32 0.0, %v2126
    %2128 = vdwg.mxu0
    %2129 = vmatpush.msra.mxu0 %v126
    %2130 = vmatpush.msra.mxu0 %v122
    %2131 = vmatpush.msra.mxu0 %v118
    %2132 = vmatpush.msra.mxu0 %v114
    %2133 = vmatpush.msra.mxu0 %v110
    %2134 = vmatpush.msra.mxu0 %v106
    %2135 = vmatpush.msra.mxu0 %v102
    %2136 = vmatpush.msra.mxu0 %v98
    %2137 = vmatpush.msra.mxu0 %v94
    %2138 = vmatpush.msra.mxu0 %v90
    %2139 = vmatpush.msra.mxu0 %v86
    %2140 = vmatpush.msra.mxu0 %v82
    %2141 = vmatpush.msra.mxu0 %v78
    %2142 = vmatpush.msra.mxu0 %v74
    %2143 = vmatpush.msra.mxu0 %v70
    %2144 = vmatpush.msra.mxu0 %v66
    %2145 = vmatmul.f32.gmra.mxu0 %v2103
    %v2146 = vpop.f32.mrf.mxu0
    %v2147 = vadd.f32 0.0, %v2146
    %2148 = vdwg.mxu0
    %2149 = vmatpush.msra.mxu0 %v127
    %2150 = vmatpush.msra.mxu0 %v123
    %2151 = vmatpush.msra.mxu0 %v119
    %2152 = vmatpush.msra.mxu0 %v115
    %2153 = vmatpush.msra.mxu0 %v111
    %2154 = vmatpush.msra.mxu0 %v107
    %2155 = vmatpush.msra.mxu0 %v103
    %2156 = vmatpush.msra.mxu0 %v99
    %2157 = vmatpush.msra.mxu0 %v95
    %2158 = vmatpush.msra.mxu0 %v91
    %2159 = vmatpush.msra.mxu0 %v87
    %2160 = vmatpush.msra.mxu0 %v83
    %2161 = vmatpush.msra.mxu0 %v79
    %2162 = vmatpush.msra.mxu0 %v75
    %2163 = vmatpush.msra.mxu0 %v71
    %2164 = vmatpush.msra.mxu0 %v67
    %2165 = vmatmul.f32.gmra.mxu0 %v2103
    %v2166 = vpop.f32.mrf.mxu0
    %v2167 = vadd.f32 0.0, %v2166
    %2168 = vdwg.mxu0
    %2169 = vmatpush.msra.mxu0 %v128
    %2170 = vmatpush.msra.mxu0 %v124
    %2171 = vmatpush.msra.mxu0 %v120
    %2172 = vmatpush.msra.mxu0 %v116
    %2173 = vmatpush.msra.mxu0 %v112
    %2174 = vmatpush.msra.mxu0 %v108
    %2175 = vmatpush.msra.mxu0 %v104
    %2176 = vmatpush.msra.mxu0 %v100
    %2177 = vmatpush.msra.mxu0 %v96
    %2178 = vmatpush.msra.mxu0 %v92
    %2179 = vmatpush.msra.mxu0 %v88
    %2180 = vmatpush.msra.mxu0 %v84
    %2181 = vmatpush.msra.mxu0 %v80
    %2182 = vmatpush.msra.mxu0 %v76
    %2183 = vmatpush.msra.mxu0 %v72
    %2184 = vmatpush.msra.mxu0 %v68
    %2185 = vmatmul.f32.gmra.mxu0 %v2103
    %v2186 = vpop.f32.mrf.mxu0
    %v2187 = vadd.f32 0.0, %v2186
    %2188 = vdwg.mxu0
    %v2189 = vadd.f32 %v2105, %v2127
    %v2190 = vadd.f32 %v2106, %v2147
    %v2191 = vadd.f32 %v2107, %v2167
    %v2192 = vadd.f32 %v2108, %v2187
    %v2193 = vxor.u32 %v2189, 2147483648
    %v2194 = vmul.f32 %v2193, 1.442695
    %v2195 = vpow.pop %v2194
    %v2196 = vadd.f32 %v2195, 1.0
    %v2197 = vrcp.pop %v2196
    %v2198 = vmul.f32 %v2196, %v2197
    %v2199 = vsub.f32 1.0, %v2198
    %v2200 = vmul.f32 %v2197, %v2199
    %v2201 = vadd.f32 %v2197, %v2200
    %vm2202 = vweird.f32 %v2196
    %vm2203 = vweird.f32 %v2197
    %vm2204 = vmor %vm2202, %vm2203
    %v2205 = vsel %vm2204, %v2197, %v2201
    %v2206 = vand.u32 2147483647, %v2196
    %vm2207 = vcmp.eq.f32.partialorder %v2206, 8.507059e+37
    %v2208 = vand.u32 %v2196, 2147483648
    %v2209 = vor.u32 1.1754944e-38, %v2208
    %v2210 = vsel %vm2207, %v2209, %v2205
    %v2211 = vmul.f32 1.0, %v2210
    %v2212 = vxor.u32 %v2190, 2147483648
    %v2213 = vmul.f32 %v2212, 1.442695
    %v2214 = vpow.pop %v2213
    %v2215 = vadd.f32 %v2214, 1.0
    %v2216 = vrcp.pop %v2215
    %v2217 = vmul.f32 %v2215, %v2216
    %v2218 = vsub.f32 1.0, %v2217
    %v2219 = vmul.f32 %v2216, %v2218
    %v2220 = vadd.f32 %v2216, %v2219
    %vm2221 = vweird.f32 %v2215
    %vm2222 = vweird.f32 %v2216
    %vm2223 = vmor %vm2221, %vm2222
    %v2224 = vsel %vm2223, %v2216, %v2220
    %v2225 = vand.u32 2147483647, %v2215
    %vm2226 = vcmp.eq.f32.partialorder %v2225, 8.507059e+37
    %v2227 = vand.u32 %v2215, 2147483648
    %v2228 = vor.u32 1.1754944e-38, %v2227
    %v2229 = vsel %vm2226, %v2228, %v2224
    %v2230 = vmul.f32 1.0, %v2229
    %v2231 = vtanh.pop %v2191
    %v2232 = vxor.u32 %v2192, 2147483648
    %v2233 = vmul.f32 %v2232, 1.442695
    %v2234 = vpow.pop %v2233
    %v2235 = vadd.f32 %v2234, 1.0
    %v2236 = vrcp.pop %v2235
    %v2237 = vmul.f32 %v2235, %v2236
    %v2238 = vsub.f32 1.0, %v2237
    %v2239 = vmul.f32 %v2236, %v2238
    %v2240 = vadd.f32 %v2236, %v2239
    %vm2241 = vweird.f32 %v2235
    %vm2242 = vweird.f32 %v2236
    %vm2243 = vmor %vm2241, %vm2242
    %v2244 = vsel %vm2243, %v2236, %v2240
    %v2245 = vand.u32 2147483647, %v2235
    %vm2246 = vcmp.eq.f32.partialorder %v2245, 8.507059e+37
    %v2247 = vand.u32 %v2235, 2147483648
    %v2248 = vor.u32 1.1754944e-38, %v2247
    %v2249 = vsel %vm2246, %v2248, %v2244
    %v2250 = vmul.f32 1.0, %v2249
    %v2251 = vmul.f32 %v2230, %v2101
    %v2252 = vmul.f32 %v2211, %v2231
    %v2253 = vadd.f32 %v2251, %v2252
    %v2254 = vtanh.pop %v2253
    %v2255 = vmul.f32 %v2250, %v2254
    %s2256 = scalar_lea.vmem [#allocation2], 448
    %v2257 = vld [vmem:[%s2256] sm:$0xff]
    %v2258 = vld [vmem:[%s2256 + $0x8] sm:$0xff]
    %v2259 = vld [vmem:[%s2256 + $0x10] sm:$0xff]
    %v2260 = vld [vmem:[%s2256 + $0x18] sm:$0xff]
    %2261 = vmatpush.msra.mxu0 %v125
    %2262 = vmatpush.msra.mxu0 %v121
    %2263 = vmatpush.msra.mxu0 %v117
    %2264 = vmatpush.msra.mxu0 %v113
    %2265 = vmatpush.msra.mxu0 %v109
    %2266 = vmatpush.msra.mxu0 %v105
    %2267 = vmatpush.msra.mxu0 %v101
    %2268 = vmatpush.msra.mxu0 %v97
    %2269 = vmatpush.msra.mxu0 %v93
    %2270 = vmatpush.msra.mxu0 %v89
    %2271 = vmatpush.msra.mxu0 %v85
    %2272 = vmatpush.msra.mxu0 %v81
    %2273 = vmatpush.msra.mxu0 %v77
    %2274 = vmatpush.msra.mxu0 %v73
    %2275 = vmatpush.msra.mxu0 %v69
    %2276 = vmatpush.msra.mxu0 %v65
    %2277 = vmatmul.f32.gmra.mxu0 %v2255
    %v2278 = vpop.f32.mrf.mxu0
    %v2279 = vadd.f32 0.0, %v2278
    %2280 = vdwg.mxu0
    %2281 = vmatpush.msra.mxu0 %v126
    %2282 = vmatpush.msra.mxu0 %v122
    %2283 = vmatpush.msra.mxu0 %v118
    %2284 = vmatpush.msra.mxu0 %v114
    %2285 = vmatpush.msra.mxu0 %v110
    %2286 = vmatpush.msra.mxu0 %v106
    %2287 = vmatpush.msra.mxu0 %v102
    %2288 = vmatpush.msra.mxu0 %v98
    %2289 = vmatpush.msra.mxu0 %v94
    %2290 = vmatpush.msra.mxu0 %v90
    %2291 = vmatpush.msra.mxu0 %v86
    %2292 = vmatpush.msra.mxu0 %v82
    %2293 = vmatpush.msra.mxu0 %v78
    %2294 = vmatpush.msra.mxu0 %v74
    %2295 = vmatpush.msra.mxu0 %v70
    %2296 = vmatpush.msra.mxu0 %v66
    %2297 = vmatmul.f32.gmra.mxu0 %v2255
    %v2298 = vpop.f32.mrf.mxu0
    %v2299 = vadd.f32 0.0, %v2298
    %2300 = vdwg.mxu0
    %2301 = vmatpush.msra.mxu0 %v127
    %2302 = vmatpush.msra.mxu0 %v123
    %2303 = vmatpush.msra.mxu0 %v119
    %2304 = vmatpush.msra.mxu0 %v115
    %2305 = vmatpush.msra.mxu0 %v111
    %2306 = vmatpush.msra.mxu0 %v107
    %2307 = vmatpush.msra.mxu0 %v103
    %2308 = vmatpush.msra.mxu0 %v99
    %2309 = vmatpush.msra.mxu0 %v95
    %2310 = vmatpush.msra.mxu0 %v91
    %2311 = vmatpush.msra.mxu0 %v87
    %2312 = vmatpush.msra.mxu0 %v83
    %2313 = vmatpush.msra.mxu0 %v79
    %2314 = vmatpush.msra.mxu0 %v75
    %2315 = vmatpush.msra.mxu0 %v71
    %2316 = vmatpush.msra.mxu0 %v67
    %2317 = vmatmul.f32.gmra.mxu0 %v2255
    %v2318 = vpop.f32.mrf.mxu0
    %v2319 = vadd.f32 0.0, %v2318
    %2320 = vdwg.mxu0
    %2321 = vmatpush.msra.mxu0 %v128
    %2322 = vmatpush.msra.mxu0 %v124
    %2323 = vmatpush.msra.mxu0 %v120
    %2324 = vmatpush.msra.mxu0 %v116
    %2325 = vmatpush.msra.mxu0 %v112
    %2326 = vmatpush.msra.mxu0 %v108
    %2327 = vmatpush.msra.mxu0 %v104
    %2328 = vmatpush.msra.mxu0 %v100
    %2329 = vmatpush.msra.mxu0 %v96
    %2330 = vmatpush.msra.mxu0 %v92
    %2331 = vmatpush.msra.mxu0 %v88
    %2332 = vmatpush.msra.mxu0 %v84
    %2333 = vmatpush.msra.mxu0 %v80
    %2334 = vmatpush.msra.mxu0 %v76
    %2335 = vmatpush.msra.mxu0 %v72
    %2336 = vmatpush.msra.mxu0 %v68
    %2337 = vmatmul.f32.gmra.mxu0 %v2255
    %v2338 = vpop.f32.mrf.mxu0
    %v2339 = vadd.f32 0.0, %v2338
    %2340 = vdwg.mxu0
    %v2341 = vadd.f32 %v2257, %v2279
    %v2342 = vadd.f32 %v2258, %v2299
    %v2343 = vadd.f32 %v2259, %v2319
    %v2344 = vadd.f32 %v2260, %v2339
    %v2345 = vxor.u32 %v2341, 2147483648
    %v2346 = vmul.f32 %v2345, 1.442695
    %v2347 = vpow.pop %v2346
    %v2348 = vadd.f32 %v2347, 1.0
    %v2349 = vrcp.pop %v2348
    %v2350 = vmul.f32 %v2348, %v2349
    %v2351 = vsub.f32 1.0, %v2350
    %v2352 = vmul.f32 %v2349, %v2351
    %v2353 = vadd.f32 %v2349, %v2352
    %vm2354 = vweird.f32 %v2348
    %vm2355 = vweird.f32 %v2349
    %vm2356 = vmor %vm2354, %vm2355
    %v2357 = vsel %vm2356, %v2349, %v2353
    %v2358 = vand.u32 2147483647, %v2348
    %vm2359 = vcmp.eq.f32.partialorder %v2358, 8.507059e+37
    %v2360 = vand.u32 %v2348, 2147483648
    %v2361 = vor.u32 1.1754944e-38, %v2360
    %v2362 = vsel %vm2359, %v2361, %v2357
    %v2363 = vmul.f32 1.0, %v2362
    %v2364 = vxor.u32 %v2342, 2147483648
    %v2365 = vmul.f32 %v2364, 1.442695
    %v2366 = vpow.pop %v2365
    %v2367 = vadd.f32 %v2366, 1.0
    %v2368 = vrcp.pop %v2367
    %v2369 = vmul.f32 %v2367, %v2368
    %v2370 = vsub.f32 1.0, %v2369
    %v2371 = vmul.f32 %v2368, %v2370
    %v2372 = vadd.f32 %v2368, %v2371
    %vm2373 = vweird.f32 %v2367
    %vm2374 = vweird.f32 %v2368
    %vm2375 = vmor %vm2373, %vm2374
    %v2376 = vsel %vm2375, %v2368, %v2372
    %v2377 = vand.u32 2147483647, %v2367
    %vm2378 = vcmp.eq.f32.partialorder %v2377, 8.507059e+37
    %v2379 = vand.u32 %v2367, 2147483648
    %v2380 = vor.u32 1.1754944e-38, %v2379
    %v2381 = vsel %vm2378, %v2380, %v2376
    %v2382 = vmul.f32 1.0, %v2381
    %v2383 = vtanh.pop %v2343
    %v2384 = vxor.u32 %v2344, 2147483648
    %v2385 = vmul.f32 %v2384, 1.442695
    %v2386 = vpow.pop %v2385
    %v2387 = vadd.f32 %v2386, 1.0
    %v2388 = vrcp.pop %v2387
    %v2389 = vmul.f32 %v2387, %v2388
    %v2390 = vsub.f32 1.0, %v2389
    %v2391 = vmul.f32 %v2388, %v2390
    %v2392 = vadd.f32 %v2388, %v2391
    %vm2393 = vweird.f32 %v2387
    %vm2394 = vweird.f32 %v2388
    %vm2395 = vmor %vm2393, %vm2394
    %v2396 = vsel %vm2395, %v2388, %v2392
    %v2397 = vand.u32 2147483647, %v2387
    %vm2398 = vcmp.eq.f32.partialorder %v2397, 8.507059e+37
    %v2399 = vand.u32 %v2387, 2147483648
    %v2400 = vor.u32 1.1754944e-38, %v2399
    %v2401 = vsel %vm2398, %v2400, %v2396
    %v2402 = vmul.f32 1.0, %v2401
    %v2403 = vmul.f32 %v2382, %v2253
    %v2404 = vmul.f32 %v2363, %v2383
    %v2405 = vadd.f32 %v2403, %v2404
    %v2406 = vtanh.pop %v2405
    %v2407 = vmul.f32 %v2402, %v2406
    %s2408 = scalar_lea.vmem [#allocation2], 480
    %v2409 = vld [vmem:[%s2408] sm:$0xff]
    %v2410 = vld [vmem:[%s2408 + $0x8] sm:$0xff]
    %v2411 = vld [vmem:[%s2408 + $0x10] sm:$0xff]
    %v2412 = vld [vmem:[%s2408 + $0x18] sm:$0xff]
    %2413 = vmatpush.msra.mxu0 %v125
    %2414 = vmatpush.msra.mxu0 %v121
    %2415 = vmatpush.msra.mxu0 %v117
    %2416 = vmatpush.msra.mxu0 %v113
    %2417 = vmatpush.msra.mxu0 %v109
    %2418 = vmatpush.msra.mxu0 %v105
    %2419 = vmatpush.msra.mxu0 %v101
    %2420 = vmatpush.msra.mxu0 %v97
    %2421 = vmatpush.msra.mxu0 %v93
    %2422 = vmatpush.msra.mxu0 %v89
    %2423 = vmatpush.msra.mxu0 %v85
    %2424 = vmatpush.msra.mxu0 %v81
    %2425 = vmatpush.msra.mxu0 %v77
    %2426 = vmatpush.msra.mxu0 %v73
    %2427 = vmatpush.msra.mxu0 %v69
    %2428 = vmatpush.msra.mxu0 %v65
    %2429 = vmatmul.f32.gmra.mxu0 %v2407
    %v2430 = vpop.f32.mrf.mxu0
    %v2431 = vadd.f32 0.0, %v2430
    %2432 = vdwg.mxu0
    %2433 = vmatpush.msra.mxu0 %v126
    %2434 = vmatpush.msra.mxu0 %v122
    %2435 = vmatpush.msra.mxu0 %v118
    %2436 = vmatpush.msra.mxu0 %v114
    %2437 = vmatpush.msra.mxu0 %v110
    %2438 = vmatpush.msra.mxu0 %v106
    %2439 = vmatpush.msra.mxu0 %v102
    %2440 = vmatpush.msra.mxu0 %v98
    %2441 = vmatpush.msra.mxu0 %v94
    %2442 = vmatpush.msra.mxu0 %v90
    %2443 = vmatpush.msra.mxu0 %v86
    %2444 = vmatpush.msra.mxu0 %v82
    %2445 = vmatpush.msra.mxu0 %v78
    %2446 = vmatpush.msra.mxu0 %v74
    %2447 = vmatpush.msra.mxu0 %v70
    %2448 = vmatpush.msra.mxu0 %v66
    %2449 = vmatmul.f32.gmra.mxu0 %v2407
    %v2450 = vpop.f32.mrf.mxu0
    %v2451 = vadd.f32 0.0, %v2450
    %2452 = vdwg.mxu0
    %2453 = vmatpush.msra.mxu0 %v127
    %2454 = vmatpush.msra.mxu0 %v123
    %2455 = vmatpush.msra.mxu0 %v119
    %2456 = vmatpush.msra.mxu0 %v115
    %2457 = vmatpush.msra.mxu0 %v111
    %2458 = vmatpush.msra.mxu0 %v107
    %2459 = vmatpush.msra.mxu0 %v103
    %2460 = vmatpush.msra.mxu0 %v99
    %2461 = vmatpush.msra.mxu0 %v95
    %2462 = vmatpush.msra.mxu0 %v91
    %2463 = vmatpush.msra.mxu0 %v87
    %2464 = vmatpush.msra.mxu0 %v83
    %2465 = vmatpush.msra.mxu0 %v79
    %2466 = vmatpush.msra.mxu0 %v75
    %2467 = vmatpush.msra.mxu0 %v71
    %2468 = vmatpush.msra.mxu0 %v67
    %2469 = vmatmul.f32.gmra.mxu0 %v2407
    %v2470 = vpop.f32.mrf.mxu0
    %v2471 = vadd.f32 0.0, %v2470
    %2472 = vdwg.mxu0
    %2473 = vmatpush.msra.mxu0 %v128
    %2474 = vmatpush.msra.mxu0 %v124
    %2475 = vmatpush.msra.mxu0 %v120
    %2476 = vmatpush.msra.mxu0 %v116
    %2477 = vmatpush.msra.mxu0 %v112
    %2478 = vmatpush.msra.mxu0 %v108
    %2479 = vmatpush.msra.mxu0 %v104
    %2480 = vmatpush.msra.mxu0 %v100
    %2481 = vmatpush.msra.mxu0 %v96
    %2482 = vmatpush.msra.mxu0 %v92
    %2483 = vmatpush.msra.mxu0 %v88
    %2484 = vmatpush.msra.mxu0 %v84
    %2485 = vmatpush.msra.mxu0 %v80
    %2486 = vmatpush.msra.mxu0 %v76
    %2487 = vmatpush.msra.mxu0 %v72
    %2488 = vmatpush.msra.mxu0 %v68
    %2489 = vmatmul.f32.gmra.mxu0 %v2407
    %v2490 = vpop.f32.mrf.mxu0
    %v2491 = vadd.f32 0.0, %v2490
    %2492 = vdwg.mxu0
    %v2493 = vadd.f32 %v2409, %v2431
    %v2494 = vadd.f32 %v2410, %v2451
    %v2495 = vadd.f32 %v2411, %v2471
    %v2496 = vadd.f32 %v2412, %v2491
    %v2497 = vxor.u32 %v2493, 2147483648
    %v2498 = vmul.f32 %v2497, 1.442695
    %v2499 = vpow.pop %v2498
    %v2500 = vadd.f32 %v2499, 1.0
    %v2501 = vrcp.pop %v2500
    %v2502 = vmul.f32 %v2500, %v2501
    %v2503 = vsub.f32 1.0, %v2502
    %v2504 = vmul.f32 %v2501, %v2503
    %v2505 = vadd.f32 %v2501, %v2504
    %vm2506 = vweird.f32 %v2500
    %vm2507 = vweird.f32 %v2501
    %vm2508 = vmor %vm2506, %vm2507
    %v2509 = vsel %vm2508, %v2501, %v2505
    %v2510 = vand.u32 2147483647, %v2500
    %vm2511 = vcmp.eq.f32.partialorder %v2510, 8.507059e+37
    %v2512 = vand.u32 %v2500, 2147483648
    %v2513 = vor.u32 1.1754944e-38, %v2512
    %v2514 = vsel %vm2511, %v2513, %v2509
    %v2515 = vmul.f32 1.0, %v2514
    %v2516 = vxor.u32 %v2494, 2147483648
    %v2517 = vmul.f32 %v2516, 1.442695
    %v2518 = vpow.pop %v2517
    %v2519 = vadd.f32 %v2518, 1.0
    %v2520 = vrcp.pop %v2519
    %v2521 = vmul.f32 %v2519, %v2520
    %v2522 = vsub.f32 1.0, %v2521
    %v2523 = vmul.f32 %v2520, %v2522
    %v2524 = vadd.f32 %v2520, %v2523
    %vm2525 = vweird.f32 %v2519
    %vm2526 = vweird.f32 %v2520
    %vm2527 = vmor %vm2525, %vm2526
    %v2528 = vsel %vm2527, %v2520, %v2524
    %v2529 = vand.u32 2147483647, %v2519
    %vm2530 = vcmp.eq.f32.partialorder %v2529, 8.507059e+37
    %v2531 = vand.u32 %v2519, 2147483648
    %v2532 = vor.u32 1.1754944e-38, %v2531
    %v2533 = vsel %vm2530, %v2532, %v2528
    %v2534 = vmul.f32 1.0, %v2533
    %v2535 = vtanh.pop %v2495
    %v2536 = vxor.u32 %v2496, 2147483648
    %v2537 = vmul.f32 %v2536, 1.442695
    %v2538 = vpow.pop %v2537
    %v2539 = vadd.f32 %v2538, 1.0
    %v2540 = vrcp.pop %v2539
    %v2541 = vmul.f32 %v2539, %v2540
    %v2542 = vsub.f32 1.0, %v2541
    %v2543 = vmul.f32 %v2540, %v2542
    %v2544 = vadd.f32 %v2540, %v2543
    %vm2545 = vweird.f32 %v2539
    %vm2546 = vweird.f32 %v2540
    %vm2547 = vmor %vm2545, %vm2546
    %v2548 = vsel %vm2547, %v2540, %v2544
    %v2549 = vand.u32 2147483647, %v2539
    %vm2550 = vcmp.eq.f32.partialorder %v2549, 8.507059e+37
    %v2551 = vand.u32 %v2539, 2147483648
    %v2552 = vor.u32 1.1754944e-38, %v2551
    %v2553 = vsel %vm2550, %v2552, %v2548
    %v2554 = vmul.f32 1.0, %v2553
    %v2555 = vmul.f32 %v2534, %v2405
    %v2556 = vmul.f32 %v2515, %v2535
    %v2557 = vadd.f32 %v2555, %v2556
    %v2558 = vtanh.pop %v2557
    %v2559 = vmul.f32 %v2554, %v2558
    %v2560 = vld [vmem:[#allocation7] sm:$0xff]
    %v2561 = vld [vmem:[#allocation7 + $0x8] sm:$0xff]
    %v2562 = vld [vmem:[#allocation7 + $0x10] sm:$0xff]
    %v2563 = vld [vmem:[#allocation7 + $0x18] sm:$0xff]
    %v2564 = vld [vmem:[#allocation7 + $0x20] sm:$0xff]
    %v2565 = vld [vmem:[#allocation7 + $0x28] sm:$0xff]
    %v2566 = vld [vmem:[#allocation7 + $0x30] sm:$0xff]
    %v2567 = vld [vmem:[#allocation7 + $0x38] sm:$0xff]
    %v2568 = vld [vmem:[#allocation7 + $0x40] sm:$0xff]
    %v2569 = vld [vmem:[#allocation7 + $0x48] sm:$0xff]
    %v2570 = vld [vmem:[#allocation7 + $0x50] sm:$0xff]
    %v2571 = vld [vmem:[#allocation7 + $0x58] sm:$0xff]
    %v2572 = vld [vmem:[#allocation7 + $0x60] sm:$0xff]
    %v2573 = vld [vmem:[#allocation7 + $0x68] sm:$0xff]
    %v2574 = vld [vmem:[#allocation7 + $0x70] sm:$0xff]
    %v2575 = vld [vmem:[#allocation7 + $0x78] sm:$0xff]
    %v2576 = vld [vmem:[%s3] sm:$0x1]
    %v2578 = vperm.slane %v2576, 0
    %2580 = vmatpush.msra.mxu0 %v2575
    %2581 = vmatpush.msra.mxu0 %v2574
    %2582 = vmatpush.msra.mxu0 %v2573
    %2583 = vmatpush.msra.mxu0 %v2572
    %2584 = vmatpush.msra.mxu0 %v2571
    %2585 = vmatpush.msra.mxu0 %v2570
    %2586 = vmatpush.msra.mxu0 %v2569
    %2587 = vmatpush.msra.mxu0 %v2568
    %2588 = vmatpush.msra.mxu0 %v2567
    %2589 = vmatpush.msra.mxu0 %v2566
    %2590 = vmatpush.msra.mxu0 %v2565
    %2591 = vmatpush.msra.mxu0 %v2564
    %2592 = vmatpush.msra.mxu0 %v2563
    %2593 = vmatpush.msra.mxu0 %v2562
    %2594 = vmatpush.msra.mxu0 %v2561
    %2595 = vmatpush.msra.mxu0 %v2560
    %2596 = vmatmul.f32.gmra.mxu0 %v2559
    %v2597 = vpop.f32.mrf.mxu0
    %v2598 = vadd.f32 %v2578, %v2597
    %2599 = vdwg.mxu0
    %2600 = vst [vmem:[#allocation8] sm:$0xff] %v2598
    // Predicated region
    $region30: #{tpu_custom_call.1} parent=1 // pred_check
      _
    $region31: #{tpu_custom_call.1} parent=1 // pred_check_branch
      %2602 = sbr.rel (0) target = $region33
    $region32: #{tpu_custom_call.1} parent=1 // pred_region
      %2604 = vsyncadd [#allocation4], 0
      %s2606 = sshll.u32 [#allocation8], 4
      %s2607 = int_to_ptr.vmem [resolvable:$true] %s2606
      %s2608 = sshll.u32 %s4, 4
      %s2609 = int_to_ptr.hbm [resolvable:$true] %s2608
      %2611 = dma.vmem_to_hbm [thread:$0]  %s2607, 128, %s2609, [#allocation4]
    $region33: #{tpu_custom_call.1} parent=1 // pred_fallthru
      _
    // Predicated region
    $region34: #{tpu_custom_call.1} parent=1 // pred_check
      _
    $region35: #{tpu_custom_call.1} parent=1 // pred_check_branch
      %2613 = sbr.rel (0) target = $region37
    $region36: #{tpu_custom_call.1} parent=1 // pred_region
      %2615 = dma.done [#allocation4], 128
    $region37: #{tpu_custom_call.1} parent=1 // pred_fallthru
      _
    %2616 = vsyncpa [#allocation3], 1
    %2617 = vsyncpa [#allocation6], 1
    %2618 = vsyncpa [#allocation4], 1

</llo_original>
